<compile_context>
chip_gen: v6e
topology: v6e:2x2x1
jax: 0.10.0
libtpu: 0.0.40
codegen_flags: <defaults>
</compile_context>

<pallas_src>
import functools

import jax
import jax.numpy as jnp
from jax.experimental import pallas as pl
from jax.experimental.pallas import tpu as pltpu

NUM_CLASSES = 10
IN_FEATURES = 28 * 28          # 784
HIDDEN = 1024
OUT_PAD = 128                  # lane-dense padded logits width (>= NUM_CLASSES)
MAX_TB = 256                   # batch tile (rows per grid step)


def _round_up(n, m):
    return ((n + m - 1) // m) * m


def fc1024_kernel(x_ref, w1t_ref, w2t_ref, w3t_ref, out_ref):
    """One batch tile: relu(x @ W1t) -> relu(. @ W2t) -> . @ W3t_padded.

    x_ref: (TB, 784) bf16; weights bf16 (in, out) layout; out_ref (TB, 128) f32.
    All matmuls accumulate in f32 on the MXU.
    """
    x = x_ref[...]                                                     # bf16
    h1 = jnp.dot(x, w1t_ref[...], preferred_element_type=jnp.float32)
    h1 = jnp.maximum(h1, 0.0).astype(jnp.bfloat16)                     # relu
    h2 = jnp.dot(h1, w2t_ref[...], preferred_element_type=jnp.float32)
    h2 = jnp.maximum(h2, 0.0).astype(jnp.bfloat16)                     # relu
    out_ref[...] = jnp.dot(h2, w3t_ref[...],
                           preferred_element_type=jnp.float32)         # (TB, 128)


def prepare_params(w1, mask1, w2, mask2, w3, mask3):
    """One-time parameter glue (hoisted out of the per-call path).

    Applies the PackNet masks, squeezes the 1x1 conv kernels, transposes to
    (in, out) so the kernel computes x @ W, casts to bf16, and pads the last
    layer's output dim from 10 -> 128 lanes with zero columns.
    """
    w1t = (w1 * mask1).reshape(HIDDEN, IN_FEATURES).T.astype(jnp.bfloat16)   # (784, 1024)
    w2t = (w2 * mask2).reshape(HIDDEN, HIDDEN).T.astype(jnp.bfloat16)        # (1024, 1024)
    w3t = (w3 * mask3).T.astype(jnp.bfloat16)                                # (1024, 10)
    w3t_pad = jnp.zeros((HIDDEN, OUT_PAD), dtype=jnp.bfloat16)
    w3t_pad = w3t_pad.at[:, :NUM_CLASSES].set(w3t)
    return w1t, w2t, w3t_pad


@jax.jit
def fc1024_forward(x_nchw, w1t, w2t, w3t_pad):
    """x_nchw: (B, 1, 28, 28). Weights from prepare_params. Returns (B, 10) f32."""
    B = x_nchw.shape[0]
    x2 = x_nchw.reshape(B, IN_FEATURES).astype(jnp.bfloat16)

    # Batch tiling: pad B to a multiple of the tile (8-row sublane minimum).
    tb = min(MAX_TB, _round_up(B, 8))
    b_pad = _round_up(B, tb)
    if b_pad != B:
        x2 = jnp.pad(x2, ((0, b_pad - B), (0, 0)))

    grid = (b_pad // tb,)
    out_padded = pl.pallas_call(
        fc1024_kernel,
        out_shape=jax.ShapeDtypeStruct((b_pad, OUT_PAD), jnp.float32),
        grid=grid,
        in_specs=[
            # activation tile marches along the batch
            pl.BlockSpec((tb, IN_FEATURES), lambda i: (i, 0)),
            # weights: constant block index -> DMA'd once, VMEM-resident
            pl.BlockSpec((IN_FEATURES, HIDDEN), lambda i: (0, 0)),
            pl.BlockSpec((HIDDEN, HIDDEN), lambda i: (0, 0)),
            pl.BlockSpec((HIDDEN, OUT_PAD), lambda i: (0, 0)),
        ],
        out_specs=pl.BlockSpec((tb, OUT_PAD), lambda i: (i, 0)),
        compiler_params=pltpu.CompilerParams(
            dimension_semantics=("parallel",),     # megacore splits batch tiles on v7x
            vmem_limit_bytes=24 << 20,
        ),
    )(x2, w1t, w2t, w3t_pad)

    return out_padded[:B, :NUM_CLASSES]


def reference_forward_bf16(x_nchw, w1t, w2t, w3t_pad):
    """Pure-JAX reference using the same bf16-in / f32-accumulate recipe."""
    B = x_nchw.shape[0]
    x2 = x_nchw.reshape(B, IN_FEATURES).astype(jnp.bfloat16)
    h1 = jnp.maximum(jnp.dot(x2, w1t, preferred_element_type=jnp.float32), 0.0)
    h2 = jnp.maximum(jnp.dot(h1.astype(jnp.bfloat16), w2t,
                             preferred_element_type=jnp.float32), 0.0)
    out = jnp.dot(h2.astype(jnp.bfloat16), w3t_pad,
                  preferred_element_type=jnp.float32)
    return out[:, :NUM_CLASSES]


def reference_forward_f32(x_nchw, w1, mask1, w2, mask2, w3, mask3):
    """Full-precision reference mirroring the PyTorch forward."""
    B = x_nchw.shape[0]
    out = x_nchw.reshape(B, IN_FEATURES)
    out = out @ (w1 * mask1).reshape(HIDDEN, IN_FEATURES).T
    out = jnp.maximum(out, 0.0)
    out = out @ (w2 * mask2).reshape(HIDDEN, HIDDEN).T
    out = jnp.maximum(out, 0.0)
    out = out @ (w3 * mask3).T
    return out


if __name__ == "__main__":
    key = jax.random.PRNGKey(0)
    kx, k1, k2, k3 = jax.random.split(key, 4)

    B = 2
    x = jax.random.normal(kx, (B, 1, 28, 28), dtype=jnp.float32)

    # Deterministic synthetic parameters (shapes from the module __init__).
    w1 = jax.random.normal(k1, (HIDDEN, IN_FEATURES, 1, 1), dtype=jnp.float32) * 0.02
    w2 = jax.random.normal(k2, (HIDDEN, HIDDEN, 1, 1), dtype=jnp.float32) * 0.02
    w3 = jax.random.normal(k3, (NUM_CLASSES, HIDDEN), dtype=jnp.float32) * 0.02

    # PackNet masks: linear1.mask / linear2.mask / last_mask are all-ones.
    mask1 = jnp.ones_like(w1)
    mask2 = jnp.ones_like(w2)
    mask3 = jnp.ones_like(w3)

    # One-time weight prep (mask, transpose, bf16, pad) -- NOT per call.
    w1t, w2t, w3t_pad = prepare_params(w1, mask1, w2, mask2, w3, mask3)
    w1t, w2t, w3t_pad = jax.block_until_ready((w1t, w2t, w3t_pad))

    out = fc1024_forward(x, w1t, w2t, w3t_pad)
    out = jax.block_until_ready(out)
    assert out.shape == (B, NUM_CLASSES)
    assert jnp.all(jnp.isfinite(out))

    # Tight check vs. a reference doing identical bf16-in / f32-acc math.
    ref_bf16 = reference_forward_bf16(x, w1t, w2t, w3t_pad)
    assert jnp.allclose(out, ref_bf16, atol=1e-2, rtol=1e-2), "mismatch vs bf16 reference"

    # Loose check vs. the full-f32 PyTorch-equivalent forward (bf16 rounding).
    ref_f32 = reference_forward_f32(x, w1, mask1, w2, mask2, w3, mask3)
    assert jnp.allclose(out, ref_f32, atol=5e-2, rtol=5e-2), "mismatch vs f32 reference"

    print("KERNEL_OK")
</pallas_src>

<mosaic_0001>
module attributes {stable_mosaic.version = 11 : i64} {
  func.func @fc1024_kernel(%arg0: i32, %arg1: memref<8x784xbf16, #tpu.memory_space<vmem>>, %arg2: memref<784x1024xbf16, #tpu.memory_space<vmem>>, %arg3: memref<1024x1024xbf16, #tpu.memory_space<vmem>>, %arg4: memref<1024x128xbf16, #tpu.memory_space<vmem>>, %arg5: memref<8x128xf32, #tpu.memory_space<vmem>>) attributes {dimension_semantics = [#tpu.dimension_semantics<parallel>], iteration_bounds = array<i64: 1>, scalar_prefetch = 0 : i64, scratch_operands = 0 : i64, tpu.core_type = #tpu.core_type<tc>, window_params = [{transform_indices = @transform_0, window_bounds = array<i64: 8, 784>}, {pipeline_mode = #tpu.pipeline_mode<synchronous>, transform_indices = @transform_1, window_bounds = array<i64: 784, 1024>}, {pipeline_mode = #tpu.pipeline_mode<synchronous>, transform_indices = @transform_2, window_bounds = array<i64: 1024, 1024>}, {pipeline_mode = #tpu.pipeline_mode<synchronous>, transform_indices = @transform_3, window_bounds = array<i64: 1024, 128>}, {transform_indices = @transform_4, window_bounds = array<i64: 8, 128>}]} {
    %c0 = arith.constant 0 : index
    %c0_0 = arith.constant 0 : index
    %0 = vector.load %arg1[%c0, %c0_0] : memref<8x784xbf16, #tpu.memory_space<vmem>>, vector<8x784xbf16>
    %c0_1 = arith.constant 0 : index
    %c0_2 = arith.constant 0 : index
    %1 = vector.load %arg2[%c0_1, %c0_2] : memref<784x1024xbf16, #tpu.memory_space<vmem>>, vector<784x1024xbf16>
    %cst = arith.constant dense<0.000000e+00> : vector<8x1024xf32>
    %2 = tpu.matmul %0, %1, %cst {dimension_numbers = #tpu.dot_dimension_numbers<[1], [0], [0], [1], [0, 0, 1, 1], [], []>} : vector<8x784xbf16>, vector<784x1024xbf16>, vector<8x1024xf32> -> vector<8x1024xf32>
    %cst_3 = arith.constant 0.000000e+00 : f32
    %3 = vector.broadcast %cst_3 : f32 to vector<8x1024xf32>
    %4 = arith.maximumf %2, %3 : vector<8x1024xf32>
    %5 = arith.truncf %4 : vector<8x1024xf32> to vector<8x1024xbf16>
    %c0_4 = arith.constant 0 : index
    %c0_5 = arith.constant 0 : index
    %6 = vector.load %arg3[%c0_4, %c0_5] : memref<1024x1024xbf16, #tpu.memory_space<vmem>>, vector<1024x1024xbf16>
    %cst_6 = arith.constant dense<0.000000e+00> : vector<8x1024xf32>
    %7 = tpu.matmul %5, %6, %cst_6 {dimension_numbers = #tpu.dot_dimension_numbers<[1], [0], [0], [1], [0, 0, 1, 1], [], []>} : vector<8x1024xbf16>, vector<1024x1024xbf16>, vector<8x1024xf32> -> vector<8x1024xf32>
    %cst_7 = arith.constant 0.000000e+00 : f32
    %8 = vector.broadcast %cst_7 : f32 to vector<8x1024xf32>
    %9 = arith.maximumf %7, %8 : vector<8x1024xf32>
    %10 = arith.truncf %9 : vector<8x1024xf32> to vector<8x1024xbf16>
    %c0_8 = arith.constant 0 : index
    %c0_9 = arith.constant 0 : index
    %11 = vector.load %arg4[%c0_8, %c0_9] : memref<1024x128xbf16, #tpu.memory_space<vmem>>, vector<1024x128xbf16>
    %cst_10 = arith.constant dense<0.000000e+00> : vector<8x128xf32>
    %12 = tpu.matmul %10, %11, %cst_10 {dimension_numbers = #tpu.dot_dimension_numbers<[1], [0], [0], [1], [0, 0, 1, 1], [], []>} : vector<8x1024xbf16>, vector<1024x128xbf16>, vector<8x128xf32> -> vector<8x128xf32>
    %c0_11 = arith.constant 0 : index
    %c0_12 = arith.constant 0 : index
    %13 = vector.load %arg5[%c0_11, %c0_12] : memref<8x128xf32, #tpu.memory_space<vmem>>, vector<8x128xf32>
    tpu.vector_store %arg5[%c0_11, %c0_12], %12 {strides = array<i32>} : memref<8x128xf32, #tpu.memory_space<vmem>>, vector<8x128xf32>,
    return
  }
  func.func @transform_0(%arg0: i32) -> (i32, i32) {
    %c0_i32 = arith.constant 0 : i32
    %c0_i32_0 = arith.constant 0 : i32
    return %arg0, %c0_i32 : i32, i32
  }
  func.func @transform_1(%arg0: i32) -> (i32, i32) {
    %c0_i32 = arith.constant 0 : i32
    %c0_i32_0 = arith.constant 0 : i32
    %c0_i32_1 = arith.constant 0 : i32
    return %c0_i32, %c0_i32_0 : i32, i32
  }
  func.func @transform_2(%arg0: i32) -> (i32, i32) {
    %c0_i32 = arith.constant 0 : i32
    %c0_i32_0 = arith.constant 0 : i32
    %c0_i32_1 = arith.constant 0 : i32
    return %c0_i32, %c0_i32_0 : i32, i32
  }
  func.func @transform_3(%arg0: i32) -> (i32, i32) {
    %c0_i32 = arith.constant 0 : i32
    %c0_i32_0 = arith.constant 0 : i32
    %c0_i32_1 = arith.constant 0 : i32
    return %c0_i32, %c0_i32_0 : i32, i32
  }
  func.func @transform_4(%arg0: i32) -> (i32, i32) {
    %c0_i32 = arith.constant 0 : i32
    %c0_i32_0 = arith.constant 0 : i32
    return %arg0, %c0_i32 : i32, i32
  }
}

</mosaic_0001>

<llo_original>
// kernel: fc1024_forward.1
$region0: #{fc1024_forward.1}
  #allocation0 [shape = 'u32[]', space=smem, size = 0x4, offset = 0x4, fixed_abs, tag = 'smem constant byte address 0x4 - core index']
  #allocation1 [shape = 'u32[144,128]{1,0:T(1,128)}', space=vmem, size = 0x12000, scoped, tag = 'internal scratch']
  %s0 = inlined_call_operand.vmem [shape: bf16[8,784], index: 0, kind: input, shape index: {}]
  %s1 = inlined_call_operand.hbm [shape: bf16[784,1024], index: 1, kind: input, shape index: {}]
  %s2 = inlined_call_operand.hbm [shape: bf16[1024,1024], index: 2, kind: input, shape index: {}]
  %s3 = inlined_call_operand.hbm [shape: bf16[1024,128], index: 3, kind: input, shape index: {}]
  %s4 = inlined_call_operand.vmem [shape: f32[8,128], index: 4, kind: output, shape index: {}]
  %s5 = sld [smem:[#allocation0]]
  $region38: #{fc1024_forward.1} parent=0
    _
  %s7 = ssub.s32 1, %s5
  %s8 = scalar_select 0, %s7, %s5
  $region1: #{fc1024_forward.1} parent=0
    #allocation2 [shape = 'u8[1605632]{0}', space=vmem, size = 0x188000, scoped, tag = 'input window, operand 1, single buffered']
    #allocation3 [shape = 's32[1]{0}', space=sflag, size = 0x4, scoped, tag = 'scoped memory for fc1024_forward.1']
    #allocation4 [shape = 'u8[2097152]{0}', space=vmem, size = 0x200000, scoped, tag = 'input window, operand 2, single buffered']
    #allocation5 [shape = 's32[1]{0}', space=sflag, size = 0x4, scoped, tag = 'scoped memory for fc1024_forward.1']
    #allocation6 [shape = 'u8[262144]{0}', space=vmem, size = 0x40000, scoped, tag = 'input window, operand 3, single buffered']
    %9 = vsyncpa [#allocation3], 0
    %10 = vsyncpa [#allocation5], 0
    // Predicated region
    $region2: #{fc1024_forward.1} parent=1 // pred_check
      _
    $region3: #{fc1024_forward.1} parent=1 // pred_check_branch
      %12 = sbr.rel (0) target = $region5
    $region4: #{fc1024_forward.1} parent=1 // pred_region
      _
    $region5: #{fc1024_forward.1} parent=1 // pred_fallthru
      _
    // Predicated region
    $region6: #{fc1024_forward.1} parent=1 // pred_check
      _
    $region7: #{fc1024_forward.1} parent=1 // pred_check_branch
      %14 = sbr.rel (0) target = $region9
    $region8: #{fc1024_forward.1} parent=1 // pred_region
      %s16 = ssub.s32 50176, 50176
      %17 = vsyncadd [#allocation3], %s16
      %s18 = sshll.u32 [#allocation2], 4
      %s19 = int_to_ptr.vmem [resolvable:$true] %s18
      %24 = dma.hbm_to_vmem [thread:$0]  %s1, 50176, %s19, [#allocation3], 512, 512, 32
    $region9: #{fc1024_forward.1} parent=1 // pred_fallthru
      _
    // Predicated region
    $region10: #{fc1024_forward.1} parent=1 // pred_check
      _
    $region11: #{fc1024_forward.1} parent=1 // pred_check_branch
      %26 = sbr.rel (0) target = $region13
    $region12: #{fc1024_forward.1} parent=1 // pred_region
      %s28 = ssub.s32 65536, 65536
      %29 = vsyncadd [#allocation5], %s28
      %s30 = sshll.u32 [#allocation4], 4
      %s31 = int_to_ptr.vmem [resolvable:$true] %s30
      %36 = dma.hbm_to_vmem [thread:$0]  %s2, 65536, %s31, [#allocation5], 512, 512, 32
    $region13: #{fc1024_forward.1} parent=1 // pred_fallthru
      _
    // Predicated region
    $region14: #{fc1024_forward.1} parent=1 // pred_check
      _
    $region15: #{fc1024_forward.1} parent=1 // pred_check_branch
      %38 = sbr.rel (0) target = $region17
    $region16: #{fc1024_forward.1} parent=1 // pred_region
      %s40 = ssub.s32 8192, 8192
      %41 = vsyncadd [#allocation5], %s40
      %s42 = sshll.u32 [#allocation6], 4
      %s43 = int_to_ptr.vmem [resolvable:$true] %s42
      %48 = dma.hbm_to_vmem [thread:$0]  %s3, 8192, %s43, [#allocation5], 64, 64, 4
    $region17: #{fc1024_forward.1} parent=1 // pred_fallthru
      _
    // Predicated region
    $region18: #{fc1024_forward.1} parent=1 // pred_check
      _
    $region19: #{fc1024_forward.1} parent=1 // pred_check_branch
      %50 = sbr.rel (0) target = $region21
    $region20: #{fc1024_forward.1} parent=1 // pred_region
      %51 = dma.done [#allocation3], 50176
    $region21: #{fc1024_forward.1} parent=1 // pred_fallthru
      _
    // Predicated region
    $region22: #{fc1024_forward.1} parent=1 // pred_check
      _
    $region23: #{fc1024_forward.1} parent=1 // pred_check_branch
      %53 = sbr.rel (0) target = $region25
    $region24: #{fc1024_forward.1} parent=1 // pred_region
      %54 = dma.done [#allocation5], 65536
    $region25: #{fc1024_forward.1} parent=1 // pred_fallthru
      _
    // Predicated region
    $region26: #{fc1024_forward.1} parent=1 // pred_check
      _
    $region27: #{fc1024_forward.1} parent=1 // pred_check_branch
      %56 = sbr.rel (0) target = $region29
    $region28: #{fc1024_forward.1} parent=1 // pred_region
      %57 = dma.done [#allocation5], 8192
    $region29: #{fc1024_forward.1} parent=1 // pred_fallthru
      _
    %v59 = vld [vmem:[%s0] sm:$0xff]
    %v60 = vld [vmem:[%s0 + $0x8] sm:$0xff]
    %v61 = vld [vmem:[%s0 + $0x10] sm:$0xff]
    %v62 = vld [vmem:[%s0 + $0x18] sm:$0xf]
    %v63 = vld [vmem:[#allocation2] sm:$0xff]
    %v64 = vld [vmem:[#allocation2 + $0x8] sm:$0xff]
    %v65 = vld [vmem:[#allocation2 + $0x10] sm:$0xff]
    %v66 = vld [vmem:[#allocation2 + $0x18] sm:$0xff]
    %v67 = vld [vmem:[#allocation2 + $0x20] sm:$0xff]
    %v68 = vld [vmem:[#allocation2 + $0x28] sm:$0xff]
    %v69 = vld [vmem:[#allocation2 + $0x30] sm:$0xff]
    %v70 = vld [vmem:[#allocation2 + $0x38] sm:$0xff]
    %v71 = vld [vmem:[#allocation2 + $0x40] sm:$0xff]
    %v72 = vld [vmem:[#allocation2 + $0x48] sm:$0xff]
    %v73 = vld [vmem:[#allocation2 + $0x50] sm:$0xff]
    %v74 = vld [vmem:[#allocation2 + $0x58] sm:$0xff]
    %v75 = vld [vmem:[#allocation2 + $0x60] sm:$0xff]
    %v76 = vld [vmem:[#allocation2 + $0x68] sm:$0xff]
    %v77 = vld [vmem:[#allocation2 + $0x70] sm:$0xff]
    %v78 = vld [vmem:[#allocation2 + $0x78] sm:$0xff]
    %v79 = vld [vmem:[#allocation2 + $0x80] sm:$0xff]
    %v80 = vld [vmem:[#allocation2 + $0x88] sm:$0xff]
    %v81 = vld [vmem:[#allocation2 + $0x90] sm:$0xff]
    %v82 = vld [vmem:[#allocation2 + $0x98] sm:$0xff]
    %v83 = vld [vmem:[#allocation2 + $0xa0] sm:$0xff]
    %v84 = vld [vmem:[#allocation2 + $0xa8] sm:$0xff]
    %v85 = vld [vmem:[#allocation2 + $0xb0] sm:$0xff]
    %v86 = vld [vmem:[#allocation2 + $0xb8] sm:$0xff]
    %v87 = vld [vmem:[#allocation2 + $0xc0] sm:$0xff]
    %v88 = vld [vmem:[#allocation2 + $0xc8] sm:$0xff]
    %v89 = vld [vmem:[#allocation2 + $0xd0] sm:$0xff]
    %v90 = vld [vmem:[#allocation2 + $0xd8] sm:$0xff]
    %v91 = vld [vmem:[#allocation2 + $0xe0] sm:$0xff]
    %v92 = vld [vmem:[#allocation2 + $0xe8] sm:$0xff]
    %v93 = vld [vmem:[#allocation2 + $0xf0] sm:$0xff]
    %v94 = vld [vmem:[#allocation2 + $0xf8] sm:$0xff]
    %v95 = vld [vmem:[#allocation2 + $0x100] sm:$0xff]
    %v96 = vld [vmem:[#allocation2 + $0x108] sm:$0xff]
    %v97 = vld [vmem:[#allocation2 + $0x110] sm:$0xff]
    %v98 = vld [vmem:[#allocation2 + $0x118] sm:$0xff]
    %v99 = vld [vmem:[#allocation2 + $0x120] sm:$0xff]
    %v100 = vld [vmem:[#allocation2 + $0x128] sm:$0xff]
    %v101 = vld [vmem:[#allocation2 + $0x130] sm:$0xff]
    %v102 = vld [vmem:[#allocation2 + $0x138] sm:$0xff]
    %v103 = vld [vmem:[#allocation2 + $0x140] sm:$0xff]
    %v104 = vld [vmem:[#allocation2 + $0x148] sm:$0xff]
    %v105 = vld [vmem:[#allocation2 + $0x150] sm:$0xff]
    %v106 = vld [vmem:[#allocation2 + $0x158] sm:$0xff]
    %v107 = vld [vmem:[#allocation2 + $0x160] sm:$0xff]
    %v108 = vld [vmem:[#allocation2 + $0x168] sm:$0xff]
    %v109 = vld [vmem:[#allocation2 + $0x170] sm:$0xff]
    %v110 = vld [vmem:[#allocation2 + $0x178] sm:$0xff]
    %v111 = vld [vmem:[#allocation2 + $0x180] sm:$0xff]
    %v112 = vld [vmem:[#allocation2 + $0x188] sm:$0xff]
    %v113 = vld [vmem:[#allocation2 + $0x190] sm:$0xff]
    %v114 = vld [vmem:[#allocation2 + $0x198] sm:$0xff]
    %v115 = vld [vmem:[#allocation2 + $0x1a0] sm:$0xff]
    %v116 = vld [vmem:[#allocation2 + $0x1a8] sm:$0xff]
    %v117 = vld [vmem:[#allocation2 + $0x1b0] sm:$0xff]
    %v118 = vld [vmem:[#allocation2 + $0x1b8] sm:$0xff]
    %v119 = vld [vmem:[#allocation2 + $0x1c0] sm:$0xff]
    %v120 = vld [vmem:[#allocation2 + $0x1c8] sm:$0xff]
    %v121 = vld [vmem:[#allocation2 + $0x1d0] sm:$0xff]
    %v122 = vld [vmem:[#allocation2 + $0x1d8] sm:$0xff]
    %v123 = vld [vmem:[#allocation2 + $0x1e0] sm:$0xff]
    %v124 = vld [vmem:[#allocation2 + $0x1e8] sm:$0xff]
    %v125 = vld [vmem:[#allocation2 + $0x1f0] sm:$0xff]
    %v126 = vld [vmem:[#allocation2 + $0x1f8] sm:$0xff]
    %v127 = vld [vmem:[#allocation2 + $0x200] sm:$0xff]
    %v128 = vld [vmem:[#allocation2 + $0x208] sm:$0xff]
    %v129 = vld [vmem:[#allocation2 + $0x210] sm:$0xff]
    %v130 = vld [vmem:[#allocation2 + $0x218] sm:$0xff]
    %v131 = vld [vmem:[#allocation2 + $0x220] sm:$0xff]
    %v132 = vld [vmem:[#allocation2 + $0x228] sm:$0xff]
    %v133 = vld [vmem:[#allocation2 + $0x230] sm:$0xff]
    %v134 = vld [vmem:[#allocation2 + $0x238] sm:$0xff]
    %v135 = vld [vmem:[#allocation2 + $0x240] sm:$0xff]
    %v136 = vld [vmem:[#allocation2 + $0x248] sm:$0xff]
    %v137 = vld [vmem:[#allocation2 + $0x250] sm:$0xff]
    %v138 = vld [vmem:[#allocation2 + $0x258] sm:$0xff]
    %v139 = vld [vmem:[#allocation2 + $0x260] sm:$0xff]
    %v140 = vld [vmem:[#allocation2 + $0x268] sm:$0xff]
    %v141 = vld [vmem:[#allocation2 + $0x270] sm:$0xff]
    %v142 = vld [vmem:[#allocation2 + $0x278] sm:$0xff]
    %v143 = vld [vmem:[#allocation2 + $0x280] sm:$0xff]
    %v144 = vld [vmem:[#allocation2 + $0x288] sm:$0xff]
    %v145 = vld [vmem:[#allocation2 + $0x290] sm:$0xff]
    %v146 = vld [vmem:[#allocation2 + $0x298] sm:$0xff]
    %v147 = vld [vmem:[#allocation2 + $0x2a0] sm:$0xff]
    %v148 = vld [vmem:[#allocation2 + $0x2a8] sm:$0xff]
    %v149 = vld [vmem:[#allocation2 + $0x2b0] sm:$0xff]
    %v150 = vld [vmem:[#allocation2 + $0x2b8] sm:$0xff]
    %v151 = vld [vmem:[#allocation2 + $0x2c0] sm:$0xff]
    %v152 = vld [vmem:[#allocation2 + $0x2c8] sm:$0xff]
    %v153 = vld [vmem:[#allocation2 + $0x2d0] sm:$0xff]
    %v154 = vld [vmem:[#allocation2 + $0x2d8] sm:$0xff]
    %v155 = vld [vmem:[#allocation2 + $0x2e0] sm:$0xff]
    %v156 = vld [vmem:[#allocation2 + $0x2e8] sm:$0xff]
    %v157 = vld [vmem:[#allocation2 + $0x2f0] sm:$0xff]
    %v158 = vld [vmem:[#allocation2 + $0x2f8] sm:$0xff]
    %v159 = vld [vmem:[#allocation2 + $0x300] sm:$0xff]
    %v160 = vld [vmem:[#allocation2 + $0x308] sm:$0xff]
    %v161 = vld [vmem:[#allocation2 + $0x310] sm:$0xff]
    %v162 = vld [vmem:[#allocation2 + $0x318] sm:$0xff]
    %v163 = vld [vmem:[#allocation2 + $0x320] sm:$0xff]
    %v164 = vld [vmem:[#allocation2 + $0x328] sm:$0xff]
    %v165 = vld [vmem:[#allocation2 + $0x330] sm:$0xff]
    %v166 = vld [vmem:[#allocation2 + $0x338] sm:$0xff]
    %v167 = vld [vmem:[#allocation2 + $0x340] sm:$0xff]
    %v168 = vld [vmem:[#allocation2 + $0x348] sm:$0xff]
    %v169 = vld [vmem:[#allocation2 + $0x350] sm:$0xff]
    %v170 = vld [vmem:[#allocation2 + $0x358] sm:$0xff]
    %v171 = vld [vmem:[#allocation2 + $0x360] sm:$0xff]
    %v172 = vld [vmem:[#allocation2 + $0x368] sm:$0xff]
    %v173 = vld [vmem:[#allocation2 + $0x370] sm:$0xff]
    %v174 = vld [vmem:[#allocation2 + $0x378] sm:$0xff]
    %v175 = vld [vmem:[#allocation2 + $0x380] sm:$0xff]
    %v176 = vld [vmem:[#allocation2 + $0x388] sm:$0xff]
    %v177 = vld [vmem:[#allocation2 + $0x390] sm:$0xff]
    %v178 = vld [vmem:[#allocation2 + $0x398] sm:$0xff]
    %v179 = vld [vmem:[#allocation2 + $0x3a0] sm:$0xff]
    %v180 = vld [vmem:[#allocation2 + $0x3a8] sm:$0xff]
    %v181 = vld [vmem:[#allocation2 + $0x3b0] sm:$0xff]
    %v182 = vld [vmem:[#allocation2 + $0x3b8] sm:$0xff]
    %v183 = vld [vmem:[#allocation2 + $0x3c0] sm:$0xff]
    %v184 = vld [vmem:[#allocation2 + $0x3c8] sm:$0xff]
    %v185 = vld [vmem:[#allocation2 + $0x3d0] sm:$0xff]
    %v186 = vld [vmem:[#allocation2 + $0x3d8] sm:$0xff]
    %v187 = vld [vmem:[#allocation2 + $0x3e0] sm:$0xff]
    %v188 = vld [vmem:[#allocation2 + $0x3e8] sm:$0xff]
    %v189 = vld [vmem:[#allocation2 + $0x3f0] sm:$0xff]
    %v190 = vld [vmem:[#allocation2 + $0x3f8] sm:$0xff]
    %v191 = vld [vmem:[#allocation2 + $0x400] sm:$0xff]
    %v192 = vld [vmem:[#allocation2 + $0x408] sm:$0xff]
    %v193 = vld [vmem:[#allocation2 + $0x410] sm:$0xff]
    %v194 = vld [vmem:[#allocation2 + $0x418] sm:$0xff]
    %v195 = vld [vmem:[#allocation2 + $0x420] sm:$0xff]
    %v196 = vld [vmem:[#allocation2 + $0x428] sm:$0xff]
    %v197 = vld [vmem:[#allocation2 + $0x430] sm:$0xff]
    %v198 = vld [vmem:[#allocation2 + $0x438] sm:$0xff]
    %v199 = vld [vmem:[#allocation2 + $0x440] sm:$0xff]
    %v200 = vld [vmem:[#allocation2 + $0x448] sm:$0xff]
    %v201 = vld [vmem:[#allocation2 + $0x450] sm:$0xff]
    %v202 = vld [vmem:[#allocation2 + $0x458] sm:$0xff]
    %v203 = vld [vmem:[#allocation2 + $0x460] sm:$0xff]
    %v204 = vld [vmem:[#allocation2 + $0x468] sm:$0xff]
    %v205 = vld [vmem:[#allocation2 + $0x470] sm:$0xff]
    %v206 = vld [vmem:[#allocation2 + $0x478] sm:$0xff]
    %v207 = vld [vmem:[#allocation2 + $0x480] sm:$0xff]
    %v208 = vld [vmem:[#allocation2 + $0x488] sm:$0xff]
    %v209 = vld [vmem:[#allocation2 + $0x490] sm:$0xff]
    %v210 = vld [vmem:[#allocation2 + $0x498] sm:$0xff]
    %v211 = vld [vmem:[#allocation2 + $0x4a0] sm:$0xff]
    %v212 = vld [vmem:[#allocation2 + $0x4a8] sm:$0xff]
    %v213 = vld [vmem:[#allocation2 + $0x4b0] sm:$0xff]
    %v214 = vld [vmem:[#allocation2 + $0x4b8] sm:$0xff]
    %v215 = vld [vmem:[#allocation2 + $0x4c0] sm:$0xff]
    %v216 = vld [vmem:[#allocation2 + $0x4c8] sm:$0xff]
    %v217 = vld [vmem:[#allocation2 + $0x4d0] sm:$0xff]
    %v218 = vld [vmem:[#allocation2 + $0x4d8] sm:$0xff]
    %v219 = vld [vmem:[#allocation2 + $0x4e0] sm:$0xff]
    %v220 = vld [vmem:[#allocation2 + $0x4e8] sm:$0xff]
    %v221 = vld [vmem:[#allocation2 + $0x4f0] sm:$0xff]
    %v222 = vld [vmem:[#allocation2 + $0x4f8] sm:$0xff]
    %v223 = vld [vmem:[#allocation2 + $0x500] sm:$0xff]
    %v224 = vld [vmem:[#allocation2 + $0x508] sm:$0xff]
    %v225 = vld [vmem:[#allocation2 + $0x510] sm:$0xff]
    %v226 = vld [vmem:[#allocation2 + $0x518] sm:$0xff]
    %v227 = vld [vmem:[#allocation2 + $0x520] sm:$0xff]
    %v228 = vld [vmem:[#allocation2 + $0x528] sm:$0xff]
    %v229 = vld [vmem:[#allocation2 + $0x530] sm:$0xff]
    %v230 = vld [vmem:[#allocation2 + $0x538] sm:$0xff]
    %v231 = vld [vmem:[#allocation2 + $0x540] sm:$0xff]
    %v232 = vld [vmem:[#allocation2 + $0x548] sm:$0xff]
    %v233 = vld [vmem:[#allocation2 + $0x550] sm:$0xff]
    %v234 = vld [vmem:[#allocation2 + $0x558] sm:$0xff]
    %v235 = vld [vmem:[#allocation2 + $0x560] sm:$0xff]
    %v236 = vld [vmem:[#allocation2 + $0x568] sm:$0xff]
    %v237 = vld [vmem:[#allocation2 + $0x570] sm:$0xff]
    %v238 = vld [vmem:[#allocation2 + $0x578] sm:$0xff]
    %v239 = vld [vmem:[#allocation2 + $0x580] sm:$0xff]
    %v240 = vld [vmem:[#allocation2 + $0x588] sm:$0xff]
    %v241 = vld [vmem:[#allocation2 + $0x590] sm:$0xff]
    %v242 = vld [vmem:[#allocation2 + $0x598] sm:$0xff]
    %v243 = vld [vmem:[#allocation2 + $0x5a0] sm:$0xff]
    %v244 = vld [vmem:[#allocation2 + $0x5a8] sm:$0xff]
    %v245 = vld [vmem:[#allocation2 + $0x5b0] sm:$0xff]
    %v246 = vld [vmem:[#allocation2 + $0x5b8] sm:$0xff]
    %v247 = vld [vmem:[#allocation2 + $0x5c0] sm:$0xff]
    %v248 = vld [vmem:[#allocation2 + $0x5c8] sm:$0xff]
    %v249 = vld [vmem:[#allocation2 + $0x5d0] sm:$0xff]
    %v250 = vld [vmem:[#allocation2 + $0x5d8] sm:$0xff]
    %v251 = vld [vmem:[#allocation2 + $0x5e0] sm:$0xff]
    %v252 = vld [vmem:[#allocation2 + $0x5e8] sm:$0xff]
    %v253 = vld [vmem:[#allocation2 + $0x5f0] sm:$0xff]
    %v254 = vld [vmem:[#allocation2 + $0x5f8] sm:$0xff]
    %v255 = vld [vmem:[#allocation2 + $0x600] sm:$0xff]
    %v256 = vld [vmem:[#allocation2 + $0x608] sm:$0xff]
    %v257 = vld [vmem:[#allocation2 + $0x610] sm:$0xff]
    %v258 = vld [vmem:[#allocation2 + $0x618] sm:$0xff]
    %v259 = vld [vmem:[#allocation2 + $0x620] sm:$0xff]
    %v260 = vld [vmem:[#allocation2 + $0x628] sm:$0xff]
    %v261 = vld [vmem:[#allocation2 + $0x630] sm:$0xff]
    %v262 = vld [vmem:[#allocation2 + $0x638] sm:$0xff]
    %v263 = vld [vmem:[#allocation2 + $0x640] sm:$0xff]
    %v264 = vld [vmem:[#allocation2 + $0x648] sm:$0xff]
    %v265 = vld [vmem:[#allocation2 + $0x650] sm:$0xff]
    %v266 = vld [vmem:[#allocation2 + $0x658] sm:$0xff]
    %v267 = vld [vmem:[#allocation2 + $0x660] sm:$0xff]
    %v268 = vld [vmem:[#allocation2 + $0x668] sm:$0xff]
    %v269 = vld [vmem:[#allocation2 + $0x670] sm:$0xff]
    %v270 = vld [vmem:[#allocation2 + $0x678] sm:$0xff]
    %v271 = vld [vmem:[#allocation2 + $0x680] sm:$0xff]
    %v272 = vld [vmem:[#allocation2 + $0x688] sm:$0xff]
    %v273 = vld [vmem:[#allocation2 + $0x690] sm:$0xff]
    %v274 = vld [vmem:[#allocation2 + $0x698] sm:$0xff]
    %v275 = vld [vmem:[#allocation2 + $0x6a0] sm:$0xff]
    %v276 = vld [vmem:[#allocation2 + $0x6a8] sm:$0xff]
    %v277 = vld [vmem:[#allocation2 + $0x6b0] sm:$0xff]
    %v278 = vld [vmem:[#allocation2 + $0x6b8] sm:$0xff]
    %v279 = vld [vmem:[#allocation2 + $0x6c0] sm:$0xff]
    %v280 = vld [vmem:[#allocation2 + $0x6c8] sm:$0xff]
    %v281 = vld [vmem:[#allocation2 + $0x6d0] sm:$0xff]
    %v282 = vld [vmem:[#allocation2 + $0x6d8] sm:$0xff]
    %v283 = vld [vmem:[#allocation2 + $0x6e0] sm:$0xff]
    %v284 = vld [vmem:[#allocation2 + $0x6e8] sm:$0xff]
    %v285 = vld [vmem:[#allocation2 + $0x6f0] sm:$0xff]
    %v286 = vld [vmem:[#allocation2 + $0x6f8] sm:$0xff]
    %v287 = vld [vmem:[#allocation2 + $0x700] sm:$0xff]
    %v288 = vld [vmem:[#allocation2 + $0x708] sm:$0xff]
    %v289 = vld [vmem:[#allocation2 + $0x710] sm:$0xff]
    %v290 = vld [vmem:[#allocation2 + $0x718] sm:$0xff]
    %v291 = vld [vmem:[#allocation2 + $0x720] sm:$0xff]
    %v292 = vld [vmem:[#allocation2 + $0x728] sm:$0xff]
    %v293 = vld [vmem:[#allocation2 + $0x730] sm:$0xff]
    %v294 = vld [vmem:[#allocation2 + $0x738] sm:$0xff]
    %v295 = vld [vmem:[#allocation2 + $0x740] sm:$0xff]
    %v296 = vld [vmem:[#allocation2 + $0x748] sm:$0xff]
    %v297 = vld [vmem:[#allocation2 + $0x750] sm:$0xff]
    %v298 = vld [vmem:[#allocation2 + $0x758] sm:$0xff]
    %v299 = vld [vmem:[#allocation2 + $0x760] sm:$0xff]
    %v300 = vld [vmem:[#allocation2 + $0x768] sm:$0xff]
    %v301 = vld [vmem:[#allocation2 + $0x770] sm:$0xff]
    %v302 = vld [vmem:[#allocation2 + $0x778] sm:$0xff]
    %v303 = vld [vmem:[#allocation2 + $0x780] sm:$0xff]
    %v304 = vld [vmem:[#allocation2 + $0x788] sm:$0xff]
    %v305 = vld [vmem:[#allocation2 + $0x790] sm:$0xff]
    %v306 = vld [vmem:[#allocation2 + $0x798] sm:$0xff]
    %v307 = vld [vmem:[#allocation2 + $0x7a0] sm:$0xff]
    %v308 = vld [vmem:[#allocation2 + $0x7a8] sm:$0xff]
    %v309 = vld [vmem:[#allocation2 + $0x7b0] sm:$0xff]
    %v310 = vld [vmem:[#allocation2 + $0x7b8] sm:$0xff]
    %v311 = vld [vmem:[#allocation2 + $0x7c0] sm:$0xff]
    %v312 = vld [vmem:[#allocation2 + $0x7c8] sm:$0xff]
    %v313 = vld [vmem:[#allocation2 + $0x7d0] sm:$0xff]
    %v314 = vld [vmem:[#allocation2 + $0x7d8] sm:$0xff]
    %v315 = vld [vmem:[#allocation2 + $0x7e0] sm:$0xff]
    %v316 = vld [vmem:[#allocation2 + $0x7e8] sm:$0xff]
    %v317 = vld [vmem:[#allocation2 + $0x7f0] sm:$0xff]
    %v318 = vld [vmem:[#allocation2 + $0x7f8] sm:$0xff]
    %v319 = vld [vmem:[#allocation2 + $0x800] sm:$0xff]
    %v320 = vld [vmem:[#allocation2 + $0x808] sm:$0xff]
    %v321 = vld [vmem:[#allocation2 + $0x810] sm:$0xff]
    %v322 = vld [vmem:[#allocation2 + $0x818] sm:$0xff]
    %v323 = vld [vmem:[#allocation2 + $0x820] sm:$0xff]
    %v324 = vld [vmem:[#allocation2 + $0x828] sm:$0xff]
    %v325 = vld [vmem:[#allocation2 + $0x830] sm:$0xff]
    %v326 = vld [vmem:[#allocation2 + $0x838] sm:$0xff]
    %v327 = vld [vmem:[#allocation2 + $0x840] sm:$0xff]
    %v328 = vld [vmem:[#allocation2 + $0x848] sm:$0xff]
    %v329 = vld [vmem:[#allocation2 + $0x850] sm:$0xff]
    %v330 = vld [vmem:[#allocation2 + $0x858] sm:$0xff]
    %v331 = vld [vmem:[#allocation2 + $0x860] sm:$0xff]
    %v332 = vld [vmem:[#allocation2 + $0x868] sm:$0xff]
    %v333 = vld [vmem:[#allocation2 + $0x870] sm:$0xff]
    %v334 = vld [vmem:[#allocation2 + $0x878] sm:$0xff]
    %v335 = vld [vmem:[#allocation2 + $0x880] sm:$0xff]
    %v336 = vld [vmem:[#allocation2 + $0x888] sm:$0xff]
    %v337 = vld [vmem:[#allocation2 + $0x890] sm:$0xff]
    %v338 = vld [vmem:[#allocation2 + $0x898] sm:$0xff]
    %v339 = vld [vmem:[#allocation2 + $0x8a0] sm:$0xff]
    %v340 = vld [vmem:[#allocation2 + $0x8a8] sm:$0xff]
    %v341 = vld [vmem:[#allocation2 + $0x8b0] sm:$0xff]
    %v342 = vld [vmem:[#allocation2 + $0x8b8] sm:$0xff]
    %v343 = vld [vmem:[#allocation2 + $0x8c0] sm:$0xff]
    %v344 = vld [vmem:[#allocation2 + $0x8c8] sm:$0xff]
    %v345 = vld [vmem:[#allocation2 + $0x8d0] sm:$0xff]
    %v346 = vld [vmem:[#allocation2 + $0x8d8] sm:$0xff]
    %v347 = vld [vmem:[#allocation2 + $0x8e0] sm:$0xff]
    %v348 = vld [vmem:[#allocation2 + $0x8e8] sm:$0xff]
    %v349 = vld [vmem:[#allocation2 + $0x8f0] sm:$0xff]
    %v350 = vld [vmem:[#allocation2 + $0x8f8] sm:$0xff]
    %v351 = vld [vmem:[#allocation2 + $0x900] sm:$0xff]
    %v352 = vld [vmem:[#allocation2 + $0x908] sm:$0xff]
    %v353 = vld [vmem:[#allocation2 + $0x910] sm:$0xff]
    %v354 = vld [vmem:[#allocation2 + $0x918] sm:$0xff]
    %v355 = vld [vmem:[#allocation2 + $0x920] sm:$0xff]
    %v356 = vld [vmem:[#allocation2 + $0x928] sm:$0xff]
    %v357 = vld [vmem:[#allocation2 + $0x930] sm:$0xff]
    %v358 = vld [vmem:[#allocation2 + $0x938] sm:$0xff]
    %v359 = vld [vmem:[#allocation2 + $0x940] sm:$0xff]
    %v360 = vld [vmem:[#allocation2 + $0x948] sm:$0xff]
    %v361 = vld [vmem:[#allocation2 + $0x950] sm:$0xff]
    %v362 = vld [vmem:[#allocation2 + $0x958] sm:$0xff]
    %v363 = vld [vmem:[#allocation2 + $0x960] sm:$0xff]
    %v364 = vld [vmem:[#allocation2 + $0x968] sm:$0xff]
    %v365 = vld [vmem:[#allocation2 + $0x970] sm:$0xff]
    %v366 = vld [vmem:[#allocation2 + $0x978] sm:$0xff]
    %v367 = vld [vmem:[#allocation2 + $0x980] sm:$0xff]
    %v368 = vld [vmem:[#allocation2 + $0x988] sm:$0xff]
    %v369 = vld [vmem:[#allocation2 + $0x990] sm:$0xff]
    %v370 = vld [vmem:[#allocation2 + $0x998] sm:$0xff]
    %v371 = vld [vmem:[#allocation2 + $0x9a0] sm:$0xff]
    %v372 = vld [vmem:[#allocation2 + $0x9a8] sm:$0xff]
    %v373 = vld [vmem:[#allocation2 + $0x9b0] sm:$0xff]
    %v374 = vld [vmem:[#allocation2 + $0x9b8] sm:$0xff]
    %v375 = vld [vmem:[#allocation2 + $0x9c0] sm:$0xff]
    %v376 = vld [vmem:[#allocation2 + $0x9c8] sm:$0xff]
    %v377 = vld [vmem:[#allocation2 + $0x9d0] sm:$0xff]
    %v378 = vld [vmem:[#allocation2 + $0x9d8] sm:$0xff]
    %v379 = vld [vmem:[#allocation2 + $0x9e0] sm:$0xff]
    %v380 = vld [vmem:[#allocation2 + $0x9e8] sm:$0xff]
    %v381 = vld [vmem:[#allocation2 + $0x9f0] sm:$0xff]
    %v382 = vld [vmem:[#allocation2 + $0x9f8] sm:$0xff]
    %v383 = vld [vmem:[#allocation2 + $0xa00] sm:$0xff]
    %v384 = vld [vmem:[#allocation2 + $0xa08] sm:$0xff]
    %v385 = vld [vmem:[#allocation2 + $0xa10] sm:$0xff]
    %v386 = vld [vmem:[#allocation2 + $0xa18] sm:$0xff]
    %v387 = vld [vmem:[#allocation2 + $0xa20] sm:$0xff]
    %v388 = vld [vmem:[#allocation2 + $0xa28] sm:$0xff]
    %v389 = vld [vmem:[#allocation2 + $0xa30] sm:$0xff]
    %v390 = vld [vmem:[#allocation2 + $0xa38] sm:$0xff]
    %v391 = vld [vmem:[#allocation2 + $0xa40] sm:$0xff]
    %v392 = vld [vmem:[#allocation2 + $0xa48] sm:$0xff]
    %v393 = vld [vmem:[#allocation2 + $0xa50] sm:$0xff]
    %v394 = vld [vmem:[#allocation2 + $0xa58] sm:$0xff]
    %v395 = vld [vmem:[#allocation2 + $0xa60] sm:$0xff]
    %v396 = vld [vmem:[#allocation2 + $0xa68] sm:$0xff]
    %v397 = vld [vmem:[#allocation2 + $0xa70] sm:$0xff]
    %v398 = vld [vmem:[#allocation2 + $0xa78] sm:$0xff]
    %v399 = vld [vmem:[#allocation2 + $0xa80] sm:$0xff]
    %v400 = vld [vmem:[#allocation2 + $0xa88] sm:$0xff]
    %v401 = vld [vmem:[#allocation2 + $0xa90] sm:$0xff]
    %v402 = vld [vmem:[#allocation2 + $0xa98] sm:$0xff]
    %v403 = vld [vmem:[#allocation2 + $0xaa0] sm:$0xff]
    %v404 = vld [vmem:[#allocation2 + $0xaa8] sm:$0xff]
    %v405 = vld [vmem:[#allocation2 + $0xab0] sm:$0xff]
    %v406 = vld [vmem:[#allocation2 + $0xab8] sm:$0xff]
    %v407 = vld [vmem:[#allocation2 + $0xac0] sm:$0xff]
    %v408 = vld [vmem:[#allocation2 + $0xac8] sm:$0xff]
    %v409 = vld [vmem:[#allocation2 + $0xad0] sm:$0xff]
    %v410 = vld [vmem:[#allocation2 + $0xad8] sm:$0xff]
    %v411 = vld [vmem:[#allocation2 + $0xae0] sm:$0xff]
    %v412 = vld [vmem:[#allocation2 + $0xae8] sm:$0xff]
    %v413 = vld [vmem:[#allocation2 + $0xaf0] sm:$0xff]
    %v414 = vld [vmem:[#allocation2 + $0xaf8] sm:$0xff]
    %v415 = vld [vmem:[#allocation2 + $0xb00] sm:$0xff]
    %v416 = vld [vmem:[#allocation2 + $0xb08] sm:$0xff]
    %v417 = vld [vmem:[#allocation2 + $0xb10] sm:$0xff]
    %v418 = vld [vmem:[#allocation2 + $0xb18] sm:$0xff]
    %v419 = vld [vmem:[#allocation2 + $0xb20] sm:$0xff]
    %v420 = vld [vmem:[#allocation2 + $0xb28] sm:$0xff]
    %v421 = vld [vmem:[#allocation2 + $0xb30] sm:$0xff]
    %v422 = vld [vmem:[#allocation2 + $0xb38] sm:$0xff]
    %v423 = vld [vmem:[#allocation2 + $0xb40] sm:$0xff]
    %v424 = vld [vmem:[#allocation2 + $0xb48] sm:$0xff]
    %v425 = vld [vmem:[#allocation2 + $0xb50] sm:$0xff]
    %v426 = vld [vmem:[#allocation2 + $0xb58] sm:$0xff]
    %v427 = vld [vmem:[#allocation2 + $0xb60] sm:$0xff]
    %v428 = vld [vmem:[#allocation2 + $0xb68] sm:$0xff]
    %v429 = vld [vmem:[#allocation2 + $0xb70] sm:$0xff]
    %v430 = vld [vmem:[#allocation2 + $0xb78] sm:$0xff]
    %v431 = vld [vmem:[#allocation2 + $0xb80] sm:$0xff]
    %v432 = vld [vmem:[#allocation2 + $0xb88] sm:$0xff]
    %v433 = vld [vmem:[#allocation2 + $0xb90] sm:$0xff]
    %v434 = vld [vmem:[#allocation2 + $0xb98] sm:$0xff]
    %v435 = vld [vmem:[#allocation2 + $0xba0] sm:$0xff]
    %v436 = vld [vmem:[#allocation2 + $0xba8] sm:$0xff]
    %v437 = vld [vmem:[#allocation2 + $0xbb0] sm:$0xff]
    %v438 = vld [vmem:[#allocation2 + $0xbb8] sm:$0xff]
    %v439 = vld [vmem:[#allocation2 + $0xbc0] sm:$0xff]
    %v440 = vld [vmem:[#allocation2 + $0xbc8] sm:$0xff]
    %v441 = vld [vmem:[#allocation2 + $0xbd0] sm:$0xff]
    %v442 = vld [vmem:[#allocation2 + $0xbd8] sm:$0xff]
    %v443 = vld [vmem:[#allocation2 + $0xbe0] sm:$0xff]
    %v444 = vld [vmem:[#allocation2 + $0xbe8] sm:$0xff]
    %v445 = vld [vmem:[#allocation2 + $0xbf0] sm:$0xff]
    %v446 = vld [vmem:[#allocation2 + $0xbf8] sm:$0xff]
    %v447 = vld [vmem:[#allocation2 + $0xc00] sm:$0xff]
    %v448 = vld [vmem:[#allocation2 + $0xc08] sm:$0xff]
    %v449 = vld [vmem:[#allocation2 + $0xc10] sm:$0xff]
    %v450 = vld [vmem:[#allocation2 + $0xc18] sm:$0xff]
    %v451 = vld [vmem:[#allocation2 + $0xc20] sm:$0xff]
    %v452 = vld [vmem:[#allocation2 + $0xc28] sm:$0xff]
    %v453 = vld [vmem:[#allocation2 + $0xc30] sm:$0xff]
    %v454 = vld [vmem:[#allocation2 + $0xc38] sm:$0xff]
    %v459 = vunpack.c.l.b16 %v59
    %v460 = vunpack.c.h.b16 %v59
    %v461 = vunpack.c.l.b16 %v60
    %v462 = vunpack.c.h.b16 %v60
    %v463 = vunpack.c.l.b16 %v61
    %v464 = vunpack.c.h.b16 %v61
    %v465 = vunpack.c.l.b16 %v62
    %v466 = vpack.c.b16 %v459, %v459
    %v467 = vpack.c.b16 %v460, %v460
    %v468 = vpack.c.b16 %v461, %v461
    %v469 = vpack.c.b16 %v462, %v462
    %v470 = vpack.c.b16 %v463, %v463
    %v471 = vpack.c.b16 %v464, %v464
    %v472 = vpack.c.b16 %v465, %v465
    %v871 = vunpack.c.l.b16 %v63
    %v872 = vunpack.c.h.b16 %v63
    %v873 = vunpack.c.l.b16 %v64
    %v874 = vunpack.c.h.b16 %v64
    %v875 = vunpack.c.l.b16 %v65
    %v876 = vunpack.c.h.b16 %v65
    %v877 = vunpack.c.l.b16 %v66
    %v878 = vunpack.c.h.b16 %v66
    %v879 = vunpack.c.l.b16 %v67
    %v880 = vunpack.c.h.b16 %v67
    %v881 = vunpack.c.l.b16 %v68
    %v882 = vunpack.c.h.b16 %v68
    %v883 = vunpack.c.l.b16 %v69
    %v884 = vunpack.c.h.b16 %v69
    %v885 = vunpack.c.l.b16 %v70
    %v886 = vunpack.c.h.b16 %v70
    %v887 = vunpack.c.l.b16 %v71
    %v888 = vunpack.c.h.b16 %v71
    %v889 = vunpack.c.l.b16 %v72
    %v890 = vunpack.c.h.b16 %v72
    %v891 = vunpack.c.l.b16 %v73
    %v892 = vunpack.c.h.b16 %v73
    %v893 = vunpack.c.l.b16 %v74
    %v894 = vunpack.c.h.b16 %v74
    %v895 = vunpack.c.l.b16 %v75
    %v896 = vunpack.c.h.b16 %v75
    %v897 = vunpack.c.l.b16 %v76
    %v898 = vunpack.c.h.b16 %v76
    %v899 = vunpack.c.l.b16 %v77
    %v900 = vunpack.c.h.b16 %v77
    %v901 = vunpack.c.l.b16 %v78
    %v902 = vunpack.c.h.b16 %v78
    %v903 = vunpack.c.l.b16 %v79
    %v904 = vunpack.c.h.b16 %v79
    %v905 = vunpack.c.l.b16 %v80
    %v906 = vunpack.c.h.b16 %v80
    %v907 = vunpack.c.l.b16 %v81
    %v908 = vunpack.c.h.b16 %v81
    %v909 = vunpack.c.l.b16 %v82
    %v910 = vunpack.c.h.b16 %v82
    %v911 = vunpack.c.l.b16 %v83
    %v912 = vunpack.c.h.b16 %v83
    %v913 = vunpack.c.l.b16 %v84
    %v914 = vunpack.c.h.b16 %v84
    %v915 = vunpack.c.l.b16 %v85
    %v916 = vunpack.c.h.b16 %v85
    %v917 = vunpack.c.l.b16 %v86
    %v918 = vunpack.c.h.b16 %v86
    %v919 = vunpack.c.l.b16 %v87
    %v920 = vunpack.c.h.b16 %v87
    %v921 = vunpack.c.l.b16 %v88
    %v922 = vunpack.c.h.b16 %v88
    %v923 = vunpack.c.l.b16 %v89
    %v924 = vunpack.c.h.b16 %v89
    %v925 = vunpack.c.l.b16 %v90
    %v926 = vunpack.c.h.b16 %v90
    %v927 = vunpack.c.l.b16 %v91
    %v928 = vunpack.c.h.b16 %v91
    %v929 = vunpack.c.l.b16 %v92
    %v930 = vunpack.c.h.b16 %v92
    %v931 = vunpack.c.l.b16 %v93
    %v932 = vunpack.c.h.b16 %v93
    %v933 = vunpack.c.l.b16 %v94
    %v934 = vunpack.c.h.b16 %v94
    %v935 = vunpack.c.l.b16 %v95
    %v936 = vunpack.c.h.b16 %v95
    %v937 = vunpack.c.l.b16 %v96
    %v938 = vunpack.c.h.b16 %v96
    %v939 = vunpack.c.l.b16 %v97
    %v940 = vunpack.c.h.b16 %v97
    %v941 = vunpack.c.l.b16 %v98
    %v942 = vunpack.c.h.b16 %v98
    %v943 = vunpack.c.l.b16 %v99
    %v944 = vunpack.c.h.b16 %v99
    %v945 = vunpack.c.l.b16 %v100
    %v946 = vunpack.c.h.b16 %v100
    %v947 = vunpack.c.l.b16 %v101
    %v948 = vunpack.c.h.b16 %v101
    %v949 = vunpack.c.l.b16 %v102
    %v950 = vunpack.c.h.b16 %v102
    %v951 = vunpack.c.l.b16 %v103
    %v952 = vunpack.c.h.b16 %v103
    %v953 = vunpack.c.l.b16 %v104
    %v954 = vunpack.c.h.b16 %v104
    %v955 = vunpack.c.l.b16 %v105
    %v956 = vunpack.c.h.b16 %v105
    %v957 = vunpack.c.l.b16 %v106
    %v958 = vunpack.c.h.b16 %v106
    %v959 = vunpack.c.l.b16 %v107
    %v960 = vunpack.c.h.b16 %v107
    %v961 = vunpack.c.l.b16 %v108
    %v962 = vunpack.c.h.b16 %v108
    %v963 = vunpack.c.l.b16 %v109
    %v964 = vunpack.c.h.b16 %v109
    %v965 = vunpack.c.l.b16 %v110
    %v966 = vunpack.c.h.b16 %v110
    %v967 = vunpack.c.l.b16 %v111
    %v968 = vunpack.c.h.b16 %v111
    %v969 = vunpack.c.l.b16 %v112
    %v970 = vunpack.c.h.b16 %v112
    %v971 = vunpack.c.l.b16 %v113
    %v972 = vunpack.c.h.b16 %v113
    %v973 = vunpack.c.l.b16 %v114
    %v974 = vunpack.c.h.b16 %v114
    %v975 = vunpack.c.l.b16 %v115
    %v976 = vunpack.c.h.b16 %v115
    %v977 = vunpack.c.l.b16 %v116
    %v978 = vunpack.c.h.b16 %v116
    %v979 = vunpack.c.l.b16 %v117
    %v980 = vunpack.c.h.b16 %v117
    %v981 = vunpack.c.l.b16 %v118
    %v982 = vunpack.c.h.b16 %v118
    %v983 = vunpack.c.l.b16 %v119
    %v984 = vunpack.c.h.b16 %v119
    %v985 = vunpack.c.l.b16 %v120
    %v986 = vunpack.c.h.b16 %v120
    %v987 = vunpack.c.l.b16 %v121
    %v988 = vunpack.c.h.b16 %v121
    %v989 = vunpack.c.l.b16 %v122
    %v990 = vunpack.c.h.b16 %v122
    %v991 = vunpack.c.l.b16 %v123
    %v992 = vunpack.c.h.b16 %v123
    %v993 = vunpack.c.l.b16 %v124
    %v994 = vunpack.c.h.b16 %v124
    %v995 = vunpack.c.l.b16 %v125
    %v996 = vunpack.c.h.b16 %v125
    %v997 = vunpack.c.l.b16 %v126
    %v998 = vunpack.c.h.b16 %v126
    %v999 = vunpack.c.l.b16 %v127
    %v1000 = vunpack.c.h.b16 %v127
    %v1001 = vunpack.c.l.b16 %v128
    %v1002 = vunpack.c.h.b16 %v128
    %v1003 = vunpack.c.l.b16 %v129
    %v1004 = vunpack.c.h.b16 %v129
    %v1005 = vunpack.c.l.b16 %v130
    %v1006 = vunpack.c.h.b16 %v130
    %v1007 = vunpack.c.l.b16 %v131
    %v1008 = vunpack.c.h.b16 %v131
    %v1009 = vunpack.c.l.b16 %v132
    %v1010 = vunpack.c.h.b16 %v132
    %v1011 = vunpack.c.l.b16 %v133
    %v1012 = vunpack.c.h.b16 %v133
    %v1013 = vunpack.c.l.b16 %v134
    %v1014 = vunpack.c.h.b16 %v134
    %v1015 = vunpack.c.l.b16 %v135
    %v1016 = vunpack.c.h.b16 %v135
    %v1017 = vunpack.c.l.b16 %v136
    %v1018 = vunpack.c.h.b16 %v136
    %v1019 = vunpack.c.l.b16 %v137
    %v1020 = vunpack.c.h.b16 %v137
    %v1021 = vunpack.c.l.b16 %v138
    %v1022 = vunpack.c.h.b16 %v138
    %v1023 = vunpack.c.l.b16 %v139
    %v1024 = vunpack.c.h.b16 %v139
    %v1025 = vunpack.c.l.b16 %v140
    %v1026 = vunpack.c.h.b16 %v140
    %v1027 = vunpack.c.l.b16 %v141
    %v1028 = vunpack.c.h.b16 %v141
    %v1029 = vunpack.c.l.b16 %v142
    %v1030 = vunpack.c.h.b16 %v142
    %v1031 = vunpack.c.l.b16 %v143
    %v1032 = vunpack.c.h.b16 %v143
    %v1033 = vunpack.c.l.b16 %v144
    %v1034 = vunpack.c.h.b16 %v144
    %v1035 = vunpack.c.l.b16 %v145
    %v1036 = vunpack.c.h.b16 %v145
    %v1037 = vunpack.c.l.b16 %v146
    %v1038 = vunpack.c.h.b16 %v146
    %v1039 = vunpack.c.l.b16 %v147
    %v1040 = vunpack.c.h.b16 %v147
    %v1041 = vunpack.c.l.b16 %v148
    %v1042 = vunpack.c.h.b16 %v148
    %v1043 = vunpack.c.l.b16 %v149
    %v1044 = vunpack.c.h.b16 %v149
    %v1045 = vunpack.c.l.b16 %v150
    %v1046 = vunpack.c.h.b16 %v150
    %v1047 = vunpack.c.l.b16 %v151
    %v1048 = vunpack.c.h.b16 %v151
    %v1049 = vunpack.c.l.b16 %v152
    %v1050 = vunpack.c.h.b16 %v152
    %v1051 = vunpack.c.l.b16 %v153
    %v1052 = vunpack.c.h.b16 %v153
    %v1053 = vunpack.c.l.b16 %v154
    %v1054 = vunpack.c.h.b16 %v154
    %v1055 = vunpack.c.l.b16 %v155
    %v1056 = vunpack.c.h.b16 %v155
    %v1057 = vunpack.c.l.b16 %v156
    %v1058 = vunpack.c.h.b16 %v156
    %v1059 = vunpack.c.l.b16 %v157
    %v1060 = vunpack.c.h.b16 %v157
    %v1061 = vunpack.c.l.b16 %v158
    %v1062 = vunpack.c.h.b16 %v158
    %v1063 = vunpack.c.l.b16 %v159
    %v1064 = vunpack.c.h.b16 %v159
    %v1065 = vunpack.c.l.b16 %v160
    %v1066 = vunpack.c.h.b16 %v160
    %v1067 = vunpack.c.l.b16 %v161
    %v1068 = vunpack.c.h.b16 %v161
    %v1069 = vunpack.c.l.b16 %v162
    %v1070 = vunpack.c.h.b16 %v162
    %v1071 = vunpack.c.l.b16 %v163
    %v1072 = vunpack.c.h.b16 %v163
    %v1073 = vunpack.c.l.b16 %v164
    %v1074 = vunpack.c.h.b16 %v164
    %v1075 = vunpack.c.l.b16 %v165
    %v1076 = vunpack.c.h.b16 %v165
    %v1077 = vunpack.c.l.b16 %v166
    %v1078 = vunpack.c.h.b16 %v166
    %v1079 = vunpack.c.l.b16 %v167
    %v1080 = vunpack.c.h.b16 %v167
    %v1081 = vunpack.c.l.b16 %v168
    %v1082 = vunpack.c.h.b16 %v168
    %v1083 = vunpack.c.l.b16 %v169
    %v1084 = vunpack.c.h.b16 %v169
    %v1085 = vunpack.c.l.b16 %v170
    %v1086 = vunpack.c.h.b16 %v170
    %v1087 = vunpack.c.l.b16 %v171
    %v1088 = vunpack.c.h.b16 %v171
    %v1089 = vunpack.c.l.b16 %v172
    %v1090 = vunpack.c.h.b16 %v172
    %v1091 = vunpack.c.l.b16 %v173
    %v1092 = vunpack.c.h.b16 %v173
    %v1093 = vunpack.c.l.b16 %v174
    %v1094 = vunpack.c.h.b16 %v174
    %v1095 = vunpack.c.l.b16 %v175
    %v1096 = vunpack.c.h.b16 %v175
    %v1097 = vunpack.c.l.b16 %v176
    %v1098 = vunpack.c.h.b16 %v176
    %v1099 = vunpack.c.l.b16 %v177
    %v1100 = vunpack.c.h.b16 %v177
    %v1101 = vunpack.c.l.b16 %v178
    %v1102 = vunpack.c.h.b16 %v178
    %v1103 = vunpack.c.l.b16 %v179
    %v1104 = vunpack.c.h.b16 %v179
    %v1105 = vunpack.c.l.b16 %v180
    %v1106 = vunpack.c.h.b16 %v180
    %v1107 = vunpack.c.l.b16 %v181
    %v1108 = vunpack.c.h.b16 %v181
    %v1109 = vunpack.c.l.b16 %v182
    %v1110 = vunpack.c.h.b16 %v182
    %v1111 = vunpack.c.l.b16 %v183
    %v1112 = vunpack.c.h.b16 %v183
    %v1113 = vunpack.c.l.b16 %v184
    %v1114 = vunpack.c.h.b16 %v184
    %v1115 = vunpack.c.l.b16 %v185
    %v1116 = vunpack.c.h.b16 %v185
    %v1117 = vunpack.c.l.b16 %v186
    %v1118 = vunpack.c.h.b16 %v186
    %v1119 = vunpack.c.l.b16 %v187
    %v1120 = vunpack.c.h.b16 %v187
    %v1121 = vunpack.c.l.b16 %v188
    %v1122 = vunpack.c.h.b16 %v188
    %v1123 = vunpack.c.l.b16 %v189
    %v1124 = vunpack.c.h.b16 %v189
    %v1125 = vunpack.c.l.b16 %v190
    %v1126 = vunpack.c.h.b16 %v190
    %v1127 = vunpack.c.l.b16 %v191
    %v1128 = vunpack.c.h.b16 %v191
    %v1129 = vunpack.c.l.b16 %v192
    %v1130 = vunpack.c.h.b16 %v192
    %v1131 = vunpack.c.l.b16 %v193
    %v1132 = vunpack.c.h.b16 %v193
    %v1133 = vunpack.c.l.b16 %v194
    %v1134 = vunpack.c.h.b16 %v194
    %v1135 = vunpack.c.l.b16 %v195
    %v1136 = vunpack.c.h.b16 %v195
    %v1137 = vunpack.c.l.b16 %v196
    %v1138 = vunpack.c.h.b16 %v196
    %v1139 = vunpack.c.l.b16 %v197
    %v1140 = vunpack.c.h.b16 %v197
    %v1141 = vunpack.c.l.b16 %v198
    %v1142 = vunpack.c.h.b16 %v198
    %v1143 = vunpack.c.l.b16 %v199
    %v1144 = vunpack.c.h.b16 %v199
    %v1145 = vunpack.c.l.b16 %v200
    %v1146 = vunpack.c.h.b16 %v200
    %v1147 = vunpack.c.l.b16 %v201
    %v1148 = vunpack.c.h.b16 %v201
    %v1149 = vunpack.c.l.b16 %v202
    %v1150 = vunpack.c.h.b16 %v202
    %v1151 = vunpack.c.l.b16 %v203
    %v1152 = vunpack.c.h.b16 %v203
    %v1153 = vunpack.c.l.b16 %v204
    %v1154 = vunpack.c.h.b16 %v204
    %v1155 = vunpack.c.l.b16 %v205
    %v1156 = vunpack.c.h.b16 %v205
    %v1157 = vunpack.c.l.b16 %v206
    %v1158 = vunpack.c.h.b16 %v206
    %v1159 = vunpack.c.l.b16 %v207
    %v1160 = vunpack.c.h.b16 %v207
    %v1161 = vunpack.c.l.b16 %v208
    %v1162 = vunpack.c.h.b16 %v208
    %v1163 = vunpack.c.l.b16 %v209
    %v1164 = vunpack.c.h.b16 %v209
    %v1165 = vunpack.c.l.b16 %v210
    %v1166 = vunpack.c.h.b16 %v210
    %v1167 = vunpack.c.l.b16 %v211
    %v1168 = vunpack.c.h.b16 %v211
    %v1169 = vunpack.c.l.b16 %v212
    %v1170 = vunpack.c.h.b16 %v212
    %v1171 = vunpack.c.l.b16 %v213
    %v1172 = vunpack.c.h.b16 %v213
    %v1173 = vunpack.c.l.b16 %v214
    %v1174 = vunpack.c.h.b16 %v214
    %v1175 = vunpack.c.l.b16 %v215
    %v1176 = vunpack.c.h.b16 %v215
    %v1177 = vunpack.c.l.b16 %v216
    %v1178 = vunpack.c.h.b16 %v216
    %v1179 = vunpack.c.l.b16 %v217
    %v1180 = vunpack.c.h.b16 %v217
    %v1181 = vunpack.c.l.b16 %v218
    %v1182 = vunpack.c.h.b16 %v218
    %v1183 = vunpack.c.l.b16 %v219
    %v1184 = vunpack.c.h.b16 %v219
    %v1185 = vunpack.c.l.b16 %v220
    %v1186 = vunpack.c.h.b16 %v220
    %v1187 = vunpack.c.l.b16 %v221
    %v1188 = vunpack.c.h.b16 %v221
    %v1189 = vunpack.c.l.b16 %v222
    %v1190 = vunpack.c.h.b16 %v222
    %v1191 = vunpack.c.l.b16 %v223
    %v1192 = vunpack.c.h.b16 %v223
    %v1193 = vunpack.c.l.b16 %v224
    %v1194 = vunpack.c.h.b16 %v224
    %v1195 = vunpack.c.l.b16 %v225
    %v1196 = vunpack.c.h.b16 %v225
    %v1197 = vunpack.c.l.b16 %v226
    %v1198 = vunpack.c.h.b16 %v226
    %v1199 = vunpack.c.l.b16 %v227
    %v1200 = vunpack.c.h.b16 %v227
    %v1201 = vunpack.c.l.b16 %v228
    %v1202 = vunpack.c.h.b16 %v228
    %v1203 = vunpack.c.l.b16 %v229
    %v1204 = vunpack.c.h.b16 %v229
    %v1205 = vunpack.c.l.b16 %v230
    %v1206 = vunpack.c.h.b16 %v230
    %v1207 = vunpack.c.l.b16 %v231
    %v1208 = vunpack.c.h.b16 %v231
    %v1209 = vunpack.c.l.b16 %v232
    %v1210 = vunpack.c.h.b16 %v232
    %v1211 = vunpack.c.l.b16 %v233
    %v1212 = vunpack.c.h.b16 %v233
    %v1213 = vunpack.c.l.b16 %v234
    %v1214 = vunpack.c.h.b16 %v234
    %v1215 = vunpack.c.l.b16 %v235
    %v1216 = vunpack.c.h.b16 %v235
    %v1217 = vunpack.c.l.b16 %v236
    %v1218 = vunpack.c.h.b16 %v236
    %v1219 = vunpack.c.l.b16 %v237
    %v1220 = vunpack.c.h.b16 %v237
    %v1221 = vunpack.c.l.b16 %v238
    %v1222 = vunpack.c.h.b16 %v238
    %v1223 = vunpack.c.l.b16 %v239
    %v1224 = vunpack.c.h.b16 %v239
    %v1225 = vunpack.c.l.b16 %v240
    %v1226 = vunpack.c.h.b16 %v240
    %v1227 = vunpack.c.l.b16 %v241
    %v1228 = vunpack.c.h.b16 %v241
    %v1229 = vunpack.c.l.b16 %v242
    %v1230 = vunpack.c.h.b16 %v242
    %v1231 = vunpack.c.l.b16 %v243
    %v1232 = vunpack.c.h.b16 %v243
    %v1233 = vunpack.c.l.b16 %v244
    %v1234 = vunpack.c.h.b16 %v244
    %v1235 = vunpack.c.l.b16 %v245
    %v1236 = vunpack.c.h.b16 %v245
    %v1237 = vunpack.c.l.b16 %v246
    %v1238 = vunpack.c.h.b16 %v246
    %v1239 = vunpack.c.l.b16 %v247
    %v1240 = vunpack.c.h.b16 %v247
    %v1241 = vunpack.c.l.b16 %v248
    %v1242 = vunpack.c.h.b16 %v248
    %v1243 = vunpack.c.l.b16 %v249
    %v1244 = vunpack.c.h.b16 %v249
    %v1245 = vunpack.c.l.b16 %v250
    %v1246 = vunpack.c.h.b16 %v250
    %v1247 = vunpack.c.l.b16 %v251
    %v1248 = vunpack.c.h.b16 %v251
    %v1249 = vunpack.c.l.b16 %v252
    %v1250 = vunpack.c.h.b16 %v252
    %v1251 = vunpack.c.l.b16 %v253
    %v1252 = vunpack.c.h.b16 %v253
    %v1253 = vunpack.c.l.b16 %v254
    %v1254 = vunpack.c.h.b16 %v254
    %v1255 = vunpack.c.l.b16 %v255
    %v1256 = vunpack.c.h.b16 %v255
    %v1257 = vunpack.c.l.b16 %v256
    %v1258 = vunpack.c.h.b16 %v256
    %v1259 = vunpack.c.l.b16 %v257
    %v1260 = vunpack.c.h.b16 %v257
    %v1261 = vunpack.c.l.b16 %v258
    %v1262 = vunpack.c.h.b16 %v258
    %v1263 = vunpack.c.l.b16 %v259
    %v1264 = vunpack.c.h.b16 %v259
    %v1265 = vunpack.c.l.b16 %v260
    %v1266 = vunpack.c.h.b16 %v260
    %v1267 = vunpack.c.l.b16 %v261
    %v1268 = vunpack.c.h.b16 %v261
    %v1269 = vunpack.c.l.b16 %v262
    %v1270 = vunpack.c.h.b16 %v262
    %v1271 = vunpack.c.l.b16 %v263
    %v1272 = vunpack.c.h.b16 %v263
    %v1273 = vunpack.c.l.b16 %v264
    %v1274 = vunpack.c.h.b16 %v264
    %v1275 = vunpack.c.l.b16 %v265
    %v1276 = vunpack.c.h.b16 %v265
    %v1277 = vunpack.c.l.b16 %v266
    %v1278 = vunpack.c.h.b16 %v266
    %v1279 = vunpack.c.l.b16 %v267
    %v1280 = vunpack.c.h.b16 %v267
    %v1281 = vunpack.c.l.b16 %v268
    %v1282 = vunpack.c.h.b16 %v268
    %v1283 = vunpack.c.l.b16 %v269
    %v1284 = vunpack.c.h.b16 %v269
    %v1285 = vunpack.c.l.b16 %v270
    %v1286 = vunpack.c.h.b16 %v270
    %v1287 = vunpack.c.l.b16 %v271
    %v1288 = vunpack.c.h.b16 %v271
    %v1289 = vunpack.c.l.b16 %v272
    %v1290 = vunpack.c.h.b16 %v272
    %v1291 = vunpack.c.l.b16 %v273
    %v1292 = vunpack.c.h.b16 %v273
    %v1293 = vunpack.c.l.b16 %v274
    %v1294 = vunpack.c.h.b16 %v274
    %v1295 = vunpack.c.l.b16 %v275
    %v1296 = vunpack.c.h.b16 %v275
    %v1297 = vunpack.c.l.b16 %v276
    %v1298 = vunpack.c.h.b16 %v276
    %v1299 = vunpack.c.l.b16 %v277
    %v1300 = vunpack.c.h.b16 %v277
    %v1301 = vunpack.c.l.b16 %v278
    %v1302 = vunpack.c.h.b16 %v278
    %v1303 = vunpack.c.l.b16 %v279
    %v1304 = vunpack.c.h.b16 %v279
    %v1305 = vunpack.c.l.b16 %v280
    %v1306 = vunpack.c.h.b16 %v280
    %v1307 = vunpack.c.l.b16 %v281
    %v1308 = vunpack.c.h.b16 %v281
    %v1309 = vunpack.c.l.b16 %v282
    %v1310 = vunpack.c.h.b16 %v282
    %v1311 = vunpack.c.l.b16 %v283
    %v1312 = vunpack.c.h.b16 %v283
    %v1313 = vunpack.c.l.b16 %v284
    %v1314 = vunpack.c.h.b16 %v284
    %v1315 = vunpack.c.l.b16 %v285
    %v1316 = vunpack.c.h.b16 %v285
    %v1317 = vunpack.c.l.b16 %v286
    %v1318 = vunpack.c.h.b16 %v286
    %v1319 = vunpack.c.l.b16 %v287
    %v1320 = vunpack.c.h.b16 %v287
    %v1321 = vunpack.c.l.b16 %v288
    %v1322 = vunpack.c.h.b16 %v288
    %v1323 = vunpack.c.l.b16 %v289
    %v1324 = vunpack.c.h.b16 %v289
    %v1325 = vunpack.c.l.b16 %v290
    %v1326 = vunpack.c.h.b16 %v290
    %v1327 = vunpack.c.l.b16 %v291
    %v1328 = vunpack.c.h.b16 %v291
    %v1329 = vunpack.c.l.b16 %v292
    %v1330 = vunpack.c.h.b16 %v292
    %v1331 = vunpack.c.l.b16 %v293
    %v1332 = vunpack.c.h.b16 %v293
    %v1333 = vunpack.c.l.b16 %v294
    %v1334 = vunpack.c.h.b16 %v294
    %v1335 = vunpack.c.l.b16 %v295
    %v1336 = vunpack.c.h.b16 %v295
    %v1337 = vunpack.c.l.b16 %v296
    %v1338 = vunpack.c.h.b16 %v296
    %v1339 = vunpack.c.l.b16 %v297
    %v1340 = vunpack.c.h.b16 %v297
    %v1341 = vunpack.c.l.b16 %v298
    %v1342 = vunpack.c.h.b16 %v298
    %v1343 = vunpack.c.l.b16 %v299
    %v1344 = vunpack.c.h.b16 %v299
    %v1345 = vunpack.c.l.b16 %v300
    %v1346 = vunpack.c.h.b16 %v300
    %v1347 = vunpack.c.l.b16 %v301
    %v1348 = vunpack.c.h.b16 %v301
    %v1349 = vunpack.c.l.b16 %v302
    %v1350 = vunpack.c.h.b16 %v302
    %v1351 = vunpack.c.l.b16 %v303
    %v1352 = vunpack.c.h.b16 %v303
    %v1353 = vunpack.c.l.b16 %v304
    %v1354 = vunpack.c.h.b16 %v304
    %v1355 = vunpack.c.l.b16 %v305
    %v1356 = vunpack.c.h.b16 %v305
    %v1357 = vunpack.c.l.b16 %v306
    %v1358 = vunpack.c.h.b16 %v306
    %v1359 = vunpack.c.l.b16 %v307
    %v1360 = vunpack.c.h.b16 %v307
    %v1361 = vunpack.c.l.b16 %v308
    %v1362 = vunpack.c.h.b16 %v308
    %v1363 = vunpack.c.l.b16 %v309
    %v1364 = vunpack.c.h.b16 %v309
    %v1365 = vunpack.c.l.b16 %v310
    %v1366 = vunpack.c.h.b16 %v310
    %v1367 = vunpack.c.l.b16 %v311
    %v1368 = vunpack.c.h.b16 %v311
    %v1369 = vunpack.c.l.b16 %v312
    %v1370 = vunpack.c.h.b16 %v312
    %v1371 = vunpack.c.l.b16 %v313
    %v1372 = vunpack.c.h.b16 %v313
    %v1373 = vunpack.c.l.b16 %v314
    %v1374 = vunpack.c.h.b16 %v314
    %v1375 = vunpack.c.l.b16 %v315
    %v1376 = vunpack.c.h.b16 %v315
    %v1377 = vunpack.c.l.b16 %v316
    %v1378 = vunpack.c.h.b16 %v316
    %v1379 = vunpack.c.l.b16 %v317
    %v1380 = vunpack.c.h.b16 %v317
    %v1381 = vunpack.c.l.b16 %v318
    %v1382 = vunpack.c.h.b16 %v318
    %v1383 = vunpack.c.l.b16 %v319
    %v1384 = vunpack.c.h.b16 %v319
    %v1385 = vunpack.c.l.b16 %v320
    %v1386 = vunpack.c.h.b16 %v320
    %v1387 = vunpack.c.l.b16 %v321
    %v1388 = vunpack.c.h.b16 %v321
    %v1389 = vunpack.c.l.b16 %v322
    %v1390 = vunpack.c.h.b16 %v322
    %v1391 = vunpack.c.l.b16 %v323
    %v1392 = vunpack.c.h.b16 %v323
    %v1393 = vunpack.c.l.b16 %v324
    %v1394 = vunpack.c.h.b16 %v324
    %v1395 = vunpack.c.l.b16 %v325
    %v1396 = vunpack.c.h.b16 %v325
    %v1397 = vunpack.c.l.b16 %v326
    %v1398 = vunpack.c.h.b16 %v326
    %v1399 = vunpack.c.l.b16 %v327
    %v1400 = vunpack.c.h.b16 %v327
    %v1401 = vunpack.c.l.b16 %v328
    %v1402 = vunpack.c.h.b16 %v328
    %v1403 = vunpack.c.l.b16 %v329
    %v1404 = vunpack.c.h.b16 %v329
    %v1405 = vunpack.c.l.b16 %v330
    %v1406 = vunpack.c.h.b16 %v330
    %v1407 = vunpack.c.l.b16 %v331
    %v1408 = vunpack.c.h.b16 %v331
    %v1409 = vunpack.c.l.b16 %v332
    %v1410 = vunpack.c.h.b16 %v332
    %v1411 = vunpack.c.l.b16 %v333
    %v1412 = vunpack.c.h.b16 %v333
    %v1413 = vunpack.c.l.b16 %v334
    %v1414 = vunpack.c.h.b16 %v334
    %v1415 = vunpack.c.l.b16 %v335
    %v1416 = vunpack.c.h.b16 %v335
    %v1417 = vunpack.c.l.b16 %v336
    %v1418 = vunpack.c.h.b16 %v336
    %v1419 = vunpack.c.l.b16 %v337
    %v1420 = vunpack.c.h.b16 %v337
    %v1421 = vunpack.c.l.b16 %v338
    %v1422 = vunpack.c.h.b16 %v338
    %v1423 = vunpack.c.l.b16 %v339
    %v1424 = vunpack.c.h.b16 %v339
    %v1425 = vunpack.c.l.b16 %v340
    %v1426 = vunpack.c.h.b16 %v340
    %v1427 = vunpack.c.l.b16 %v341
    %v1428 = vunpack.c.h.b16 %v341
    %v1429 = vunpack.c.l.b16 %v342
    %v1430 = vunpack.c.h.b16 %v342
    %v1431 = vunpack.c.l.b16 %v343
    %v1432 = vunpack.c.h.b16 %v343
    %v1433 = vunpack.c.l.b16 %v344
    %v1434 = vunpack.c.h.b16 %v344
    %v1435 = vunpack.c.l.b16 %v345
    %v1436 = vunpack.c.h.b16 %v345
    %v1437 = vunpack.c.l.b16 %v346
    %v1438 = vunpack.c.h.b16 %v346
    %v1439 = vunpack.c.l.b16 %v347
    %v1440 = vunpack.c.h.b16 %v347
    %v1441 = vunpack.c.l.b16 %v348
    %v1442 = vunpack.c.h.b16 %v348
    %v1443 = vunpack.c.l.b16 %v349
    %v1444 = vunpack.c.h.b16 %v349
    %v1445 = vunpack.c.l.b16 %v350
    %v1446 = vunpack.c.h.b16 %v350
    %v1447 = vunpack.c.l.b16 %v351
    %v1448 = vunpack.c.h.b16 %v351
    %v1449 = vunpack.c.l.b16 %v352
    %v1450 = vunpack.c.h.b16 %v352
    %v1451 = vunpack.c.l.b16 %v353
    %v1452 = vunpack.c.h.b16 %v353
    %v1453 = vunpack.c.l.b16 %v354
    %v1454 = vunpack.c.h.b16 %v354
    %v1455 = vunpack.c.l.b16 %v355
    %v1456 = vunpack.c.h.b16 %v355
    %v1457 = vunpack.c.l.b16 %v356
    %v1458 = vunpack.c.h.b16 %v356
    %v1459 = vunpack.c.l.b16 %v357
    %v1460 = vunpack.c.h.b16 %v357
    %v1461 = vunpack.c.l.b16 %v358
    %v1462 = vunpack.c.h.b16 %v358
    %v1463 = vunpack.c.l.b16 %v359
    %v1464 = vunpack.c.h.b16 %v359
    %v1465 = vunpack.c.l.b16 %v360
    %v1466 = vunpack.c.h.b16 %v360
    %v1467 = vunpack.c.l.b16 %v361
    %v1468 = vunpack.c.h.b16 %v361
    %v1469 = vunpack.c.l.b16 %v362
    %v1470 = vunpack.c.h.b16 %v362
    %v1471 = vunpack.c.l.b16 %v363
    %v1472 = vunpack.c.h.b16 %v363
    %v1473 = vunpack.c.l.b16 %v364
    %v1474 = vunpack.c.h.b16 %v364
    %v1475 = vunpack.c.l.b16 %v365
    %v1476 = vunpack.c.h.b16 %v365
    %v1477 = vunpack.c.l.b16 %v366
    %v1478 = vunpack.c.h.b16 %v366
    %v1479 = vunpack.c.l.b16 %v367
    %v1480 = vunpack.c.h.b16 %v367
    %v1481 = vunpack.c.l.b16 %v368
    %v1482 = vunpack.c.h.b16 %v368
    %v1483 = vunpack.c.l.b16 %v369
    %v1484 = vunpack.c.h.b16 %v369
    %v1485 = vunpack.c.l.b16 %v370
    %v1486 = vunpack.c.h.b16 %v370
    %v1487 = vunpack.c.l.b16 %v371
    %v1488 = vunpack.c.h.b16 %v371
    %v1489 = vunpack.c.l.b16 %v372
    %v1490 = vunpack.c.h.b16 %v372
    %v1491 = vunpack.c.l.b16 %v373
    %v1492 = vunpack.c.h.b16 %v373
    %v1493 = vunpack.c.l.b16 %v374
    %v1494 = vunpack.c.h.b16 %v374
    %v1495 = vunpack.c.l.b16 %v375
    %v1496 = vunpack.c.h.b16 %v375
    %v1497 = vunpack.c.l.b16 %v376
    %v1498 = vunpack.c.h.b16 %v376
    %v1499 = vunpack.c.l.b16 %v377
    %v1500 = vunpack.c.h.b16 %v377
    %v1501 = vunpack.c.l.b16 %v378
    %v1502 = vunpack.c.h.b16 %v378
    %v1503 = vunpack.c.l.b16 %v379
    %v1504 = vunpack.c.h.b16 %v379
    %v1505 = vunpack.c.l.b16 %v380
    %v1506 = vunpack.c.h.b16 %v380
    %v1507 = vunpack.c.l.b16 %v381
    %v1508 = vunpack.c.h.b16 %v381
    %v1509 = vunpack.c.l.b16 %v382
    %v1510 = vunpack.c.h.b16 %v382
    %v1511 = vunpack.c.l.b16 %v383
    %v1512 = vunpack.c.h.b16 %v383
    %v1513 = vunpack.c.l.b16 %v384
    %v1514 = vunpack.c.h.b16 %v384
    %v1515 = vunpack.c.l.b16 %v385
    %v1516 = vunpack.c.h.b16 %v385
    %v1517 = vunpack.c.l.b16 %v386
    %v1518 = vunpack.c.h.b16 %v386
    %v1519 = vunpack.c.l.b16 %v387
    %v1520 = vunpack.c.h.b16 %v387
    %v1521 = vunpack.c.l.b16 %v388
    %v1522 = vunpack.c.h.b16 %v388
    %v1523 = vunpack.c.l.b16 %v389
    %v1524 = vunpack.c.h.b16 %v389
    %v1525 = vunpack.c.l.b16 %v390
    %v1526 = vunpack.c.h.b16 %v390
    %v1527 = vunpack.c.l.b16 %v391
    %v1528 = vunpack.c.h.b16 %v391
    %v1529 = vunpack.c.l.b16 %v392
    %v1530 = vunpack.c.h.b16 %v392
    %v1531 = vunpack.c.l.b16 %v393
    %v1532 = vunpack.c.h.b16 %v393
    %v1533 = vunpack.c.l.b16 %v394
    %v1534 = vunpack.c.h.b16 %v394
    %v1535 = vunpack.c.l.b16 %v395
    %v1536 = vunpack.c.h.b16 %v395
    %v1537 = vunpack.c.l.b16 %v396
    %v1538 = vunpack.c.h.b16 %v396
    %v1539 = vunpack.c.l.b16 %v397
    %v1540 = vunpack.c.h.b16 %v397
    %v1541 = vunpack.c.l.b16 %v398
    %v1542 = vunpack.c.h.b16 %v398
    %v1543 = vunpack.c.l.b16 %v399
    %v1544 = vunpack.c.h.b16 %v399
    %v1545 = vunpack.c.l.b16 %v400
    %v1546 = vunpack.c.h.b16 %v400
    %v1547 = vunpack.c.l.b16 %v401
    %v1548 = vunpack.c.h.b16 %v401
    %v1549 = vunpack.c.l.b16 %v402
    %v1550 = vunpack.c.h.b16 %v402
    %v1551 = vunpack.c.l.b16 %v403
    %v1552 = vunpack.c.h.b16 %v403
    %v1553 = vunpack.c.l.b16 %v404
    %v1554 = vunpack.c.h.b16 %v404
    %v1555 = vunpack.c.l.b16 %v405
    %v1556 = vunpack.c.h.b16 %v405
    %v1557 = vunpack.c.l.b16 %v406
    %v1558 = vunpack.c.h.b16 %v406
    %v1559 = vunpack.c.l.b16 %v407
    %v1560 = vunpack.c.h.b16 %v407
    %v1561 = vunpack.c.l.b16 %v408
    %v1562 = vunpack.c.h.b16 %v408
    %v1563 = vunpack.c.l.b16 %v409
    %v1564 = vunpack.c.h.b16 %v409
    %v1565 = vunpack.c.l.b16 %v410
    %v1566 = vunpack.c.h.b16 %v410
    %v1567 = vunpack.c.l.b16 %v411
    %v1568 = vunpack.c.h.b16 %v411
    %v1569 = vunpack.c.l.b16 %v412
    %v1570 = vunpack.c.h.b16 %v412
    %v1571 = vunpack.c.l.b16 %v413
    %v1572 = vunpack.c.h.b16 %v413
    %v1573 = vunpack.c.l.b16 %v414
    %v1574 = vunpack.c.h.b16 %v414
    %v1575 = vunpack.c.l.b16 %v415
    %v1576 = vunpack.c.h.b16 %v415
    %v1577 = vunpack.c.l.b16 %v416
    %v1578 = vunpack.c.h.b16 %v416
    %v1579 = vunpack.c.l.b16 %v417
    %v1580 = vunpack.c.h.b16 %v417
    %v1581 = vunpack.c.l.b16 %v418
    %v1582 = vunpack.c.h.b16 %v418
    %v1583 = vunpack.c.l.b16 %v419
    %v1584 = vunpack.c.h.b16 %v419
    %v1585 = vunpack.c.l.b16 %v420
    %v1586 = vunpack.c.h.b16 %v420
    %v1587 = vunpack.c.l.b16 %v421
    %v1588 = vunpack.c.h.b16 %v421
    %v1589 = vunpack.c.l.b16 %v422
    %v1590 = vunpack.c.h.b16 %v422
    %v1591 = vunpack.c.l.b16 %v423
    %v1592 = vunpack.c.h.b16 %v423
    %v1593 = vunpack.c.l.b16 %v424
    %v1594 = vunpack.c.h.b16 %v424
    %v1595 = vunpack.c.l.b16 %v425
    %v1596 = vunpack.c.h.b16 %v425
    %v1597 = vunpack.c.l.b16 %v426
    %v1598 = vunpack.c.h.b16 %v426
    %v1599 = vunpack.c.l.b16 %v427
    %v1600 = vunpack.c.h.b16 %v427
    %v1601 = vunpack.c.l.b16 %v428
    %v1602 = vunpack.c.h.b16 %v428
    %v1603 = vunpack.c.l.b16 %v429
    %v1604 = vunpack.c.h.b16 %v429
    %v1605 = vunpack.c.l.b16 %v430
    %v1606 = vunpack.c.h.b16 %v430
    %v1607 = vunpack.c.l.b16 %v431
    %v1608 = vunpack.c.h.b16 %v431
    %v1609 = vunpack.c.l.b16 %v432
    %v1610 = vunpack.c.h.b16 %v432
    %v1611 = vunpack.c.l.b16 %v433
    %v1612 = vunpack.c.h.b16 %v433
    %v1613 = vunpack.c.l.b16 %v434
    %v1614 = vunpack.c.h.b16 %v434
    %v1615 = vunpack.c.l.b16 %v435
    %v1616 = vunpack.c.h.b16 %v435
    %v1617 = vunpack.c.l.b16 %v436
    %v1618 = vunpack.c.h.b16 %v436
    %v1619 = vunpack.c.l.b16 %v437
    %v1620 = vunpack.c.h.b16 %v437
    %v1621 = vunpack.c.l.b16 %v438
    %v1622 = vunpack.c.h.b16 %v438
    %v1623 = vunpack.c.l.b16 %v439
    %v1624 = vunpack.c.h.b16 %v439
    %v1625 = vunpack.c.l.b16 %v440
    %v1626 = vunpack.c.h.b16 %v440
    %v1627 = vunpack.c.l.b16 %v441
    %v1628 = vunpack.c.h.b16 %v441
    %v1629 = vunpack.c.l.b16 %v442
    %v1630 = vunpack.c.h.b16 %v442
    %v1631 = vunpack.c.l.b16 %v443
    %v1632 = vunpack.c.h.b16 %v443
    %v1633 = vunpack.c.l.b16 %v444
    %v1634 = vunpack.c.h.b16 %v444
    %v1635 = vunpack.c.l.b16 %v445
    %v1636 = vunpack.c.h.b16 %v445
    %v1637 = vunpack.c.l.b16 %v446
    %v1638 = vunpack.c.h.b16 %v446
    %v1639 = vunpack.c.l.b16 %v447
    %v1640 = vunpack.c.h.b16 %v447
    %v1641 = vunpack.c.l.b16 %v448
    %v1642 = vunpack.c.h.b16 %v448
    %v1643 = vunpack.c.l.b16 %v449
    %v1644 = vunpack.c.h.b16 %v449
    %v1645 = vunpack.c.l.b16 %v450
    %v1646 = vunpack.c.h.b16 %v450
    %v1647 = vunpack.c.l.b16 %v451
    %v1648 = vunpack.c.h.b16 %v451
    %v1649 = vunpack.c.l.b16 %v452
    %v1650 = vunpack.c.h.b16 %v452
    %v1651 = vunpack.c.l.b16 %v453
    %v1652 = vunpack.c.h.b16 %v453
    %v1653 = vunpack.c.l.b16 %v454
    %v1654 = vunpack.c.h.b16 %v454
    %v1655 = vpack.c.b16 %v879, %v871
    %v1656 = vpack.c.b16 %v880, %v872
    %v1657 = vpack.c.b16 %v881, %v873
    %v1658 = vpack.c.b16 %v882, %v874
    %v1659 = vpack.c.b16 %v883, %v875
    %v1660 = vpack.c.b16 %v884, %v876
    %v1661 = vpack.c.b16 %v885, %v877
    %v1662 = vpack.c.b16 %v886, %v878
    %v1663 = vpack.c.b16 %v895, %v887
    %v1664 = vpack.c.b16 %v896, %v888
    %v1665 = vpack.c.b16 %v897, %v889
    %v1666 = vpack.c.b16 %v898, %v890
    %v1667 = vpack.c.b16 %v899, %v891
    %v1668 = vpack.c.b16 %v900, %v892
    %v1669 = vpack.c.b16 %v901, %v893
    %v1670 = vpack.c.b16 %v902, %v894
    %v1671 = vpack.c.b16 %v911, %v903
    %v1672 = vpack.c.b16 %v912, %v904
    %v1673 = vpack.c.b16 %v913, %v905
    %v1674 = vpack.c.b16 %v914, %v906
    %v1675 = vpack.c.b16 %v915, %v907
    %v1676 = vpack.c.b16 %v916, %v908
    %v1677 = vpack.c.b16 %v917, %v909
    %v1678 = vpack.c.b16 %v918, %v910
    %v1679 = vpack.c.b16 %v927, %v919
    %v1680 = vpack.c.b16 %v928, %v920
    %v1681 = vpack.c.b16 %v929, %v921
    %v1682 = vpack.c.b16 %v930, %v922
    %v1683 = vpack.c.b16 %v931, %v923
    %v1684 = vpack.c.b16 %v932, %v924
    %v1685 = vpack.c.b16 %v933, %v925
    %v1686 = vpack.c.b16 %v934, %v926
    %v1687 = vpack.c.b16 %v943, %v935
    %v1688 = vpack.c.b16 %v944, %v936
    %v1689 = vpack.c.b16 %v945, %v937
    %v1690 = vpack.c.b16 %v946, %v938
    %v1691 = vpack.c.b16 %v947, %v939
    %v1692 = vpack.c.b16 %v948, %v940
    %v1693 = vpack.c.b16 %v949, %v941
    %v1694 = vpack.c.b16 %v950, %v942
    %v1695 = vpack.c.b16 %v959, %v951
    %v1696 = vpack.c.b16 %v960, %v952
    %v1697 = vpack.c.b16 %v961, %v953
    %v1698 = vpack.c.b16 %v962, %v954
    %v1699 = vpack.c.b16 %v963, %v955
    %v1700 = vpack.c.b16 %v964, %v956
    %v1701 = vpack.c.b16 %v965, %v957
    %v1702 = vpack.c.b16 %v966, %v958
    %v1703 = vpack.c.b16 %v975, %v967
    %v1704 = vpack.c.b16 %v976, %v968
    %v1705 = vpack.c.b16 %v977, %v969
    %v1706 = vpack.c.b16 %v978, %v970
    %v1707 = vpack.c.b16 %v979, %v971
    %v1708 = vpack.c.b16 %v980, %v972
    %v1709 = vpack.c.b16 %v981, %v973
    %v1710 = vpack.c.b16 %v982, %v974
    %v1711 = vpack.c.b16 %v991, %v983
    %v1712 = vpack.c.b16 %v992, %v984
    %v1713 = vpack.c.b16 %v993, %v985
    %v1714 = vpack.c.b16 %v994, %v986
    %v1715 = vpack.c.b16 %v995, %v987
    %v1716 = vpack.c.b16 %v996, %v988
    %v1717 = vpack.c.b16 %v997, %v989
    %v1718 = vpack.c.b16 %v998, %v990
    %v1719 = vpack.c.b16 %v1007, %v999
    %v1720 = vpack.c.b16 %v1008, %v1000
    %v1721 = vpack.c.b16 %v1009, %v1001
    %v1722 = vpack.c.b16 %v1010, %v1002
    %v1723 = vpack.c.b16 %v1011, %v1003
    %v1724 = vpack.c.b16 %v1012, %v1004
    %v1725 = vpack.c.b16 %v1013, %v1005
    %v1726 = vpack.c.b16 %v1014, %v1006
    %v1727 = vpack.c.b16 %v1023, %v1015
    %v1728 = vpack.c.b16 %v1024, %v1016
    %v1729 = vpack.c.b16 %v1025, %v1017
    %v1730 = vpack.c.b16 %v1026, %v1018
    %v1731 = vpack.c.b16 %v1027, %v1019
    %v1732 = vpack.c.b16 %v1028, %v1020
    %v1733 = vpack.c.b16 %v1029, %v1021
    %v1734 = vpack.c.b16 %v1030, %v1022
    %v1735 = vpack.c.b16 %v1039, %v1031
    %v1736 = vpack.c.b16 %v1040, %v1032
    %v1737 = vpack.c.b16 %v1041, %v1033
    %v1738 = vpack.c.b16 %v1042, %v1034
    %v1739 = vpack.c.b16 %v1043, %v1035
    %v1740 = vpack.c.b16 %v1044, %v1036
    %v1741 = vpack.c.b16 %v1045, %v1037
    %v1742 = vpack.c.b16 %v1046, %v1038
    %v1743 = vpack.c.b16 %v1055, %v1047
    %v1744 = vpack.c.b16 %v1056, %v1048
    %v1745 = vpack.c.b16 %v1057, %v1049
    %v1746 = vpack.c.b16 %v1058, %v1050
    %v1747 = vpack.c.b16 %v1059, %v1051
    %v1748 = vpack.c.b16 %v1060, %v1052
    %v1749 = vpack.c.b16 %v1061, %v1053
    %v1750 = vpack.c.b16 %v1062, %v1054
    %v1751 = vpack.c.b16 %v1071, %v1063
    %v1752 = vpack.c.b16 %v1072, %v1064
    %v1753 = vpack.c.b16 %v1073, %v1065
    %v1754 = vpack.c.b16 %v1074, %v1066
    %v1755 = vpack.c.b16 %v1075, %v1067
    %v1756 = vpack.c.b16 %v1076, %v1068
    %v1757 = vpack.c.b16 %v1077, %v1069
    %v1758 = vpack.c.b16 %v1078, %v1070
    %v1759 = vpack.c.b16 %v1087, %v1079
    %v1760 = vpack.c.b16 %v1088, %v1080
    %v1761 = vpack.c.b16 %v1089, %v1081
    %v1762 = vpack.c.b16 %v1090, %v1082
    %v1763 = vpack.c.b16 %v1091, %v1083
    %v1764 = vpack.c.b16 %v1092, %v1084
    %v1765 = vpack.c.b16 %v1093, %v1085
    %v1766 = vpack.c.b16 %v1094, %v1086
    %v1767 = vpack.c.b16 %v1103, %v1095
    %v1768 = vpack.c.b16 %v1104, %v1096
    %v1769 = vpack.c.b16 %v1105, %v1097
    %v1770 = vpack.c.b16 %v1106, %v1098
    %v1771 = vpack.c.b16 %v1107, %v1099
    %v1772 = vpack.c.b16 %v1108, %v1100
    %v1773 = vpack.c.b16 %v1109, %v1101
    %v1774 = vpack.c.b16 %v1110, %v1102
    %v1775 = vpack.c.b16 %v1119, %v1111
    %v1776 = vpack.c.b16 %v1120, %v1112
    %v1777 = vpack.c.b16 %v1121, %v1113
    %v1778 = vpack.c.b16 %v1122, %v1114
    %v1779 = vpack.c.b16 %v1123, %v1115
    %v1780 = vpack.c.b16 %v1124, %v1116
    %v1781 = vpack.c.b16 %v1125, %v1117
    %v1782 = vpack.c.b16 %v1126, %v1118
    %v1783 = vpack.c.b16 %v1135, %v1127
    %v1784 = vpack.c.b16 %v1136, %v1128
    %v1785 = vpack.c.b16 %v1137, %v1129
    %v1786 = vpack.c.b16 %v1138, %v1130
    %v1787 = vpack.c.b16 %v1139, %v1131
    %v1788 = vpack.c.b16 %v1140, %v1132
    %v1789 = vpack.c.b16 %v1141, %v1133
    %v1790 = vpack.c.b16 %v1142, %v1134
    %v1791 = vpack.c.b16 %v1151, %v1143
    %v1792 = vpack.c.b16 %v1152, %v1144
    %v1793 = vpack.c.b16 %v1153, %v1145
    %v1794 = vpack.c.b16 %v1154, %v1146
    %v1795 = vpack.c.b16 %v1155, %v1147
    %v1796 = vpack.c.b16 %v1156, %v1148
    %v1797 = vpack.c.b16 %v1157, %v1149
    %v1798 = vpack.c.b16 %v1158, %v1150
    %v1799 = vpack.c.b16 %v1167, %v1159
    %v1800 = vpack.c.b16 %v1168, %v1160
    %v1801 = vpack.c.b16 %v1169, %v1161
    %v1802 = vpack.c.b16 %v1170, %v1162
    %v1803 = vpack.c.b16 %v1171, %v1163
    %v1804 = vpack.c.b16 %v1172, %v1164
    %v1805 = vpack.c.b16 %v1173, %v1165
    %v1806 = vpack.c.b16 %v1174, %v1166
    %v1807 = vpack.c.b16 %v1183, %v1175
    %v1808 = vpack.c.b16 %v1184, %v1176
    %v1809 = vpack.c.b16 %v1185, %v1177
    %v1810 = vpack.c.b16 %v1186, %v1178
    %v1811 = vpack.c.b16 %v1187, %v1179
    %v1812 = vpack.c.b16 %v1188, %v1180
    %v1813 = vpack.c.b16 %v1189, %v1181
    %v1814 = vpack.c.b16 %v1190, %v1182
    %v1815 = vpack.c.b16 %v1199, %v1191
    %v1816 = vpack.c.b16 %v1200, %v1192
    %v1817 = vpack.c.b16 %v1201, %v1193
    %v1818 = vpack.c.b16 %v1202, %v1194
    %v1819 = vpack.c.b16 %v1203, %v1195
    %v1820 = vpack.c.b16 %v1204, %v1196
    %v1821 = vpack.c.b16 %v1205, %v1197
    %v1822 = vpack.c.b16 %v1206, %v1198
    %v1823 = vpack.c.b16 %v1215, %v1207
    %v1824 = vpack.c.b16 %v1216, %v1208
    %v1825 = vpack.c.b16 %v1217, %v1209
    %v1826 = vpack.c.b16 %v1218, %v1210
    %v1827 = vpack.c.b16 %v1219, %v1211
    %v1828 = vpack.c.b16 %v1220, %v1212
    %v1829 = vpack.c.b16 %v1221, %v1213
    %v1830 = vpack.c.b16 %v1222, %v1214
    %v1831 = vpack.c.b16 %v1231, %v1223
    %v1832 = vpack.c.b16 %v1232, %v1224
    %v1833 = vpack.c.b16 %v1233, %v1225
    %v1834 = vpack.c.b16 %v1234, %v1226
    %v1835 = vpack.c.b16 %v1235, %v1227
    %v1836 = vpack.c.b16 %v1236, %v1228
    %v1837 = vpack.c.b16 %v1237, %v1229
    %v1838 = vpack.c.b16 %v1238, %v1230
    %v1839 = vpack.c.b16 %v1247, %v1239
    %v1840 = vpack.c.b16 %v1248, %v1240
    %v1841 = vpack.c.b16 %v1249, %v1241
    %v1842 = vpack.c.b16 %v1250, %v1242
    %v1843 = vpack.c.b16 %v1251, %v1243
    %v1844 = vpack.c.b16 %v1252, %v1244
    %v1845 = vpack.c.b16 %v1253, %v1245
    %v1846 = vpack.c.b16 %v1254, %v1246
    %v1847 = vpack.c.b16 %v1263, %v1255
    %v1848 = vpack.c.b16 %v1264, %v1256
    %v1849 = vpack.c.b16 %v1265, %v1257
    %v1850 = vpack.c.b16 %v1266, %v1258
    %v1851 = vpack.c.b16 %v1267, %v1259
    %v1852 = vpack.c.b16 %v1268, %v1260
    %v1853 = vpack.c.b16 %v1269, %v1261
    %v1854 = vpack.c.b16 %v1270, %v1262
    %v1855 = vpack.c.b16 %v1279, %v1271
    %v1856 = vpack.c.b16 %v1280, %v1272
    %v1857 = vpack.c.b16 %v1281, %v1273
    %v1858 = vpack.c.b16 %v1282, %v1274
    %v1859 = vpack.c.b16 %v1283, %v1275
    %v1860 = vpack.c.b16 %v1284, %v1276
    %v1861 = vpack.c.b16 %v1285, %v1277
    %v1862 = vpack.c.b16 %v1286, %v1278
    %v1863 = vpack.c.b16 %v1295, %v1287
    %v1864 = vpack.c.b16 %v1296, %v1288
    %v1865 = vpack.c.b16 %v1297, %v1289
    %v1866 = vpack.c.b16 %v1298, %v1290
    %v1867 = vpack.c.b16 %v1299, %v1291
    %v1868 = vpack.c.b16 %v1300, %v1292
    %v1869 = vpack.c.b16 %v1301, %v1293
    %v1870 = vpack.c.b16 %v1302, %v1294
    %v1871 = vpack.c.b16 %v1311, %v1303
    %v1872 = vpack.c.b16 %v1312, %v1304
    %v1873 = vpack.c.b16 %v1313, %v1305
    %v1874 = vpack.c.b16 %v1314, %v1306
    %v1875 = vpack.c.b16 %v1315, %v1307
    %v1876 = vpack.c.b16 %v1316, %v1308
    %v1877 = vpack.c.b16 %v1317, %v1309
    %v1878 = vpack.c.b16 %v1318, %v1310
    %v1879 = vpack.c.b16 %v1327, %v1319
    %v1880 = vpack.c.b16 %v1328, %v1320
    %v1881 = vpack.c.b16 %v1329, %v1321
    %v1882 = vpack.c.b16 %v1330, %v1322
    %v1883 = vpack.c.b16 %v1331, %v1323
    %v1884 = vpack.c.b16 %v1332, %v1324
    %v1885 = vpack.c.b16 %v1333, %v1325
    %v1886 = vpack.c.b16 %v1334, %v1326
    %v1887 = vpack.c.b16 %v1343, %v1335
    %v1888 = vpack.c.b16 %v1344, %v1336
    %v1889 = vpack.c.b16 %v1345, %v1337
    %v1890 = vpack.c.b16 %v1346, %v1338
    %v1891 = vpack.c.b16 %v1347, %v1339
    %v1892 = vpack.c.b16 %v1348, %v1340
    %v1893 = vpack.c.b16 %v1349, %v1341
    %v1894 = vpack.c.b16 %v1350, %v1342
    %v1895 = vpack.c.b16 %v1359, %v1351
    %v1896 = vpack.c.b16 %v1360, %v1352
    %v1897 = vpack.c.b16 %v1361, %v1353
    %v1898 = vpack.c.b16 %v1362, %v1354
    %v1899 = vpack.c.b16 %v1363, %v1355
    %v1900 = vpack.c.b16 %v1364, %v1356
    %v1901 = vpack.c.b16 %v1365, %v1357
    %v1902 = vpack.c.b16 %v1366, %v1358
    %v1903 = vpack.c.b16 %v1375, %v1367
    %v1904 = vpack.c.b16 %v1376, %v1368
    %v1905 = vpack.c.b16 %v1377, %v1369
    %v1906 = vpack.c.b16 %v1378, %v1370
    %v1907 = vpack.c.b16 %v1379, %v1371
    %v1908 = vpack.c.b16 %v1380, %v1372
    %v1909 = vpack.c.b16 %v1381, %v1373
    %v1910 = vpack.c.b16 %v1382, %v1374
    %v1911 = vpack.c.b16 %v1391, %v1383
    %v1912 = vpack.c.b16 %v1392, %v1384
    %v1913 = vpack.c.b16 %v1393, %v1385
    %v1914 = vpack.c.b16 %v1394, %v1386
    %v1915 = vpack.c.b16 %v1395, %v1387
    %v1916 = vpack.c.b16 %v1396, %v1388
    %v1917 = vpack.c.b16 %v1397, %v1389
    %v1918 = vpack.c.b16 %v1398, %v1390
    %v1919 = vpack.c.b16 %v1407, %v1399
    %v1920 = vpack.c.b16 %v1408, %v1400
    %v1921 = vpack.c.b16 %v1409, %v1401
    %v1922 = vpack.c.b16 %v1410, %v1402
    %v1923 = vpack.c.b16 %v1411, %v1403
    %v1924 = vpack.c.b16 %v1412, %v1404
    %v1925 = vpack.c.b16 %v1413, %v1405
    %v1926 = vpack.c.b16 %v1414, %v1406
    %v1927 = vpack.c.b16 %v1423, %v1415
    %v1928 = vpack.c.b16 %v1424, %v1416
    %v1929 = vpack.c.b16 %v1425, %v1417
    %v1930 = vpack.c.b16 %v1426, %v1418
    %v1931 = vpack.c.b16 %v1427, %v1419
    %v1932 = vpack.c.b16 %v1428, %v1420
    %v1933 = vpack.c.b16 %v1429, %v1421
    %v1934 = vpack.c.b16 %v1430, %v1422
    %v1935 = vpack.c.b16 %v1439, %v1431
    %v1936 = vpack.c.b16 %v1440, %v1432
    %v1937 = vpack.c.b16 %v1441, %v1433
    %v1938 = vpack.c.b16 %v1442, %v1434
    %v1939 = vpack.c.b16 %v1443, %v1435
    %v1940 = vpack.c.b16 %v1444, %v1436
    %v1941 = vpack.c.b16 %v1445, %v1437
    %v1942 = vpack.c.b16 %v1446, %v1438
    %v1943 = vpack.c.b16 %v1455, %v1447
    %v1944 = vpack.c.b16 %v1456, %v1448
    %v1945 = vpack.c.b16 %v1457, %v1449
    %v1946 = vpack.c.b16 %v1458, %v1450
    %v1947 = vpack.c.b16 %v1459, %v1451
    %v1948 = vpack.c.b16 %v1460, %v1452
    %v1949 = vpack.c.b16 %v1461, %v1453
    %v1950 = vpack.c.b16 %v1462, %v1454
    %v1951 = vpack.c.b16 %v1471, %v1463
    %v1952 = vpack.c.b16 %v1472, %v1464
    %v1953 = vpack.c.b16 %v1473, %v1465
    %v1954 = vpack.c.b16 %v1474, %v1466
    %v1955 = vpack.c.b16 %v1475, %v1467
    %v1956 = vpack.c.b16 %v1476, %v1468
    %v1957 = vpack.c.b16 %v1477, %v1469
    %v1958 = vpack.c.b16 %v1478, %v1470
    %v1959 = vpack.c.b16 %v1487, %v1479
    %v1960 = vpack.c.b16 %v1488, %v1480
    %v1961 = vpack.c.b16 %v1489, %v1481
    %v1962 = vpack.c.b16 %v1490, %v1482
    %v1963 = vpack.c.b16 %v1491, %v1483
    %v1964 = vpack.c.b16 %v1492, %v1484
    %v1965 = vpack.c.b16 %v1493, %v1485
    %v1966 = vpack.c.b16 %v1494, %v1486
    %v1967 = vpack.c.b16 %v1503, %v1495
    %v1968 = vpack.c.b16 %v1504, %v1496
    %v1969 = vpack.c.b16 %v1505, %v1497
    %v1970 = vpack.c.b16 %v1506, %v1498
    %v1971 = vpack.c.b16 %v1507, %v1499
    %v1972 = vpack.c.b16 %v1508, %v1500
    %v1973 = vpack.c.b16 %v1509, %v1501
    %v1974 = vpack.c.b16 %v1510, %v1502
    %v1975 = vpack.c.b16 %v1519, %v1511
    %v1976 = vpack.c.b16 %v1520, %v1512
    %v1977 = vpack.c.b16 %v1521, %v1513
    %v1978 = vpack.c.b16 %v1522, %v1514
    %v1979 = vpack.c.b16 %v1523, %v1515
    %v1980 = vpack.c.b16 %v1524, %v1516
    %v1981 = vpack.c.b16 %v1525, %v1517
    %v1982 = vpack.c.b16 %v1526, %v1518
    %v1983 = vpack.c.b16 %v1535, %v1527
    %v1984 = vpack.c.b16 %v1536, %v1528
    %v1985 = vpack.c.b16 %v1537, %v1529
    %v1986 = vpack.c.b16 %v1538, %v1530
    %v1987 = vpack.c.b16 %v1539, %v1531
    %v1988 = vpack.c.b16 %v1540, %v1532
    %v1989 = vpack.c.b16 %v1541, %v1533
    %v1990 = vpack.c.b16 %v1542, %v1534
    %v1991 = vpack.c.b16 %v1551, %v1543
    %v1992 = vpack.c.b16 %v1552, %v1544
    %v1993 = vpack.c.b16 %v1553, %v1545
    %v1994 = vpack.c.b16 %v1554, %v1546
    %v1995 = vpack.c.b16 %v1555, %v1547
    %v1996 = vpack.c.b16 %v1556, %v1548
    %v1997 = vpack.c.b16 %v1557, %v1549
    %v1998 = vpack.c.b16 %v1558, %v1550
    %v1999 = vpack.c.b16 %v1567, %v1559
    %v2000 = vpack.c.b16 %v1568, %v1560
    %v2001 = vpack.c.b16 %v1569, %v1561
    %v2002 = vpack.c.b16 %v1570, %v1562
    %v2003 = vpack.c.b16 %v1571, %v1563
    %v2004 = vpack.c.b16 %v1572, %v1564
    %v2005 = vpack.c.b16 %v1573, %v1565
    %v2006 = vpack.c.b16 %v1574, %v1566
    %v2007 = vpack.c.b16 %v1583, %v1575
    %v2008 = vpack.c.b16 %v1584, %v1576
    %v2009 = vpack.c.b16 %v1585, %v1577
    %v2010 = vpack.c.b16 %v1586, %v1578
    %v2011 = vpack.c.b16 %v1587, %v1579
    %v2012 = vpack.c.b16 %v1588, %v1580
    %v2013 = vpack.c.b16 %v1589, %v1581
    %v2014 = vpack.c.b16 %v1590, %v1582
    %v2015 = vpack.c.b16 %v1599, %v1591
    %v2016 = vpack.c.b16 %v1600, %v1592
    %v2017 = vpack.c.b16 %v1601, %v1593
    %v2018 = vpack.c.b16 %v1602, %v1594
    %v2019 = vpack.c.b16 %v1603, %v1595
    %v2020 = vpack.c.b16 %v1604, %v1596
    %v2021 = vpack.c.b16 %v1605, %v1597
    %v2022 = vpack.c.b16 %v1606, %v1598
    %v2023 = vpack.c.b16 %v1615, %v1607
    %v2024 = vpack.c.b16 %v1616, %v1608
    %v2025 = vpack.c.b16 %v1617, %v1609
    %v2026 = vpack.c.b16 %v1618, %v1610
    %v2027 = vpack.c.b16 %v1619, %v1611
    %v2028 = vpack.c.b16 %v1620, %v1612
    %v2029 = vpack.c.b16 %v1621, %v1613
    %v2030 = vpack.c.b16 %v1622, %v1614
    %v2031 = vpack.c.b16 %v1631, %v1623
    %v2032 = vpack.c.b16 %v1632, %v1624
    %v2033 = vpack.c.b16 %v1633, %v1625
    %v2034 = vpack.c.b16 %v1634, %v1626
    %v2035 = vpack.c.b16 %v1635, %v1627
    %v2036 = vpack.c.b16 %v1636, %v1628
    %v2037 = vpack.c.b16 %v1637, %v1629
    %v2038 = vpack.c.b16 %v1638, %v1630
    %v2039 = vpack.c.b16 %v1647, %v1639
    %v2040 = vpack.c.b16 %v1648, %v1640
    %v2041 = vpack.c.b16 %v1649, %v1641
    %v2042 = vpack.c.b16 %v1650, %v1642
    %v2043 = vpack.c.b16 %v1651, %v1643
    %v2044 = vpack.c.b16 %v1652, %v1644
    %v2045 = vpack.c.b16 %v1653, %v1645
    %v2046 = vpack.c.b16 %v1654, %v1646
    %vm2439 = vcmask 130048
    %v2441 = vsel %vm2439, %v472, 0
    %2443 = vmatprep.subr.bf16.mxu0 %v1712
    %2444 = vmatpush1.bf16.msra.mxu0 %v1711
    %2445 = vmatprep.subr.bf16.mxu0 %v1704
    %2446 = vmatpush1.bf16.msra.mxu0 %v1703
    %2447 = vmatprep.subr.bf16.mxu0 %v1696
    %2448 = vmatpush1.bf16.msra.mxu0 %v1695
    %2449 = vmatprep.subr.bf16.mxu0 %v1688
    %2450 = vmatpush1.bf16.msra.mxu0 %v1687
    %2451 = vmatprep.subr.bf16.mxu0 %v1680
    %2452 = vmatpush1.bf16.msra.mxu0 %v1679
    %2453 = vmatprep.subr.bf16.mxu0 %v1672
    %2454 = vmatpush1.bf16.msra.mxu0 %v1671
    %2455 = vmatprep.subr.bf16.mxu0 %v1664
    %2456 = vmatpush1.bf16.msra.mxu0 %v1663
    %2457 = vmatprep.subr.bf16.mxu0 %v1656
    %2458 = vmatpush1.bf16.msra.mxu0 %v1655
    %2459 = vmatprep.subr.bf16.mxu0 %v1776
    %2460 = vmatpush2.bf16.msra.mxu0 %v1775
    %2461 = vmatprep.subr.bf16.mxu0 %v1768
    %2462 = vmatpush2.bf16.msra.mxu0 %v1767
    %2463 = vmatprep.subr.bf16.mxu0 %v1760
    %2464 = vmatpush2.bf16.msra.mxu0 %v1759
    %2465 = vmatprep.subr.bf16.mxu0 %v1752
    %2466 = vmatpush2.bf16.msra.mxu0 %v1751
    %2467 = vmatprep.subr.bf16.mxu0 %v1744
    %2468 = vmatpush2.bf16.msra.mxu0 %v1743
    %2469 = vmatprep.subr.bf16.mxu0 %v1736
    %2470 = vmatpush2.bf16.msra.mxu0 %v1735
    %2471 = vmatprep.subr.bf16.mxu0 %v1728
    %2472 = vmatpush2.bf16.msra.mxu0 %v1727
    %2473 = vmatprep.subr.bf16.mxu0 %v1720
    %2474 = vmatpush2.bf16.msra.mxu0 %v1719
    %2475 = vmatprep.mubr.bf16.mxu0 %v467
    %2476 = vmatmul.mubr.bf16.gmra.mxu0 %v466
    %v2477 = vpop.f32.mrf.mxu0
    %v2478 = vadd.f32 0.0, %v2477
    %v2479 = vpop.f32.mrf.mxu0
    %v2480 = vadd.f32 0.0, %v2479
    %v2481 = vpop.f32.mrf.mxu0
    %v2482 = vpop.f32.mrf.mxu0
    %2483 = vdwg.mxu0
    %2484 = vmatprep.subr.bf16.mxu0 %v1840
    %2485 = vmatpush1.bf16.msra.mxu0 %v1839
    %2486 = vmatprep.subr.bf16.mxu0 %v1832
    %2487 = vmatpush1.bf16.msra.mxu0 %v1831
    %2488 = vmatprep.subr.bf16.mxu0 %v1824
    %2489 = vmatpush1.bf16.msra.mxu0 %v1823
    %2490 = vmatprep.subr.bf16.mxu0 %v1816
    %2491 = vmatpush1.bf16.msra.mxu0 %v1815
    %2492 = vmatprep.subr.bf16.mxu0 %v1808
    %2493 = vmatpush1.bf16.msra.mxu0 %v1807
    %2494 = vmatprep.subr.bf16.mxu0 %v1800
    %2495 = vmatpush1.bf16.msra.mxu0 %v1799
    %2496 = vmatprep.subr.bf16.mxu0 %v1792
    %2497 = vmatpush1.bf16.msra.mxu0 %v1791
    %2498 = vmatprep.subr.bf16.mxu0 %v1784
    %2499 = vmatpush1.bf16.msra.mxu0 %v1783
    %2500 = vmatprep.subr.bf16.mxu0 %v1904
    %2501 = vmatpush2.bf16.msra.mxu0 %v1903
    %2502 = vmatprep.subr.bf16.mxu0 %v1896
    %2503 = vmatpush2.bf16.msra.mxu0 %v1895
    %2504 = vmatprep.subr.bf16.mxu0 %v1888
    %2505 = vmatpush2.bf16.msra.mxu0 %v1887
    %2506 = vmatprep.subr.bf16.mxu0 %v1880
    %2507 = vmatpush2.bf16.msra.mxu0 %v1879
    %2508 = vmatprep.subr.bf16.mxu0 %v1872
    %2509 = vmatpush2.bf16.msra.mxu0 %v1871
    %2510 = vmatprep.subr.bf16.mxu0 %v1864
    %2511 = vmatpush2.bf16.msra.mxu0 %v1863
    %2512 = vmatprep.subr.bf16.mxu0 %v1856
    %2513 = vmatpush2.bf16.msra.mxu0 %v1855
    %2514 = vmatprep.subr.bf16.mxu0 %v1848
    %2515 = vmatpush2.bf16.msra.mxu0 %v1847
    %2516 = vmatprep.mubr.bf16.mxu0 %v469
    %2517 = vmatmul.mubr.bf16.gmra.mxu0 %v468
    %v2518 = vpop.f32.mrf.mxu0
    %v2519 = vadd.f32 %v2478, %v2518
    %v2520 = vpop.f32.mrf.mxu0
    %v2521 = vadd.f32 %v2480, %v2520
    %v2522 = vpop.f32.mrf.mxu0
    %v2523 = vpop.f32.mrf.mxu0
    %2524 = vdwg.mxu0
    %2525 = vmatprep.subr.bf16.mxu0 %v1968
    %2526 = vmatpush1.bf16.msra.mxu0 %v1967
    %2527 = vmatprep.subr.bf16.mxu0 %v1960
    %2528 = vmatpush1.bf16.msra.mxu0 %v1959
    %2529 = vmatprep.subr.bf16.mxu0 %v1952
    %2530 = vmatpush1.bf16.msra.mxu0 %v1951
    %2531 = vmatprep.subr.bf16.mxu0 %v1944
    %2532 = vmatpush1.bf16.msra.mxu0 %v1943
    %2533 = vmatprep.subr.bf16.mxu0 %v1936
    %2534 = vmatpush1.bf16.msra.mxu0 %v1935
    %2535 = vmatprep.subr.bf16.mxu0 %v1928
    %2536 = vmatpush1.bf16.msra.mxu0 %v1927
    %2537 = vmatprep.subr.bf16.mxu0 %v1920
    %2538 = vmatpush1.bf16.msra.mxu0 %v1919
    %2539 = vmatprep.subr.bf16.mxu0 %v1912
    %2540 = vmatpush1.bf16.msra.mxu0 %v1911
    %2541 = vmatprep.subr.bf16.mxu0 %v2032
    %2542 = vmatpush2.bf16.msra.mxu0 %v2031
    %2543 = vmatprep.subr.bf16.mxu0 %v2024
    %2544 = vmatpush2.bf16.msra.mxu0 %v2023
    %2545 = vmatprep.subr.bf16.mxu0 %v2016
    %2546 = vmatpush2.bf16.msra.mxu0 %v2015
    %2547 = vmatprep.subr.bf16.mxu0 %v2008
    %2548 = vmatpush2.bf16.msra.mxu0 %v2007
    %2549 = vmatprep.subr.bf16.mxu0 %v2000
    %2550 = vmatpush2.bf16.msra.mxu0 %v1999
    %2551 = vmatprep.subr.bf16.mxu0 %v1992
    %2552 = vmatpush2.bf16.msra.mxu0 %v1991
    %2553 = vmatprep.subr.bf16.mxu0 %v1984
    %2554 = vmatpush2.bf16.msra.mxu0 %v1983
    %2555 = vmatprep.subr.bf16.mxu0 %v1976
    %2556 = vmatpush2.bf16.msra.mxu0 %v1975
    %2557 = vmatprep.mubr.bf16.mxu0 %v471
    %2558 = vmatmul.mubr.bf16.gmra.mxu0 %v470
    %v2559 = vpop.f32.mrf.mxu0
    %v2560 = vadd.f32 %v2519, %v2559
    %v2561 = vpop.f32.mrf.mxu0
    %v2562 = vadd.f32 %v2521, %v2561
    %v2563 = vpop.f32.mrf.mxu0
    %v2564 = vpop.f32.mrf.mxu0
    %2565 = vdwg.mxu0
    %2566 = vmatprep.subr.bf16.mxu0 0
    %2567 = vmatpush1.bf16.msra.mxu0 0
    %2568 = vmatprep.subr.bf16.mxu0 0
    %2569 = vmatpush1.bf16.msra.mxu0 0
    %2570 = vmatprep.subr.bf16.mxu0 0
    %2571 = vmatpush1.bf16.msra.mxu0 0
    %2572 = vmatprep.subr.bf16.mxu0 0
    %2573 = vmatpush1.bf16.msra.mxu0 0
    %2574 = vmatprep.subr.bf16.mxu0 0
    %2575 = vmatpush1.bf16.msra.mxu0 0
    %2576 = vmatprep.subr.bf16.mxu0 0
    %2577 = vmatpush1.bf16.msra.mxu0 0
    %2578 = vmatprep.subr.bf16.mxu0 0
    %2579 = vmatpush1.bf16.msra.mxu0 0
    %2580 = vmatprep.subr.bf16.mxu0 %v2040
    %2581 = vmatpush1.bf16.msra.mxu0 %v2039
    %2582 = vmatprep.subr.bf16.mxu0 0
    %2583 = vmatpush2.bf16.msra.mxu0 0
    %2584 = vmatprep.subr.bf16.mxu0 0
    %2585 = vmatpush2.bf16.msra.mxu0 0
    %2586 = vmatprep.subr.bf16.mxu0 0
    %2587 = vmatpush2.bf16.msra.mxu0 0
    %2588 = vmatprep.subr.bf16.mxu0 0
    %2589 = vmatpush2.bf16.msra.mxu0 0
    %2590 = vmatprep.subr.bf16.mxu0 0
    %2591 = vmatpush2.bf16.msra.mxu0 0
    %2592 = vmatprep.subr.bf16.mxu0 0
    %2593 = vmatpush2.bf16.msra.mxu0 0
    %2594 = vmatprep.subr.bf16.mxu0 0
    %2595 = vmatpush2.bf16.msra.mxu0 0
    %2596 = vmatprep.subr.bf16.mxu0 0
    %2597 = vmatpush2.bf16.msra.mxu0 0
    %2598 = vmatprep.mubr.bf16.mxu0 0
    %2599 = vmatmul.mubr.bf16.gmra.mxu0 %v2441
    %v2600 = vpop.f32.mrf.mxu0
    %v2601 = vadd.f32 %v2560, %v2600
    %v2602 = vpop.f32.mrf.mxu0
    %v2603 = vadd.f32 %v2562, %v2602
    %v2604 = vpop.f32.mrf.mxu0
    %v2605 = vpop.f32.mrf.mxu0
    %2606 = vdwg.mxu0
    %2607 = vmatprep.subr.bf16.mxu0 %v1714
    %2608 = vmatpush1.bf16.msra.mxu0 %v1713
    %2609 = vmatprep.subr.bf16.mxu0 %v1706
    %2610 = vmatpush1.bf16.msra.mxu0 %v1705
    %2611 = vmatprep.subr.bf16.mxu0 %v1698
    %2612 = vmatpush1.bf16.msra.mxu0 %v1697
    %2613 = vmatprep.subr.bf16.mxu0 %v1690
    %2614 = vmatpush1.bf16.msra.mxu0 %v1689
    %2615 = vmatprep.subr.bf16.mxu0 %v1682
    %2616 = vmatpush1.bf16.msra.mxu0 %v1681
    %2617 = vmatprep.subr.bf16.mxu0 %v1674
    %2618 = vmatpush1.bf16.msra.mxu0 %v1673
    %2619 = vmatprep.subr.bf16.mxu0 %v1666
    %2620 = vmatpush1.bf16.msra.mxu0 %v1665
    %2621 = vmatprep.subr.bf16.mxu0 %v1658
    %2622 = vmatpush1.bf16.msra.mxu0 %v1657
    %2623 = vmatprep.subr.bf16.mxu0 %v1778
    %2624 = vmatpush2.bf16.msra.mxu0 %v1777
    %2625 = vmatprep.subr.bf16.mxu0 %v1770
    %2626 = vmatpush2.bf16.msra.mxu0 %v1769
    %2627 = vmatprep.subr.bf16.mxu0 %v1762
    %2628 = vmatpush2.bf16.msra.mxu0 %v1761
    %2629 = vmatprep.subr.bf16.mxu0 %v1754
    %2630 = vmatpush2.bf16.msra.mxu0 %v1753
    %2631 = vmatprep.subr.bf16.mxu0 %v1746
    %2632 = vmatpush2.bf16.msra.mxu0 %v1745
    %2633 = vmatprep.subr.bf16.mxu0 %v1738
    %2634 = vmatpush2.bf16.msra.mxu0 %v1737
    %2635 = vmatprep.subr.bf16.mxu0 %v1730
    %2636 = vmatpush2.bf16.msra.mxu0 %v1729
    %2637 = vmatprep.subr.bf16.mxu0 %v1722
    %2638 = vmatpush2.bf16.msra.mxu0 %v1721
    %2639 = vmatprep.mubr.bf16.mxu0 %v467
    %2640 = vmatmul.mubr.bf16.gmra.mxu0 %v466
    %v2641 = vpop.f32.mrf.mxu0
    %v2642 = vadd.f32 0.0, %v2641
    %v2643 = vpop.f32.mrf.mxu0
    %v2644 = vadd.f32 0.0, %v2643
    %v2645 = vpop.f32.mrf.mxu0
    %v2646 = vpop.f32.mrf.mxu0
    %2647 = vdwg.mxu0
    %2648 = vmatprep.subr.bf16.mxu0 %v1842
    %2649 = vmatpush1.bf16.msra.mxu0 %v1841
    %2650 = vmatprep.subr.bf16.mxu0 %v1834
    %2651 = vmatpush1.bf16.msra.mxu0 %v1833
    %2652 = vmatprep.subr.bf16.mxu0 %v1826
    %2653 = vmatpush1.bf16.msra.mxu0 %v1825
    %2654 = vmatprep.subr.bf16.mxu0 %v1818
    %2655 = vmatpush1.bf16.msra.mxu0 %v1817
    %2656 = vmatprep.subr.bf16.mxu0 %v1810
    %2657 = vmatpush1.bf16.msra.mxu0 %v1809
    %2658 = vmatprep.subr.bf16.mxu0 %v1802
    %2659 = vmatpush1.bf16.msra.mxu0 %v1801
    %2660 = vmatprep.subr.bf16.mxu0 %v1794
    %2661 = vmatpush1.bf16.msra.mxu0 %v1793
    %2662 = vmatprep.subr.bf16.mxu0 %v1786
    %2663 = vmatpush1.bf16.msra.mxu0 %v1785
    %2664 = vmatprep.subr.bf16.mxu0 %v1906
    %2665 = vmatpush2.bf16.msra.mxu0 %v1905
    %2666 = vmatprep.subr.bf16.mxu0 %v1898
    %2667 = vmatpush2.bf16.msra.mxu0 %v1897
    %2668 = vmatprep.subr.bf16.mxu0 %v1890
    %2669 = vmatpush2.bf16.msra.mxu0 %v1889
    %2670 = vmatprep.subr.bf16.mxu0 %v1882
    %2671 = vmatpush2.bf16.msra.mxu0 %v1881
    %2672 = vmatprep.subr.bf16.mxu0 %v1874
    %2673 = vmatpush2.bf16.msra.mxu0 %v1873
    %2674 = vmatprep.subr.bf16.mxu0 %v1866
    %2675 = vmatpush2.bf16.msra.mxu0 %v1865
    %2676 = vmatprep.subr.bf16.mxu0 %v1858
    %2677 = vmatpush2.bf16.msra.mxu0 %v1857
    %2678 = vmatprep.subr.bf16.mxu0 %v1850
    %2679 = vmatpush2.bf16.msra.mxu0 %v1849
    %2680 = vmatprep.mubr.bf16.mxu0 %v469
    %2681 = vmatmul.mubr.bf16.gmra.mxu0 %v468
    %v2682 = vpop.f32.mrf.mxu0
    %v2683 = vadd.f32 %v2642, %v2682
    %v2684 = vpop.f32.mrf.mxu0
    %v2685 = vadd.f32 %v2644, %v2684
    %v2686 = vpop.f32.mrf.mxu0
    %v2687 = vpop.f32.mrf.mxu0
    %2688 = vdwg.mxu0
    %2689 = vmatprep.subr.bf16.mxu0 %v1970
    %2690 = vmatpush1.bf16.msra.mxu0 %v1969
    %2691 = vmatprep.subr.bf16.mxu0 %v1962
    %2692 = vmatpush1.bf16.msra.mxu0 %v1961
    %2693 = vmatprep.subr.bf16.mxu0 %v1954
    %2694 = vmatpush1.bf16.msra.mxu0 %v1953
    %2695 = vmatprep.subr.bf16.mxu0 %v1946
    %2696 = vmatpush1.bf16.msra.mxu0 %v1945
    %2697 = vmatprep.subr.bf16.mxu0 %v1938
    %2698 = vmatpush1.bf16.msra.mxu0 %v1937
    %2699 = vmatprep.subr.bf16.mxu0 %v1930
    %2700 = vmatpush1.bf16.msra.mxu0 %v1929
    %2701 = vmatprep.subr.bf16.mxu0 %v1922
    %2702 = vmatpush1.bf16.msra.mxu0 %v1921
    %2703 = vmatprep.subr.bf16.mxu0 %v1914
    %2704 = vmatpush1.bf16.msra.mxu0 %v1913
    %2705 = vmatprep.subr.bf16.mxu0 %v2034
    %2706 = vmatpush2.bf16.msra.mxu0 %v2033
    %2707 = vmatprep.subr.bf16.mxu0 %v2026
    %2708 = vmatpush2.bf16.msra.mxu0 %v2025
    %2709 = vmatprep.subr.bf16.mxu0 %v2018
    %2710 = vmatpush2.bf16.msra.mxu0 %v2017
    %2711 = vmatprep.subr.bf16.mxu0 %v2010
    %2712 = vmatpush2.bf16.msra.mxu0 %v2009
    %2713 = vmatprep.subr.bf16.mxu0 %v2002
    %2714 = vmatpush2.bf16.msra.mxu0 %v2001
    %2715 = vmatprep.subr.bf16.mxu0 %v1994
    %2716 = vmatpush2.bf16.msra.mxu0 %v1993
    %2717 = vmatprep.subr.bf16.mxu0 %v1986
    %2718 = vmatpush2.bf16.msra.mxu0 %v1985
    %2719 = vmatprep.subr.bf16.mxu0 %v1978
    %2720 = vmatpush2.bf16.msra.mxu0 %v1977
    %2721 = vmatprep.mubr.bf16.mxu0 %v471
    %2722 = vmatmul.mubr.bf16.gmra.mxu0 %v470
    %v2723 = vpop.f32.mrf.mxu0
    %v2724 = vadd.f32 %v2683, %v2723
    %v2725 = vpop.f32.mrf.mxu0
    %v2726 = vadd.f32 %v2685, %v2725
    %v2727 = vpop.f32.mrf.mxu0
    %v2728 = vpop.f32.mrf.mxu0
    %2729 = vdwg.mxu0
    %2730 = vmatprep.subr.bf16.mxu0 0
    %2731 = vmatpush1.bf16.msra.mxu0 0
    %2732 = vmatprep.subr.bf16.mxu0 0
    %2733 = vmatpush1.bf16.msra.mxu0 0
    %2734 = vmatprep.subr.bf16.mxu0 0
    %2735 = vmatpush1.bf16.msra.mxu0 0
    %2736 = vmatprep.subr.bf16.mxu0 0
    %2737 = vmatpush1.bf16.msra.mxu0 0
    %2738 = vmatprep.subr.bf16.mxu0 0
    %2739 = vmatpush1.bf16.msra.mxu0 0
    %2740 = vmatprep.subr.bf16.mxu0 0
    %2741 = vmatpush1.bf16.msra.mxu0 0
    %2742 = vmatprep.subr.bf16.mxu0 0
    %2743 = vmatpush1.bf16.msra.mxu0 0
    %2744 = vmatprep.subr.bf16.mxu0 %v2042
    %2745 = vmatpush1.bf16.msra.mxu0 %v2041
    %2746 = vmatprep.subr.bf16.mxu0 0
    %2747 = vmatpush2.bf16.msra.mxu0 0
    %2748 = vmatprep.subr.bf16.mxu0 0
    %2749 = vmatpush2.bf16.msra.mxu0 0
    %2750 = vmatprep.subr.bf16.mxu0 0
    %2751 = vmatpush2.bf16.msra.mxu0 0
    %2752 = vmatprep.subr.bf16.mxu0 0
    %2753 = vmatpush2.bf16.msra.mxu0 0
    %2754 = vmatprep.subr.bf16.mxu0 0
    %2755 = vmatpush2.bf16.msra.mxu0 0
    %2756 = vmatprep.subr.bf16.mxu0 0
    %2757 = vmatpush2.bf16.msra.mxu0 0
    %2758 = vmatprep.subr.bf16.mxu0 0
    %2759 = vmatpush2.bf16.msra.mxu0 0
    %2760 = vmatprep.subr.bf16.mxu0 0
    %2761 = vmatpush2.bf16.msra.mxu0 0
    %2762 = vmatprep.mubr.bf16.mxu0 0
    %2763 = vmatmul.mubr.bf16.gmra.mxu0 %v2441
    %v2764 = vpop.f32.mrf.mxu0
    %v2765 = vadd.f32 %v2724, %v2764
    %v2766 = vpop.f32.mrf.mxu0
    %v2767 = vadd.f32 %v2726, %v2766
    %v2768 = vpop.f32.mrf.mxu0
    %v2769 = vpop.f32.mrf.mxu0
    %2770 = vdwg.mxu0
    %2771 = vmatprep.subr.bf16.mxu0 %v1716
    %2772 = vmatpush1.bf16.msra.mxu0 %v1715
    %2773 = vmatprep.subr.bf16.mxu0 %v1708
    %2774 = vmatpush1.bf16.msra.mxu0 %v1707
    %2775 = vmatprep.subr.bf16.mxu0 %v1700
    %2776 = vmatpush1.bf16.msra.mxu0 %v1699
    %2777 = vmatprep.subr.bf16.mxu0 %v1692
    %2778 = vmatpush1.bf16.msra.mxu0 %v1691
    %2779 = vmatprep.subr.bf16.mxu0 %v1684
    %2780 = vmatpush1.bf16.msra.mxu0 %v1683
    %2781 = vmatprep.subr.bf16.mxu0 %v1676
    %2782 = vmatpush1.bf16.msra.mxu0 %v1675
    %2783 = vmatprep.subr.bf16.mxu0 %v1668
    %2784 = vmatpush1.bf16.msra.mxu0 %v1667
    %2785 = vmatprep.subr.bf16.mxu0 %v1660
    %2786 = vmatpush1.bf16.msra.mxu0 %v1659
    %2787 = vmatprep.subr.bf16.mxu0 %v1780
    %2788 = vmatpush2.bf16.msra.mxu0 %v1779
    %2789 = vmatprep.subr.bf16.mxu0 %v1772
    %2790 = vmatpush2.bf16.msra.mxu0 %v1771
    %2791 = vmatprep.subr.bf16.mxu0 %v1764
    %2792 = vmatpush2.bf16.msra.mxu0 %v1763
    %2793 = vmatprep.subr.bf16.mxu0 %v1756
    %2794 = vmatpush2.bf16.msra.mxu0 %v1755
    %2795 = vmatprep.subr.bf16.mxu0 %v1748
    %2796 = vmatpush2.bf16.msra.mxu0 %v1747
    %2797 = vmatprep.subr.bf16.mxu0 %v1740
    %2798 = vmatpush2.bf16.msra.mxu0 %v1739
    %2799 = vmatprep.subr.bf16.mxu0 %v1732
    %2800 = vmatpush2.bf16.msra.mxu0 %v1731
    %2801 = vmatprep.subr.bf16.mxu0 %v1724
    %2802 = vmatpush2.bf16.msra.mxu0 %v1723
    %2803 = vmatprep.mubr.bf16.mxu0 %v467
    %2804 = vmatmul.mubr.bf16.gmra.mxu0 %v466
    %v2805 = vpop.f32.mrf.mxu0
    %v2806 = vadd.f32 0.0, %v2805
    %v2807 = vpop.f32.mrf.mxu0
    %v2808 = vadd.f32 0.0, %v2807
    %v2809 = vpop.f32.mrf.mxu0
    %v2810 = vpop.f32.mrf.mxu0
    %2811 = vdwg.mxu0
    %2812 = vmatprep.subr.bf16.mxu0 %v1844
    %2813 = vmatpush1.bf16.msra.mxu0 %v1843
    %2814 = vmatprep.subr.bf16.mxu0 %v1836
    %2815 = vmatpush1.bf16.msra.mxu0 %v1835
    %2816 = vmatprep.subr.bf16.mxu0 %v1828
    %2817 = vmatpush1.bf16.msra.mxu0 %v1827
    %2818 = vmatprep.subr.bf16.mxu0 %v1820
    %2819 = vmatpush1.bf16.msra.mxu0 %v1819
    %2820 = vmatprep.subr.bf16.mxu0 %v1812
    %2821 = vmatpush1.bf16.msra.mxu0 %v1811
    %2822 = vmatprep.subr.bf16.mxu0 %v1804
    %2823 = vmatpush1.bf16.msra.mxu0 %v1803
    %2824 = vmatprep.subr.bf16.mxu0 %v1796
    %2825 = vmatpush1.bf16.msra.mxu0 %v1795
    %2826 = vmatprep.subr.bf16.mxu0 %v1788
    %2827 = vmatpush1.bf16.msra.mxu0 %v1787
    %2828 = vmatprep.subr.bf16.mxu0 %v1908
    %2829 = vmatpush2.bf16.msra.mxu0 %v1907
    %2830 = vmatprep.subr.bf16.mxu0 %v1900
    %2831 = vmatpush2.bf16.msra.mxu0 %v1899
    %2832 = vmatprep.subr.bf16.mxu0 %v1892
    %2833 = vmatpush2.bf16.msra.mxu0 %v1891
    %2834 = vmatprep.subr.bf16.mxu0 %v1884
    %2835 = vmatpush2.bf16.msra.mxu0 %v1883
    %2836 = vmatprep.subr.bf16.mxu0 %v1876
    %2837 = vmatpush2.bf16.msra.mxu0 %v1875
    %2838 = vmatprep.subr.bf16.mxu0 %v1868
    %2839 = vmatpush2.bf16.msra.mxu0 %v1867
    %2840 = vmatprep.subr.bf16.mxu0 %v1860
    %2841 = vmatpush2.bf16.msra.mxu0 %v1859
    %2842 = vmatprep.subr.bf16.mxu0 %v1852
    %2843 = vmatpush2.bf16.msra.mxu0 %v1851
    %2844 = vmatprep.mubr.bf16.mxu0 %v469
    %2845 = vmatmul.mubr.bf16.gmra.mxu0 %v468
    %v2846 = vpop.f32.mrf.mxu0
    %v2847 = vadd.f32 %v2806, %v2846
    %v2848 = vpop.f32.mrf.mxu0
    %v2849 = vadd.f32 %v2808, %v2848
    %v2850 = vpop.f32.mrf.mxu0
    %v2851 = vpop.f32.mrf.mxu0
    %2852 = vdwg.mxu0
    %2853 = vmatprep.subr.bf16.mxu0 %v1972
    %2854 = vmatpush1.bf16.msra.mxu0 %v1971
    %2855 = vmatprep.subr.bf16.mxu0 %v1964
    %2856 = vmatpush1.bf16.msra.mxu0 %v1963
    %2857 = vmatprep.subr.bf16.mxu0 %v1956
    %2858 = vmatpush1.bf16.msra.mxu0 %v1955
    %2859 = vmatprep.subr.bf16.mxu0 %v1948
    %2860 = vmatpush1.bf16.msra.mxu0 %v1947
    %2861 = vmatprep.subr.bf16.mxu0 %v1940
    %2862 = vmatpush1.bf16.msra.mxu0 %v1939
    %2863 = vmatprep.subr.bf16.mxu0 %v1932
    %2864 = vmatpush1.bf16.msra.mxu0 %v1931
    %2865 = vmatprep.subr.bf16.mxu0 %v1924
    %2866 = vmatpush1.bf16.msra.mxu0 %v1923
    %2867 = vmatprep.subr.bf16.mxu0 %v1916
    %2868 = vmatpush1.bf16.msra.mxu0 %v1915
    %2869 = vmatprep.subr.bf16.mxu0 %v2036
    %2870 = vmatpush2.bf16.msra.mxu0 %v2035
    %2871 = vmatprep.subr.bf16.mxu0 %v2028
    %2872 = vmatpush2.bf16.msra.mxu0 %v2027
    %2873 = vmatprep.subr.bf16.mxu0 %v2020
    %2874 = vmatpush2.bf16.msra.mxu0 %v2019
    %2875 = vmatprep.subr.bf16.mxu0 %v2012
    %2876 = vmatpush2.bf16.msra.mxu0 %v2011
    %2877 = vmatprep.subr.bf16.mxu0 %v2004
    %2878 = vmatpush2.bf16.msra.mxu0 %v2003
    %2879 = vmatprep.subr.bf16.mxu0 %v1996
    %2880 = vmatpush2.bf16.msra.mxu0 %v1995
    %2881 = vmatprep.subr.bf16.mxu0 %v1988
    %2882 = vmatpush2.bf16.msra.mxu0 %v1987
    %2883 = vmatprep.subr.bf16.mxu0 %v1980
    %2884 = vmatpush2.bf16.msra.mxu0 %v1979
    %2885 = vmatprep.mubr.bf16.mxu0 %v471
    %2886 = vmatmul.mubr.bf16.gmra.mxu0 %v470
    %v2887 = vpop.f32.mrf.mxu0
    %v2888 = vadd.f32 %v2847, %v2887
    %v2889 = vpop.f32.mrf.mxu0
    %v2890 = vadd.f32 %v2849, %v2889
    %v2891 = vpop.f32.mrf.mxu0
    %v2892 = vpop.f32.mrf.mxu0
    %2893 = vdwg.mxu0
    %2894 = vmatprep.subr.bf16.mxu0 0
    %2895 = vmatpush1.bf16.msra.mxu0 0
    %2896 = vmatprep.subr.bf16.mxu0 0
    %2897 = vmatpush1.bf16.msra.mxu0 0
    %2898 = vmatprep.subr.bf16.mxu0 0
    %2899 = vmatpush1.bf16.msra.mxu0 0
    %2900 = vmatprep.subr.bf16.mxu0 0
    %2901 = vmatpush1.bf16.msra.mxu0 0
    %2902 = vmatprep.subr.bf16.mxu0 0
    %2903 = vmatpush1.bf16.msra.mxu0 0
    %2904 = vmatprep.subr.bf16.mxu0 0
    %2905 = vmatpush1.bf16.msra.mxu0 0
    %2906 = vmatprep.subr.bf16.mxu0 0
    %2907 = vmatpush1.bf16.msra.mxu0 0
    %2908 = vmatprep.subr.bf16.mxu0 %v2044
    %2909 = vmatpush1.bf16.msra.mxu0 %v2043
    %2910 = vmatprep.subr.bf16.mxu0 0
    %2911 = vmatpush2.bf16.msra.mxu0 0
    %2912 = vmatprep.subr.bf16.mxu0 0
    %2913 = vmatpush2.bf16.msra.mxu0 0
    %2914 = vmatprep.subr.bf16.mxu0 0
    %2915 = vmatpush2.bf16.msra.mxu0 0
    %2916 = vmatprep.subr.bf16.mxu0 0
    %2917 = vmatpush2.bf16.msra.mxu0 0
    %2918 = vmatprep.subr.bf16.mxu0 0
    %2919 = vmatpush2.bf16.msra.mxu0 0
    %2920 = vmatprep.subr.bf16.mxu0 0
    %2921 = vmatpush2.bf16.msra.mxu0 0
    %2922 = vmatprep.subr.bf16.mxu0 0
    %2923 = vmatpush2.bf16.msra.mxu0 0
    %2924 = vmatprep.subr.bf16.mxu0 0
    %2925 = vmatpush2.bf16.msra.mxu0 0
    %2926 = vmatprep.mubr.bf16.mxu0 0
    %2927 = vmatmul.mubr.bf16.gmra.mxu0 %v2441
    %v2928 = vpop.f32.mrf.mxu0
    %v2929 = vadd.f32 %v2888, %v2928
    %v2930 = vpop.f32.mrf.mxu0
    %v2931 = vadd.f32 %v2890, %v2930
    %v2932 = vpop.f32.mrf.mxu0
    %v2933 = vpop.f32.mrf.mxu0
    %2934 = vdwg.mxu0
    %2935 = vmatprep.subr.bf16.mxu0 %v1718
    %2936 = vmatpush1.bf16.msra.mxu0 %v1717
    %2937 = vmatprep.subr.bf16.mxu0 %v1710
    %2938 = vmatpush1.bf16.msra.mxu0 %v1709
    %2939 = vmatprep.subr.bf16.mxu0 %v1702
    %2940 = vmatpush1.bf16.msra.mxu0 %v1701
    %2941 = vmatprep.subr.bf16.mxu0 %v1694
    %2942 = vmatpush1.bf16.msra.mxu0 %v1693
    %2943 = vmatprep.subr.bf16.mxu0 %v1686
    %2944 = vmatpush1.bf16.msra.mxu0 %v1685
    %2945 = vmatprep.subr.bf16.mxu0 %v1678
    %2946 = vmatpush1.bf16.msra.mxu0 %v1677
    %2947 = vmatprep.subr.bf16.mxu0 %v1670
    %2948 = vmatpush1.bf16.msra.mxu0 %v1669
    %2949 = vmatprep.subr.bf16.mxu0 %v1662
    %2950 = vmatpush1.bf16.msra.mxu0 %v1661
    %2951 = vmatprep.subr.bf16.mxu0 %v1782
    %2952 = vmatpush2.bf16.msra.mxu0 %v1781
    %2953 = vmatprep.subr.bf16.mxu0 %v1774
    %2954 = vmatpush2.bf16.msra.mxu0 %v1773
    %2955 = vmatprep.subr.bf16.mxu0 %v1766
    %2956 = vmatpush2.bf16.msra.mxu0 %v1765
    %2957 = vmatprep.subr.bf16.mxu0 %v1758
    %2958 = vmatpush2.bf16.msra.mxu0 %v1757
    %2959 = vmatprep.subr.bf16.mxu0 %v1750
    %2960 = vmatpush2.bf16.msra.mxu0 %v1749
    %2961 = vmatprep.subr.bf16.mxu0 %v1742
    %2962 = vmatpush2.bf16.msra.mxu0 %v1741
    %2963 = vmatprep.subr.bf16.mxu0 %v1734
    %2964 = vmatpush2.bf16.msra.mxu0 %v1733
    %2965 = vmatprep.subr.bf16.mxu0 %v1726
    %2966 = vmatpush2.bf16.msra.mxu0 %v1725
    %2967 = vmatprep.mubr.bf16.mxu0 %v467
    %2968 = vmatmul.mubr.bf16.gmra.mxu0 %v466
    %v2969 = vpop.f32.mrf.mxu0
    %v2970 = vadd.f32 0.0, %v2969
    %v2971 = vpop.f32.mrf.mxu0
    %v2972 = vadd.f32 0.0, %v2971
    %v2973 = vpop.f32.mrf.mxu0
    %v2974 = vpop.f32.mrf.mxu0
    %2975 = vdwg.mxu0
    %2976 = vmatprep.subr.bf16.mxu0 %v1846
    %2977 = vmatpush1.bf16.msra.mxu0 %v1845
    %2978 = vmatprep.subr.bf16.mxu0 %v1838
    %2979 = vmatpush1.bf16.msra.mxu0 %v1837
    %2980 = vmatprep.subr.bf16.mxu0 %v1830
    %2981 = vmatpush1.bf16.msra.mxu0 %v1829
    %2982 = vmatprep.subr.bf16.mxu0 %v1822
    %2983 = vmatpush1.bf16.msra.mxu0 %v1821
    %2984 = vmatprep.subr.bf16.mxu0 %v1814
    %2985 = vmatpush1.bf16.msra.mxu0 %v1813
    %2986 = vmatprep.subr.bf16.mxu0 %v1806
    %2987 = vmatpush1.bf16.msra.mxu0 %v1805
    %2988 = vmatprep.subr.bf16.mxu0 %v1798
    %2989 = vmatpush1.bf16.msra.mxu0 %v1797
    %2990 = vmatprep.subr.bf16.mxu0 %v1790
    %2991 = vmatpush1.bf16.msra.mxu0 %v1789
    %2992 = vmatprep.subr.bf16.mxu0 %v1910
    %2993 = vmatpush2.bf16.msra.mxu0 %v1909
    %2994 = vmatprep.subr.bf16.mxu0 %v1902
    %2995 = vmatpush2.bf16.msra.mxu0 %v1901
    %2996 = vmatprep.subr.bf16.mxu0 %v1894
    %2997 = vmatpush2.bf16.msra.mxu0 %v1893
    %2998 = vmatprep.subr.bf16.mxu0 %v1886
    %2999 = vmatpush2.bf16.msra.mxu0 %v1885
    %3000 = vmatprep.subr.bf16.mxu0 %v1878
    %3001 = vmatpush2.bf16.msra.mxu0 %v1877
    %3002 = vmatprep.subr.bf16.mxu0 %v1870
    %3003 = vmatpush2.bf16.msra.mxu0 %v1869
    %3004 = vmatprep.subr.bf16.mxu0 %v1862
    %3005 = vmatpush2.bf16.msra.mxu0 %v1861
    %3006 = vmatprep.subr.bf16.mxu0 %v1854
    %3007 = vmatpush2.bf16.msra.mxu0 %v1853
    %3008 = vmatprep.mubr.bf16.mxu0 %v469
    %3009 = vmatmul.mubr.bf16.gmra.mxu0 %v468
    %v3010 = vpop.f32.mrf.mxu0
    %v3011 = vadd.f32 %v2970, %v3010
    %v3012 = vpop.f32.mrf.mxu0
    %v3013 = vadd.f32 %v2972, %v3012
    %v3014 = vpop.f32.mrf.mxu0
    %v3015 = vpop.f32.mrf.mxu0
    %3016 = vdwg.mxu0
    %3017 = vmatprep.subr.bf16.mxu0 %v1974
    %3018 = vmatpush1.bf16.msra.mxu0 %v1973
    %3019 = vmatprep.subr.bf16.mxu0 %v1966
    %3020 = vmatpush1.bf16.msra.mxu0 %v1965
    %3021 = vmatprep.subr.bf16.mxu0 %v1958
    %3022 = vmatpush1.bf16.msra.mxu0 %v1957
    %3023 = vmatprep.subr.bf16.mxu0 %v1950
    %3024 = vmatpush1.bf16.msra.mxu0 %v1949
    %3025 = vmatprep.subr.bf16.mxu0 %v1942
    %3026 = vmatpush1.bf16.msra.mxu0 %v1941
    %3027 = vmatprep.subr.bf16.mxu0 %v1934
    %3028 = vmatpush1.bf16.msra.mxu0 %v1933
    %3029 = vmatprep.subr.bf16.mxu0 %v1926
    %3030 = vmatpush1.bf16.msra.mxu0 %v1925
    %3031 = vmatprep.subr.bf16.mxu0 %v1918
    %3032 = vmatpush1.bf16.msra.mxu0 %v1917
    %3033 = vmatprep.subr.bf16.mxu0 %v2038
    %3034 = vmatpush2.bf16.msra.mxu0 %v2037
    %3035 = vmatprep.subr.bf16.mxu0 %v2030
    %3036 = vmatpush2.bf16.msra.mxu0 %v2029
    %3037 = vmatprep.subr.bf16.mxu0 %v2022
    %3038 = vmatpush2.bf16.msra.mxu0 %v2021
    %3039 = vmatprep.subr.bf16.mxu0 %v2014
    %3040 = vmatpush2.bf16.msra.mxu0 %v2013
    %3041 = vmatprep.subr.bf16.mxu0 %v2006
    %3042 = vmatpush2.bf16.msra.mxu0 %v2005
    %3043 = vmatprep.subr.bf16.mxu0 %v1998
    %3044 = vmatpush2.bf16.msra.mxu0 %v1997
    %3045 = vmatprep.subr.bf16.mxu0 %v1990
    %3046 = vmatpush2.bf16.msra.mxu0 %v1989
    %3047 = vmatprep.subr.bf16.mxu0 %v1982
    %3048 = vmatpush2.bf16.msra.mxu0 %v1981
    %3049 = vmatprep.mubr.bf16.mxu0 %v471
    %3050 = vmatmul.mubr.bf16.gmra.mxu0 %v470
    %v3051 = vpop.f32.mrf.mxu0
    %v3052 = vadd.f32 %v3011, %v3051
    %v3053 = vpop.f32.mrf.mxu0
    %v3054 = vadd.f32 %v3013, %v3053
    %v3055 = vpop.f32.mrf.mxu0
    %v3056 = vpop.f32.mrf.mxu0
    %3057 = vdwg.mxu0
    %3058 = vmatprep.subr.bf16.mxu0 0
    %3059 = vmatpush1.bf16.msra.mxu0 0
    %3060 = vmatprep.subr.bf16.mxu0 0
    %3061 = vmatpush1.bf16.msra.mxu0 0
    %3062 = vmatprep.subr.bf16.mxu0 0
    %3063 = vmatpush1.bf16.msra.mxu0 0
    %3064 = vmatprep.subr.bf16.mxu0 0
    %3065 = vmatpush1.bf16.msra.mxu0 0
    %3066 = vmatprep.subr.bf16.mxu0 0
    %3067 = vmatpush1.bf16.msra.mxu0 0
    %3068 = vmatprep.subr.bf16.mxu0 0
    %3069 = vmatpush1.bf16.msra.mxu0 0
    %3070 = vmatprep.subr.bf16.mxu0 0
    %3071 = vmatpush1.bf16.msra.mxu0 0
    %3072 = vmatprep.subr.bf16.mxu0 %v2046
    %3073 = vmatpush1.bf16.msra.mxu0 %v2045
    %3074 = vmatprep.subr.bf16.mxu0 0
    %3075 = vmatpush2.bf16.msra.mxu0 0
    %3076 = vmatprep.subr.bf16.mxu0 0
    %3077 = vmatpush2.bf16.msra.mxu0 0
    %3078 = vmatprep.subr.bf16.mxu0 0
    %3079 = vmatpush2.bf16.msra.mxu0 0
    %3080 = vmatprep.subr.bf16.mxu0 0
    %3081 = vmatpush2.bf16.msra.mxu0 0
    %3082 = vmatprep.subr.bf16.mxu0 0
    %3083 = vmatpush2.bf16.msra.mxu0 0
    %3084 = vmatprep.subr.bf16.mxu0 0
    %3085 = vmatpush2.bf16.msra.mxu0 0
    %3086 = vmatprep.subr.bf16.mxu0 0
    %3087 = vmatpush2.bf16.msra.mxu0 0
    %3088 = vmatprep.subr.bf16.mxu0 0
    %3089 = vmatpush2.bf16.msra.mxu0 0
    %3090 = vmatprep.mubr.bf16.mxu0 0
    %3091 = vmatmul.mubr.bf16.gmra.mxu0 %v2441
    %v3092 = vpop.f32.mrf.mxu0
    %v3093 = vadd.f32 %v3052, %v3092
    %v3094 = vpop.f32.mrf.mxu0
    %v3095 = vadd.f32 %v3054, %v3094
    %v3096 = vpop.f32.mrf.mxu0
    %v3097 = vpop.f32.mrf.mxu0
    %3098 = vdwg.mxu0
    %v3099 = vmax.f32 %v2601, 0.0
    %v3100 = vmax.f32 %v2603, 0.0
    %v3101 = vmax.f32 %v2765, 0.0
    %v3102 = vmax.f32 %v2767, 0.0
    %v3103 = vmax.f32 %v2929, 0.0
    %v3104 = vmax.f32 %v2931, 0.0
    %v3105 = vmax.f32 %v3093, 0.0
    %v3106 = vmax.f32 %v3095, 0.0
    %v3107 = vpack.c.bf16 %v3099, %v3099
    %v3108 = vpack.c.bf16 %v3100, %v3100
    %v3109 = vpack.c.bf16 %v3101, %v3101
    %v3110 = vpack.c.bf16 %v3102, %v3102
    %v3111 = vpack.c.bf16 %v3103, %v3103
    %v3112 = vpack.c.bf16 %v3104, %v3104
    %v3113 = vpack.c.bf16 %v3105, %v3105
    %v3114 = vpack.c.bf16 %v3106, %v3106
    %v3115 = vld [vmem:[#allocation4] sm:$0xff]
    %v3116 = vld [vmem:[#allocation4 + $0x8] sm:$0xff]
    %v3117 = vld [vmem:[#allocation4 + $0x10] sm:$0xff]
    %v3118 = vld [vmem:[#allocation4 + $0x18] sm:$0xff]
    %v3119 = vld [vmem:[#allocation4 + $0x20] sm:$0xff]
    %v3120 = vld [vmem:[#allocation4 + $0x28] sm:$0xff]
    %v3121 = vld [vmem:[#allocation4 + $0x30] sm:$0xff]
    %v3122 = vld [vmem:[#allocation4 + $0x38] sm:$0xff]
    %v3123 = vld [vmem:[#allocation4 + $0x40] sm:$0xff]
    %v3124 = vld [vmem:[#allocation4 + $0x48] sm:$0xff]
    %v3125 = vld [vmem:[#allocation4 + $0x50] sm:$0xff]
    %v3126 = vld [vmem:[#allocation4 + $0x58] sm:$0xff]
    %v3127 = vld [vmem:[#allocation4 + $0x60] sm:$0xff]
    %v3128 = vld [vmem:[#allocation4 + $0x68] sm:$0xff]
    %v3129 = vld [vmem:[#allocation4 + $0x70] sm:$0xff]
    %v3130 = vld [vmem:[#allocation4 + $0x78] sm:$0xff]
    %v3131 = vld [vmem:[#allocation4 + $0x80] sm:$0xff]
    %v3132 = vld [vmem:[#allocation4 + $0x88] sm:$0xff]
    %v3133 = vld [vmem:[#allocation4 + $0x90] sm:$0xff]
    %v3134 = vld [vmem:[#allocation4 + $0x98] sm:$0xff]
    %v3135 = vld [vmem:[#allocation4 + $0xa0] sm:$0xff]
    %v3136 = vld [vmem:[#allocation4 + $0xa8] sm:$0xff]
    %v3137 = vld [vmem:[#allocation4 + $0xb0] sm:$0xff]
    %v3138 = vld [vmem:[#allocation4 + $0xb8] sm:$0xff]
    %v3139 = vld [vmem:[#allocation4 + $0xc0] sm:$0xff]
    %v3140 = vld [vmem:[#allocation4 + $0xc8] sm:$0xff]
    %v3141 = vld [vmem:[#allocation4 + $0xd0] sm:$0xff]
    %v3142 = vld [vmem:[#allocation4 + $0xd8] sm:$0xff]
    %v3143 = vld [vmem:[#allocation4 + $0xe0] sm:$0xff]
    %v3144 = vld [vmem:[#allocation4 + $0xe8] sm:$0xff]
    %v3145 = vld [vmem:[#allocation4 + $0xf0] sm:$0xff]
    %v3146 = vld [vmem:[#allocation4 + $0xf8] sm:$0xff]
    %v3147 = vld [vmem:[#allocation4 + $0x100] sm:$0xff]
    %v3148 = vld [vmem:[#allocation4 + $0x108] sm:$0xff]
    %v3149 = vld [vmem:[#allocation4 + $0x110] sm:$0xff]
    %v3150 = vld [vmem:[#allocation4 + $0x118] sm:$0xff]
    %v3151 = vld [vmem:[#allocation4 + $0x120] sm:$0xff]
    %v3152 = vld [vmem:[#allocation4 + $0x128] sm:$0xff]
    %v3153 = vld [vmem:[#allocation4 + $0x130] sm:$0xff]
    %v3154 = vld [vmem:[#allocation4 + $0x138] sm:$0xff]
    %v3155 = vld [vmem:[#allocation4 + $0x140] sm:$0xff]
    %v3156 = vld [vmem:[#allocation4 + $0x148] sm:$0xff]
    %v3157 = vld [vmem:[#allocation4 + $0x150] sm:$0xff]
    %v3158 = vld [vmem:[#allocation4 + $0x158] sm:$0xff]
    %v3159 = vld [vmem:[#allocation4 + $0x160] sm:$0xff]
    %v3160 = vld [vmem:[#allocation4 + $0x168] sm:$0xff]
    %v3161 = vld [vmem:[#allocation4 + $0x170] sm:$0xff]
    %v3162 = vld [vmem:[#allocation4 + $0x178] sm:$0xff]
    %v3163 = vld [vmem:[#allocation4 + $0x180] sm:$0xff]
    %v3164 = vld [vmem:[#allocation4 + $0x188] sm:$0xff]
    %v3165 = vld [vmem:[#allocation4 + $0x190] sm:$0xff]
    %v3166 = vld [vmem:[#allocation4 + $0x198] sm:$0xff]
    %v3167 = vld [vmem:[#allocation4 + $0x1a0] sm:$0xff]
    %v3168 = vld [vmem:[#allocation4 + $0x1a8] sm:$0xff]
    %v3169 = vld [vmem:[#allocation4 + $0x1b0] sm:$0xff]
    %v3170 = vld [vmem:[#allocation4 + $0x1b8] sm:$0xff]
    %v3171 = vld [vmem:[#allocation4 + $0x1c0] sm:$0xff]
    %v3172 = vld [vmem:[#allocation4 + $0x1c8] sm:$0xff]
    %v3173 = vld [vmem:[#allocation4 + $0x1d0] sm:$0xff]
    %v3174 = vld [vmem:[#allocation4 + $0x1d8] sm:$0xff]
    %v3175 = vld [vmem:[#allocation4 + $0x1e0] sm:$0xff]
    %v3176 = vld [vmem:[#allocation4 + $0x1e8] sm:$0xff]
    %v3177 = vld [vmem:[#allocation4 + $0x1f0] sm:$0xff]
    %v3178 = vld [vmem:[#allocation4 + $0x1f8] sm:$0xff]
    %v3179 = vld [vmem:[#allocation4 + $0x200] sm:$0xff]
    %v3180 = vld [vmem:[#allocation4 + $0x208] sm:$0xff]
    %v3181 = vld [vmem:[#allocation4 + $0x210] sm:$0xff]
    %v3182 = vld [vmem:[#allocation4 + $0x218] sm:$0xff]
    %v3183 = vld [vmem:[#allocation4 + $0x220] sm:$0xff]
    %v3184 = vld [vmem:[#allocation4 + $0x228] sm:$0xff]
    %v3185 = vld [vmem:[#allocation4 + $0x230] sm:$0xff]
    %v3186 = vld [vmem:[#allocation4 + $0x238] sm:$0xff]
    %v3187 = vld [vmem:[#allocation4 + $0x240] sm:$0xff]
    %v3188 = vld [vmem:[#allocation4 + $0x248] sm:$0xff]
    %v3189 = vld [vmem:[#allocation4 + $0x250] sm:$0xff]
    %v3190 = vld [vmem:[#allocation4 + $0x258] sm:$0xff]
    %v3191 = vld [vmem:[#allocation4 + $0x260] sm:$0xff]
    %v3192 = vld [vmem:[#allocation4 + $0x268] sm:$0xff]
    %v3193 = vld [vmem:[#allocation4 + $0x270] sm:$0xff]
    %v3194 = vld [vmem:[#allocation4 + $0x278] sm:$0xff]
    %v3195 = vld [vmem:[#allocation4 + $0x280] sm:$0xff]
    %v3196 = vld [vmem:[#allocation4 + $0x288] sm:$0xff]
    %v3197 = vld [vmem:[#allocation4 + $0x290] sm:$0xff]
    %v3198 = vld [vmem:[#allocation4 + $0x298] sm:$0xff]
    %v3199 = vld [vmem:[#allocation4 + $0x2a0] sm:$0xff]
    %v3200 = vld [vmem:[#allocation4 + $0x2a8] sm:$0xff]
    %v3201 = vld [vmem:[#allocation4 + $0x2b0] sm:$0xff]
    %v3202 = vld [vmem:[#allocation4 + $0x2b8] sm:$0xff]
    %v3203 = vld [vmem:[#allocation4 + $0x2c0] sm:$0xff]
    %v3204 = vld [vmem:[#allocation4 + $0x2c8] sm:$0xff]
    %v3205 = vld [vmem:[#allocation4 + $0x2d0] sm:$0xff]
    %v3206 = vld [vmem:[#allocation4 + $0x2d8] sm:$0xff]
    %v3207 = vld [vmem:[#allocation4 + $0x2e0] sm:$0xff]
    %v3208 = vld [vmem:[#allocation4 + $0x2e8] sm:$0xff]
    %v3209 = vld [vmem:[#allocation4 + $0x2f0] sm:$0xff]
    %v3210 = vld [vmem:[#allocation4 + $0x2f8] sm:$0xff]
    %v3211 = vld [vmem:[#allocation4 + $0x300] sm:$0xff]
    %v3212 = vld [vmem:[#allocation4 + $0x308] sm:$0xff]
    %v3213 = vld [vmem:[#allocation4 + $0x310] sm:$0xff]
    %v3214 = vld [vmem:[#allocation4 + $0x318] sm:$0xff]
    %v3215 = vld [vmem:[#allocation4 + $0x320] sm:$0xff]
    %v3216 = vld [vmem:[#allocation4 + $0x328] sm:$0xff]
    %v3217 = vld [vmem:[#allocation4 + $0x330] sm:$0xff]
    %v3218 = vld [vmem:[#allocation4 + $0x338] sm:$0xff]
    %v3219 = vld [vmem:[#allocation4 + $0x340] sm:$0xff]
    %v3220 = vld [vmem:[#allocation4 + $0x348] sm:$0xff]
    %v3221 = vld [vmem:[#allocation4 + $0x350] sm:$0xff]
    %v3222 = vld [vmem:[#allocation4 + $0x358] sm:$0xff]
    %v3223 = vld [vmem:[#allocation4 + $0x360] sm:$0xff]
    %v3224 = vld [vmem:[#allocation4 + $0x368] sm:$0xff]
    %v3225 = vld [vmem:[#allocation4 + $0x370] sm:$0xff]
    %v3226 = vld [vmem:[#allocation4 + $0x378] sm:$0xff]
    %v3227 = vld [vmem:[#allocation4 + $0x380] sm:$0xff]
    %v3228 = vld [vmem:[#allocation4 + $0x388] sm:$0xff]
    %v3229 = vld [vmem:[#allocation4 + $0x390] sm:$0xff]
    %v3230 = vld [vmem:[#allocation4 + $0x398] sm:$0xff]
    %v3231 = vld [vmem:[#allocation4 + $0x3a0] sm:$0xff]
    %v3232 = vld [vmem:[#allocation4 + $0x3a8] sm:$0xff]
    %v3233 = vld [vmem:[#allocation4 + $0x3b0] sm:$0xff]
    %v3234 = vld [vmem:[#allocation4 + $0x3b8] sm:$0xff]
    %v3235 = vld [vmem:[#allocation4 + $0x3c0] sm:$0xff]
    %v3236 = vld [vmem:[#allocation4 + $0x3c8] sm:$0xff]
    %v3237 = vld [vmem:[#allocation4 + $0x3d0] sm:$0xff]
    %v3238 = vld [vmem:[#allocation4 + $0x3d8] sm:$0xff]
    %v3239 = vld [vmem:[#allocation4 + $0x3e0] sm:$0xff]
    %v3240 = vld [vmem:[#allocation4 + $0x3e8] sm:$0xff]
    %v3241 = vld [vmem:[#allocation4 + $0x3f0] sm:$0xff]
    %v3242 = vld [vmem:[#allocation4 + $0x3f8] sm:$0xff]
    %v3243 = vld [vmem:[#allocation4 + $0x400] sm:$0xff]
    %v3244 = vld [vmem:[#allocation4 + $0x408] sm:$0xff]
    %v3245 = vld [vmem:[#allocation4 + $0x410] sm:$0xff]
    %v3246 = vld [vmem:[#allocation4 + $0x418] sm:$0xff]
    %v3247 = vld [vmem:[#allocation4 + $0x420] sm:$0xff]
    %v3248 = vld [vmem:[#allocation4 + $0x428] sm:$0xff]
    %v3249 = vld [vmem:[#allocation4 + $0x430] sm:$0xff]
    %v3250 = vld [vmem:[#allocation4 + $0x438] sm:$0xff]
    %v3251 = vld [vmem:[#allocation4 + $0x440] sm:$0xff]
    %v3252 = vld [vmem:[#allocation4 + $0x448] sm:$0xff]
    %v3253 = vld [vmem:[#allocation4 + $0x450] sm:$0xff]
    %v3254 = vld [vmem:[#allocation4 + $0x458] sm:$0xff]
    %v3255 = vld [vmem:[#allocation4 + $0x460] sm:$0xff]
    %v3256 = vld [vmem:[#allocation4 + $0x468] sm:$0xff]
    %v3257 = vld [vmem:[#allocation4 + $0x470] sm:$0xff]
    %v3258 = vld [vmem:[#allocation4 + $0x478] sm:$0xff]
    %v3259 = vld [vmem:[#allocation4 + $0x480] sm:$0xff]
    %v3260 = vld [vmem:[#allocation4 + $0x488] sm:$0xff]
    %v3261 = vld [vmem:[#allocation4 + $0x490] sm:$0xff]
    %v3262 = vld [vmem:[#allocation4 + $0x498] sm:$0xff]
    %v3263 = vld [vmem:[#allocation4 + $0x4a0] sm:$0xff]
    %v3264 = vld [vmem:[#allocation4 + $0x4a8] sm:$0xff]
    %v3265 = vld [vmem:[#allocation4 + $0x4b0] sm:$0xff]
    %v3266 = vld [vmem:[#allocation4 + $0x4b8] sm:$0xff]
    %v3267 = vld [vmem:[#allocation4 + $0x4c0] sm:$0xff]
    %v3268 = vld [vmem:[#allocation4 + $0x4c8] sm:$0xff]
    %v3269 = vld [vmem:[#allocation4 + $0x4d0] sm:$0xff]
    %v3270 = vld [vmem:[#allocation4 + $0x4d8] sm:$0xff]
    %v3271 = vld [vmem:[#allocation4 + $0x4e0] sm:$0xff]
    %v3272 = vld [vmem:[#allocation4 + $0x4e8] sm:$0xff]
    %v3273 = vld [vmem:[#allocation4 + $0x4f0] sm:$0xff]
    %v3274 = vld [vmem:[#allocation4 + $0x4f8] sm:$0xff]
    %v3275 = vld [vmem:[#allocation4 + $0x500] sm:$0xff]
    %v3276 = vld [vmem:[#allocation4 + $0x508] sm:$0xff]
    %v3277 = vld [vmem:[#allocation4 + $0x510] sm:$0xff]
    %v3278 = vld [vmem:[#allocation4 + $0x518] sm:$0xff]
    %v3279 = vld [vmem:[#allocation4 + $0x520] sm:$0xff]
    %v3280 = vld [vmem:[#allocation4 + $0x528] sm:$0xff]
    %v3281 = vld [vmem:[#allocation4 + $0x530] sm:$0xff]
    %v3282 = vld [vmem:[#allocation4 + $0x538] sm:$0xff]
    %v3283 = vld [vmem:[#allocation4 + $0x540] sm:$0xff]
    %v3284 = vld [vmem:[#allocation4 + $0x548] sm:$0xff]
    %v3285 = vld [vmem:[#allocation4 + $0x550] sm:$0xff]
    %v3286 = vld [vmem:[#allocation4 + $0x558] sm:$0xff]
    %v3287 = vld [vmem:[#allocation4 + $0x560] sm:$0xff]
    %v3288 = vld [vmem:[#allocation4 + $0x568] sm:$0xff]
    %v3289 = vld [vmem:[#allocation4 + $0x570] sm:$0xff]
    %v3290 = vld [vmem:[#allocation4 + $0x578] sm:$0xff]
    %v3291 = vld [vmem:[#allocation4 + $0x580] sm:$0xff]
    %v3292 = vld [vmem:[#allocation4 + $0x588] sm:$0xff]
    %v3293 = vld [vmem:[#allocation4 + $0x590] sm:$0xff]
    %v3294 = vld [vmem:[#allocation4 + $0x598] sm:$0xff]
    %v3295 = vld [vmem:[#allocation4 + $0x5a0] sm:$0xff]
    %v3296 = vld [vmem:[#allocation4 + $0x5a8] sm:$0xff]
    %v3297 = vld [vmem:[#allocation4 + $0x5b0] sm:$0xff]
    %v3298 = vld [vmem:[#allocation4 + $0x5b8] sm:$0xff]
    %v3299 = vld [vmem:[#allocation4 + $0x5c0] sm:$0xff]
    %v3300 = vld [vmem:[#allocation4 + $0x5c8] sm:$0xff]
    %v3301 = vld [vmem:[#allocation4 + $0x5d0] sm:$0xff]
    %v3302 = vld [vmem:[#allocation4 + $0x5d8] sm:$0xff]
    %v3303 = vld [vmem:[#allocation4 + $0x5e0] sm:$0xff]
    %v3304 = vld [vmem:[#allocation4 + $0x5e8] sm:$0xff]
    %v3305 = vld [vmem:[#allocation4 + $0x5f0] sm:$0xff]
    %v3306 = vld [vmem:[#allocation4 + $0x5f8] sm:$0xff]
    %v3307 = vld [vmem:[#allocation4 + $0x600] sm:$0xff]
    %v3308 = vld [vmem:[#allocation4 + $0x608] sm:$0xff]
    %v3309 = vld [vmem:[#allocation4 + $0x610] sm:$0xff]
    %v3310 = vld [vmem:[#allocation4 + $0x618] sm:$0xff]
    %v3311 = vld [vmem:[#allocation4 + $0x620] sm:$0xff]
    %v3312 = vld [vmem:[#allocation4 + $0x628] sm:$0xff]
    %v3313 = vld [vmem:[#allocation4 + $0x630] sm:$0xff]
    %v3314 = vld [vmem:[#allocation4 + $0x638] sm:$0xff]
    %v3315 = vld [vmem:[#allocation4 + $0x640] sm:$0xff]
    %v3316 = vld [vmem:[#allocation4 + $0x648] sm:$0xff]
    %v3317 = vld [vmem:[#allocation4 + $0x650] sm:$0xff]
    %v3318 = vld [vmem:[#allocation4 + $0x658] sm:$0xff]
    %v3319 = vld [vmem:[#allocation4 + $0x660] sm:$0xff]
    %v3320 = vld [vmem:[#allocation4 + $0x668] sm:$0xff]
    %v3321 = vld [vmem:[#allocation4 + $0x670] sm:$0xff]
    %v3322 = vld [vmem:[#allocation4 + $0x678] sm:$0xff]
    %v3323 = vld [vmem:[#allocation4 + $0x680] sm:$0xff]
    %v3324 = vld [vmem:[#allocation4 + $0x688] sm:$0xff]
    %v3325 = vld [vmem:[#allocation4 + $0x690] sm:$0xff]
    %v3326 = vld [vmem:[#allocation4 + $0x698] sm:$0xff]
    %v3327 = vld [vmem:[#allocation4 + $0x6a0] sm:$0xff]
    %v3328 = vld [vmem:[#allocation4 + $0x6a8] sm:$0xff]
    %v3329 = vld [vmem:[#allocation4 + $0x6b0] sm:$0xff]
    %v3330 = vld [vmem:[#allocation4 + $0x6b8] sm:$0xff]
    %v3331 = vld [vmem:[#allocation4 + $0x6c0] sm:$0xff]
    %v3332 = vld [vmem:[#allocation4 + $0x6c8] sm:$0xff]
    %v3333 = vld [vmem:[#allocation4 + $0x6d0] sm:$0xff]
    %v3334 = vld [vmem:[#allocation4 + $0x6d8] sm:$0xff]
    %v3335 = vld [vmem:[#allocation4 + $0x6e0] sm:$0xff]
    %v3336 = vld [vmem:[#allocation4 + $0x6e8] sm:$0xff]
    %v3337 = vld [vmem:[#allocation4 + $0x6f0] sm:$0xff]
    %v3338 = vld [vmem:[#allocation4 + $0x6f8] sm:$0xff]
    %v3339 = vld [vmem:[#allocation4 + $0x700] sm:$0xff]
    %v3340 = vld [vmem:[#allocation4 + $0x708] sm:$0xff]
    %v3341 = vld [vmem:[#allocation4 + $0x710] sm:$0xff]
    %v3342 = vld [vmem:[#allocation4 + $0x718] sm:$0xff]
    %v3343 = vld [vmem:[#allocation4 + $0x720] sm:$0xff]
    %v3344 = vld [vmem:[#allocation4 + $0x728] sm:$0xff]
    %v3345 = vld [vmem:[#allocation4 + $0x730] sm:$0xff]
    %v3346 = vld [vmem:[#allocation4 + $0x738] sm:$0xff]
    %v3347 = vld [vmem:[#allocation4 + $0x740] sm:$0xff]
    %v3348 = vld [vmem:[#allocation4 + $0x748] sm:$0xff]
    %v3349 = vld [vmem:[#allocation4 + $0x750] sm:$0xff]
    %v3350 = vld [vmem:[#allocation4 + $0x758] sm:$0xff]
    %v3351 = vld [vmem:[#allocation4 + $0x760] sm:$0xff]
    %v3352 = vld [vmem:[#allocation4 + $0x768] sm:$0xff]
    %v3353 = vld [vmem:[#allocation4 + $0x770] sm:$0xff]
    %v3354 = vld [vmem:[#allocation4 + $0x778] sm:$0xff]
    %v3355 = vld [vmem:[#allocation4 + $0x780] sm:$0xff]
    %v3356 = vld [vmem:[#allocation4 + $0x788] sm:$0xff]
    %v3357 = vld [vmem:[#allocation4 + $0x790] sm:$0xff]
    %v3358 = vld [vmem:[#allocation4 + $0x798] sm:$0xff]
    %v3359 = vld [vmem:[#allocation4 + $0x7a0] sm:$0xff]
    %v3360 = vld [vmem:[#allocation4 + $0x7a8] sm:$0xff]
    %v3361 = vld [vmem:[#allocation4 + $0x7b0] sm:$0xff]
    %v3362 = vld [vmem:[#allocation4 + $0x7b8] sm:$0xff]
    %v3363 = vld [vmem:[#allocation4 + $0x7c0] sm:$0xff]
    %v3364 = vld [vmem:[#allocation4 + $0x7c8] sm:$0xff]
    %v3365 = vld [vmem:[#allocation4 + $0x7d0] sm:$0xff]
    %v3366 = vld [vmem:[#allocation4 + $0x7d8] sm:$0xff]
    %v3367 = vld [vmem:[#allocation4 + $0x7e0] sm:$0xff]
    %v3368 = vld [vmem:[#allocation4 + $0x7e8] sm:$0xff]
    %v3369 = vld [vmem:[#allocation4 + $0x7f0] sm:$0xff]
    %v3370 = vld [vmem:[#allocation4 + $0x7f8] sm:$0xff]
    %v3371 = vld [vmem:[#allocation4 + $0x800] sm:$0xff]
    %v3372 = vld [vmem:[#allocation4 + $0x808] sm:$0xff]
    %v3373 = vld [vmem:[#allocation4 + $0x810] sm:$0xff]
    %v3374 = vld [vmem:[#allocation4 + $0x818] sm:$0xff]
    %v3375 = vld [vmem:[#allocation4 + $0x820] sm:$0xff]
    %v3376 = vld [vmem:[#allocation4 + $0x828] sm:$0xff]
    %v3377 = vld [vmem:[#allocation4 + $0x830] sm:$0xff]
    %v3378 = vld [vmem:[#allocation4 + $0x838] sm:$0xff]
    %v3379 = vld [vmem:[#allocation4 + $0x840] sm:$0xff]
    %v3380 = vld [vmem:[#allocation4 + $0x848] sm:$0xff]
    %v3381 = vld [vmem:[#allocation4 + $0x850] sm:$0xff]
    %v3382 = vld [vmem:[#allocation4 + $0x858] sm:$0xff]
    %v3383 = vld [vmem:[#allocation4 + $0x860] sm:$0xff]
    %v3384 = vld [vmem:[#allocation4 + $0x868] sm:$0xff]
    %v3385 = vld [vmem:[#allocation4 + $0x870] sm:$0xff]
    %v3386 = vld [vmem:[#allocation4 + $0x878] sm:$0xff]
    %v3387 = vld [vmem:[#allocation4 + $0x880] sm:$0xff]
    %v3388 = vld [vmem:[#allocation4 + $0x888] sm:$0xff]
    %v3389 = vld [vmem:[#allocation4 + $0x890] sm:$0xff]
    %v3390 = vld [vmem:[#allocation4 + $0x898] sm:$0xff]
    %v3391 = vld [vmem:[#allocation4 + $0x8a0] sm:$0xff]
    %v3392 = vld [vmem:[#allocation4 + $0x8a8] sm:$0xff]
    %v3393 = vld [vmem:[#allocation4 + $0x8b0] sm:$0xff]
    %v3394 = vld [vmem:[#allocation4 + $0x8b8] sm:$0xff]
    %v3395 = vld [vmem:[#allocation4 + $0x8c0] sm:$0xff]
    %v3396 = vld [vmem:[#allocation4 + $0x8c8] sm:$0xff]
    %v3397 = vld [vmem:[#allocation4 + $0x8d0] sm:$0xff]
    %v3398 = vld [vmem:[#allocation4 + $0x8d8] sm:$0xff]
    %v3399 = vld [vmem:[#allocation4 + $0x8e0] sm:$0xff]
    %v3400 = vld [vmem:[#allocation4 + $0x8e8] sm:$0xff]
    %v3401 = vld [vmem:[#allocation4 + $0x8f0] sm:$0xff]
    %v3402 = vld [vmem:[#allocation4 + $0x8f8] sm:$0xff]
    %v3403 = vld [vmem:[#allocation4 + $0x900] sm:$0xff]
    %v3404 = vld [vmem:[#allocation4 + $0x908] sm:$0xff]
    %v3405 = vld [vmem:[#allocation4 + $0x910] sm:$0xff]
    %v3406 = vld [vmem:[#allocation4 + $0x918] sm:$0xff]
    %v3407 = vld [vmem:[#allocation4 + $0x920] sm:$0xff]
    %v3408 = vld [vmem:[#allocation4 + $0x928] sm:$0xff]
    %v3409 = vld [vmem:[#allocation4 + $0x930] sm:$0xff]
    %v3410 = vld [vmem:[#allocation4 + $0x938] sm:$0xff]
    %v3411 = vld [vmem:[#allocation4 + $0x940] sm:$0xff]
    %v3412 = vld [vmem:[#allocation4 + $0x948] sm:$0xff]
    %v3413 = vld [vmem:[#allocation4 + $0x950] sm:$0xff]
    %v3414 = vld [vmem:[#allocation4 + $0x958] sm:$0xff]
    %v3415 = vld [vmem:[#allocation4 + $0x960] sm:$0xff]
    %v3416 = vld [vmem:[#allocation4 + $0x968] sm:$0xff]
    %v3417 = vld [vmem:[#allocation4 + $0x970] sm:$0xff]
    %v3418 = vld [vmem:[#allocation4 + $0x978] sm:$0xff]
    %v3419 = vld [vmem:[#allocation4 + $0x980] sm:$0xff]
    %v3420 = vld [vmem:[#allocation4 + $0x988] sm:$0xff]
    %v3421 = vld [vmem:[#allocation4 + $0x990] sm:$0xff]
    %v3422 = vld [vmem:[#allocation4 + $0x998] sm:$0xff]
    %v3423 = vld [vmem:[#allocation4 + $0x9a0] sm:$0xff]
    %v3424 = vld [vmem:[#allocation4 + $0x9a8] sm:$0xff]
    %v3425 = vld [vmem:[#allocation4 + $0x9b0] sm:$0xff]
    %v3426 = vld [vmem:[#allocation4 + $0x9b8] sm:$0xff]
    %v3427 = vld [vmem:[#allocation4 + $0x9c0] sm:$0xff]
    %v3428 = vld [vmem:[#allocation4 + $0x9c8] sm:$0xff]
    %v3429 = vld [vmem:[#allocation4 + $0x9d0] sm:$0xff]
    %v3430 = vld [vmem:[#allocation4 + $0x9d8] sm:$0xff]
    %v3431 = vld [vmem:[#allocation4 + $0x9e0] sm:$0xff]
    %v3432 = vld [vmem:[#allocation4 + $0x9e8] sm:$0xff]
    %v3433 = vld [vmem:[#allocation4 + $0x9f0] sm:$0xff]
    %v3434 = vld [vmem:[#allocation4 + $0x9f8] sm:$0xff]
    %v3435 = vld [vmem:[#allocation4 + $0xa00] sm:$0xff]
    %v3436 = vld [vmem:[#allocation4 + $0xa08] sm:$0xff]
    %v3437 = vld [vmem:[#allocation4 + $0xa10] sm:$0xff]
    %v3438 = vld [vmem:[#allocation4 + $0xa18] sm:$0xff]
    %v3439 = vld [vmem:[#allocation4 + $0xa20] sm:$0xff]
    %v3440 = vld [vmem:[#allocation4 + $0xa28] sm:$0xff]
    %v3441 = vld [vmem:[#allocation4 + $0xa30] sm:$0xff]
    %v3442 = vld [vmem:[#allocation4 + $0xa38] sm:$0xff]
    %v3443 = vld [vmem:[#allocation4 + $0xa40] sm:$0xff]
    %v3444 = vld [vmem:[#allocation4 + $0xa48] sm:$0xff]
    %v3445 = vld [vmem:[#allocation4 + $0xa50] sm:$0xff]
    %v3446 = vld [vmem:[#allocation4 + $0xa58] sm:$0xff]
    %v3447 = vld [vmem:[#allocation4 + $0xa60] sm:$0xff]
    %v3448 = vld [vmem:[#allocation4 + $0xa68] sm:$0xff]
    %v3449 = vld [vmem:[#allocation4 + $0xa70] sm:$0xff]
    %v3450 = vld [vmem:[#allocation4 + $0xa78] sm:$0xff]
    %v3451 = vld [vmem:[#allocation4 + $0xa80] sm:$0xff]
    %v3452 = vld [vmem:[#allocation4 + $0xa88] sm:$0xff]
    %v3453 = vld [vmem:[#allocation4 + $0xa90] sm:$0xff]
    %v3454 = vld [vmem:[#allocation4 + $0xa98] sm:$0xff]
    %v3455 = vld [vmem:[#allocation4 + $0xaa0] sm:$0xff]
    %v3456 = vld [vmem:[#allocation4 + $0xaa8] sm:$0xff]
    %v3457 = vld [vmem:[#allocation4 + $0xab0] sm:$0xff]
    %v3458 = vld [vmem:[#allocation4 + $0xab8] sm:$0xff]
    %v3459 = vld [vmem:[#allocation4 + $0xac0] sm:$0xff]
    %v3460 = vld [vmem:[#allocation4 + $0xac8] sm:$0xff]
    %v3461 = vld [vmem:[#allocation4 + $0xad0] sm:$0xff]
    %v3462 = vld [vmem:[#allocation4 + $0xad8] sm:$0xff]
    %v3463 = vld [vmem:[#allocation4 + $0xae0] sm:$0xff]
    %v3464 = vld [vmem:[#allocation4 + $0xae8] sm:$0xff]
    %v3465 = vld [vmem:[#allocation4 + $0xaf0] sm:$0xff]
    %v3466 = vld [vmem:[#allocation4 + $0xaf8] sm:$0xff]
    %v3467 = vld [vmem:[#allocation4 + $0xb00] sm:$0xff]
    %v3468 = vld [vmem:[#allocation4 + $0xb08] sm:$0xff]
    %v3469 = vld [vmem:[#allocation4 + $0xb10] sm:$0xff]
    %v3470 = vld [vmem:[#allocation4 + $0xb18] sm:$0xff]
    %v3471 = vld [vmem:[#allocation4 + $0xb20] sm:$0xff]
    %v3472 = vld [vmem:[#allocation4 + $0xb28] sm:$0xff]
    %v3473 = vld [vmem:[#allocation4 + $0xb30] sm:$0xff]
    %v3474 = vld [vmem:[#allocation4 + $0xb38] sm:$0xff]
    %v3475 = vld [vmem:[#allocation4 + $0xb40] sm:$0xff]
    %v3476 = vld [vmem:[#allocation4 + $0xb48] sm:$0xff]
    %v3477 = vld [vmem:[#allocation4 + $0xb50] sm:$0xff]
    %v3478 = vld [vmem:[#allocation4 + $0xb58] sm:$0xff]
    %v3479 = vld [vmem:[#allocation4 + $0xb60] sm:$0xff]
    %v3480 = vld [vmem:[#allocation4 + $0xb68] sm:$0xff]
    %v3481 = vld [vmem:[#allocation4 + $0xb70] sm:$0xff]
    %v3482 = vld [vmem:[#allocation4 + $0xb78] sm:$0xff]
    %v3483 = vld [vmem:[#allocation4 + $0xb80] sm:$0xff]
    %v3484 = vld [vmem:[#allocation4 + $0xb88] sm:$0xff]
    %v3485 = vld [vmem:[#allocation4 + $0xb90] sm:$0xff]
    %v3486 = vld [vmem:[#allocation4 + $0xb98] sm:$0xff]
    %v3487 = vld [vmem:[#allocation4 + $0xba0] sm:$0xff]
    %v3488 = vld [vmem:[#allocation4 + $0xba8] sm:$0xff]
    %v3489 = vld [vmem:[#allocation4 + $0xbb0] sm:$0xff]
    %v3490 = vld [vmem:[#allocation4 + $0xbb8] sm:$0xff]
    %v3491 = vld [vmem:[#allocation4 + $0xbc0] sm:$0xff]
    %v3492 = vld [vmem:[#allocation4 + $0xbc8] sm:$0xff]
    %v3493 = vld [vmem:[#allocation4 + $0xbd0] sm:$0xff]
    %v3494 = vld [vmem:[#allocation4 + $0xbd8] sm:$0xff]
    %v3495 = vld [vmem:[#allocation4 + $0xbe0] sm:$0xff]
    %v3496 = vld [vmem:[#allocation4 + $0xbe8] sm:$0xff]
    %v3497 = vld [vmem:[#allocation4 + $0xbf0] sm:$0xff]
    %v3498 = vld [vmem:[#allocation4 + $0xbf8] sm:$0xff]
    %v3499 = vld [vmem:[#allocation4 + $0xc00] sm:$0xff]
    %v3500 = vld [vmem:[#allocation4 + $0xc08] sm:$0xff]
    %v3501 = vld [vmem:[#allocation4 + $0xc10] sm:$0xff]
    %v3502 = vld [vmem:[#allocation4 + $0xc18] sm:$0xff]
    %v3503 = vld [vmem:[#allocation4 + $0xc20] sm:$0xff]
    %v3504 = vld [vmem:[#allocation4 + $0xc28] sm:$0xff]
    %v3505 = vld [vmem:[#allocation4 + $0xc30] sm:$0xff]
    %v3506 = vld [vmem:[#allocation4 + $0xc38] sm:$0xff]
    %v3507 = vld [vmem:[#allocation4 + $0xc40] sm:$0xff]
    %v3508 = vld [vmem:[#allocation4 + $0xc48] sm:$0xff]
    %v3509 = vld [vmem:[#allocation4 + $0xc50] sm:$0xff]
    %v3510 = vld [vmem:[#allocation4 + $0xc58] sm:$0xff]
    %v3511 = vld [vmem:[#allocation4 + $0xc60] sm:$0xff]
    %v3512 = vld [vmem:[#allocation4 + $0xc68] sm:$0xff]
    %v3513 = vld [vmem:[#allocation4 + $0xc70] sm:$0xff]
    %v3514 = vld [vmem:[#allocation4 + $0xc78] sm:$0xff]
    %v3515 = vld [vmem:[#allocation4 + $0xc80] sm:$0xff]
    %v3516 = vld [vmem:[#allocation4 + $0xc88] sm:$0xff]
    %v3517 = vld [vmem:[#allocation4 + $0xc90] sm:$0xff]
    %v3518 = vld [vmem:[#allocation4 + $0xc98] sm:$0xff]
    %v3519 = vld [vmem:[#allocation4 + $0xca0] sm:$0xff]
    %v3520 = vld [vmem:[#allocation4 + $0xca8] sm:$0xff]
    %v3521 = vld [vmem:[#allocation4 + $0xcb0] sm:$0xff]
    %v3522 = vld [vmem:[#allocation4 + $0xcb8] sm:$0xff]
    %v3523 = vld [vmem:[#allocation4 + $0xcc0] sm:$0xff]
    %v3524 = vld [vmem:[#allocation4 + $0xcc8] sm:$0xff]
    %v3525 = vld [vmem:[#allocation4 + $0xcd0] sm:$0xff]
    %v3526 = vld [vmem:[#allocation4 + $0xcd8] sm:$0xff]
    %v3527 = vld [vmem:[#allocation4 + $0xce0] sm:$0xff]
    %v3528 = vld [vmem:[#allocation4 + $0xce8] sm:$0xff]
    %v3529 = vld [vmem:[#allocation4 + $0xcf0] sm:$0xff]
    %v3530 = vld [vmem:[#allocation4 + $0xcf8] sm:$0xff]
    %v3531 = vld [vmem:[#allocation4 + $0xd00] sm:$0xff]
    %v3532 = vld [vmem:[#allocation4 + $0xd08] sm:$0xff]
    %v3533 = vld [vmem:[#allocation4 + $0xd10] sm:$0xff]
    %v3534 = vld [vmem:[#allocation4 + $0xd18] sm:$0xff]
    %v3535 = vld [vmem:[#allocation4 + $0xd20] sm:$0xff]
    %v3536 = vld [vmem:[#allocation4 + $0xd28] sm:$0xff]
    %v3537 = vld [vmem:[#allocation4 + $0xd30] sm:$0xff]
    %v3538 = vld [vmem:[#allocation4 + $0xd38] sm:$0xff]
    %v3539 = vld [vmem:[#allocation4 + $0xd40] sm:$0xff]
    %v3540 = vld [vmem:[#allocation4 + $0xd48] sm:$0xff]
    %v3541 = vld [vmem:[#allocation4 + $0xd50] sm:$0xff]
    %v3542 = vld [vmem:[#allocation4 + $0xd58] sm:$0xff]
    %v3543 = vld [vmem:[#allocation4 + $0xd60] sm:$0xff]
    %v3544 = vld [vmem:[#allocation4 + $0xd68] sm:$0xff]
    %v3545 = vld [vmem:[#allocation4 + $0xd70] sm:$0xff]
    %v3546 = vld [vmem:[#allocation4 + $0xd78] sm:$0xff]
    %v3547 = vld [vmem:[#allocation4 + $0xd80] sm:$0xff]
    %v3548 = vld [vmem:[#allocation4 + $0xd88] sm:$0xff]
    %v3549 = vld [vmem:[#allocation4 + $0xd90] sm:$0xff]
    %v3550 = vld [vmem:[#allocation4 + $0xd98] sm:$0xff]
    %v3551 = vld [vmem:[#allocation4 + $0xda0] sm:$0xff]
    %v3552 = vld [vmem:[#allocation4 + $0xda8] sm:$0xff]
    %v3553 = vld [vmem:[#allocation4 + $0xdb0] sm:$0xff]
    %v3554 = vld [vmem:[#allocation4 + $0xdb8] sm:$0xff]
    %v3555 = vld [vmem:[#allocation4 + $0xdc0] sm:$0xff]
    %v3556 = vld [vmem:[#allocation4 + $0xdc8] sm:$0xff]
    %v3557 = vld [vmem:[#allocation4 + $0xdd0] sm:$0xff]
    %v3558 = vld [vmem:[#allocation4 + $0xdd8] sm:$0xff]
    %v3559 = vld [vmem:[#allocation4 + $0xde0] sm:$0xff]
    %v3560 = vld [vmem:[#allocation4 + $0xde8] sm:$0xff]
    %v3561 = vld [vmem:[#allocation4 + $0xdf0] sm:$0xff]
    %v3562 = vld [vmem:[#allocation4 + $0xdf8] sm:$0xff]
    %v3563 = vld [vmem:[#allocation4 + $0xe00] sm:$0xff]
    %v3564 = vld [vmem:[#allocation4 + $0xe08] sm:$0xff]
    %v3565 = vld [vmem:[#allocation4 + $0xe10] sm:$0xff]
    %v3566 = vld [vmem:[#allocation4 + $0xe18] sm:$0xff]
    %v3567 = vld [vmem:[#allocation4 + $0xe20] sm:$0xff]
    %v3568 = vld [vmem:[#allocation4 + $0xe28] sm:$0xff]
    %v3569 = vld [vmem:[#allocation4 + $0xe30] sm:$0xff]
    %v3570 = vld [vmem:[#allocation4 + $0xe38] sm:$0xff]
    %v3571 = vld [vmem:[#allocation4 + $0xe40] sm:$0xff]
    %v3572 = vld [vmem:[#allocation4 + $0xe48] sm:$0xff]
    %v3573 = vld [vmem:[#allocation4 + $0xe50] sm:$0xff]
    %v3574 = vld [vmem:[#allocation4 + $0xe58] sm:$0xff]
    %v3575 = vld [vmem:[#allocation4 + $0xe60] sm:$0xff]
    %v3576 = vld [vmem:[#allocation4 + $0xe68] sm:$0xff]
    %v3577 = vld [vmem:[#allocation4 + $0xe70] sm:$0xff]
    %v3578 = vld [vmem:[#allocation4 + $0xe78] sm:$0xff]
    %v3579 = vld [vmem:[#allocation4 + $0xe80] sm:$0xff]
    %v3580 = vld [vmem:[#allocation4 + $0xe88] sm:$0xff]
    %v3581 = vld [vmem:[#allocation4 + $0xe90] sm:$0xff]
    %v3582 = vld [vmem:[#allocation4 + $0xe98] sm:$0xff]
    %v3583 = vld [vmem:[#allocation4 + $0xea0] sm:$0xff]
    %v3584 = vld [vmem:[#allocation4 + $0xea8] sm:$0xff]
    %v3585 = vld [vmem:[#allocation4 + $0xeb0] sm:$0xff]
    %v3586 = vld [vmem:[#allocation4 + $0xeb8] sm:$0xff]
    %v3587 = vld [vmem:[#allocation4 + $0xec0] sm:$0xff]
    %v3588 = vld [vmem:[#allocation4 + $0xec8] sm:$0xff]
    %v3589 = vld [vmem:[#allocation4 + $0xed0] sm:$0xff]
    %v3590 = vld [vmem:[#allocation4 + $0xed8] sm:$0xff]
    %v3591 = vld [vmem:[#allocation4 + $0xee0] sm:$0xff]
    %v3592 = vld [vmem:[#allocation4 + $0xee8] sm:$0xff]
    %v3593 = vld [vmem:[#allocation4 + $0xef0] sm:$0xff]
    %v3594 = vld [vmem:[#allocation4 + $0xef8] sm:$0xff]
    %v3595 = vld [vmem:[#allocation4 + $0xf00] sm:$0xff]
    %v3596 = vld [vmem:[#allocation4 + $0xf08] sm:$0xff]
    %v3597 = vld [vmem:[#allocation4 + $0xf10] sm:$0xff]
    %v3598 = vld [vmem:[#allocation4 + $0xf18] sm:$0xff]
    %v3599 = vld [vmem:[#allocation4 + $0xf20] sm:$0xff]
    %v3600 = vld [vmem:[#allocation4 + $0xf28] sm:$0xff]
    %v3601 = vld [vmem:[#allocation4 + $0xf30] sm:$0xff]
    %v3602 = vld [vmem:[#allocation4 + $0xf38] sm:$0xff]
    %v3603 = vld [vmem:[#allocation4 + $0xf40] sm:$0xff]
    %v3604 = vld [vmem:[#allocation4 + $0xf48] sm:$0xff]
    %v3605 = vld [vmem:[#allocation4 + $0xf50] sm:$0xff]
    %v3606 = vld [vmem:[#allocation4 + $0xf58] sm:$0xff]
    %v3607 = vld [vmem:[#allocation4 + $0xf60] sm:$0xff]
    %v3608 = vld [vmem:[#allocation4 + $0xf68] sm:$0xff]
    %v3609 = vld [vmem:[#allocation4 + $0xf70] sm:$0xff]
    %v3610 = vld [vmem:[#allocation4 + $0xf78] sm:$0xff]
    %v3611 = vld [vmem:[#allocation4 + $0xf80] sm:$0xff]
    %v3612 = vld [vmem:[#allocation4 + $0xf88] sm:$0xff]
    %v3613 = vld [vmem:[#allocation4 + $0xf90] sm:$0xff]
    %v3614 = vld [vmem:[#allocation4 + $0xf98] sm:$0xff]
    %v3615 = vld [vmem:[#allocation4 + $0xfa0] sm:$0xff]
    %v3616 = vld [vmem:[#allocation4 + $0xfa8] sm:$0xff]
    %v3617 = vld [vmem:[#allocation4 + $0xfb0] sm:$0xff]
    %v3618 = vld [vmem:[#allocation4 + $0xfb8] sm:$0xff]
    %v3619 = vld [vmem:[#allocation4 + $0xfc0] sm:$0xff]
    %v3620 = vld [vmem:[#allocation4 + $0xfc8] sm:$0xff]
    %v3621 = vld [vmem:[#allocation4 + $0xfd0] sm:$0xff]
    %v3622 = vld [vmem:[#allocation4 + $0xfd8] sm:$0xff]
    %v3623 = vld [vmem:[#allocation4 + $0xfe0] sm:$0xff]
    %v3624 = vld [vmem:[#allocation4 + $0xfe8] sm:$0xff]
    %v3625 = vld [vmem:[#allocation4 + $0xff0] sm:$0xff]
    %v3626 = vld [vmem:[#allocation4 + $0xff8] sm:$0xff]
    %v4139 = vunpack.c.l.b16 %v3115
    %v4140 = vunpack.c.h.b16 %v3115
    %v4141 = vunpack.c.l.b16 %v3116
    %v4142 = vunpack.c.h.b16 %v3116
    %v4143 = vunpack.c.l.b16 %v3117
    %v4144 = vunpack.c.h.b16 %v3117
    %v4145 = vunpack.c.l.b16 %v3118
    %v4146 = vunpack.c.h.b16 %v3118
    %v4147 = vunpack.c.l.b16 %v3119
    %v4148 = vunpack.c.h.b16 %v3119
    %v4149 = vunpack.c.l.b16 %v3120
    %v4150 = vunpack.c.h.b16 %v3120
    %v4151 = vunpack.c.l.b16 %v3121
    %v4152 = vunpack.c.h.b16 %v3121
    %v4153 = vunpack.c.l.b16 %v3122
    %v4154 = vunpack.c.h.b16 %v3122
    %v4155 = vunpack.c.l.b16 %v3123
    %v4156 = vunpack.c.h.b16 %v3123
    %v4157 = vunpack.c.l.b16 %v3124
    %v4158 = vunpack.c.h.b16 %v3124
    %v4159 = vunpack.c.l.b16 %v3125
    %v4160 = vunpack.c.h.b16 %v3125
    %v4161 = vunpack.c.l.b16 %v3126
    %v4162 = vunpack.c.h.b16 %v3126
    %v4163 = vunpack.c.l.b16 %v3127
    %v4164 = vunpack.c.h.b16 %v3127
    %v4165 = vunpack.c.l.b16 %v3128
    %v4166 = vunpack.c.h.b16 %v3128
    %v4167 = vunpack.c.l.b16 %v3129
    %v4168 = vunpack.c.h.b16 %v3129
    %v4169 = vunpack.c.l.b16 %v3130
    %v4170 = vunpack.c.h.b16 %v3130
    %v4171 = vunpack.c.l.b16 %v3131
    %v4172 = vunpack.c.h.b16 %v3131
    %v4173 = vunpack.c.l.b16 %v3132
    %v4174 = vunpack.c.h.b16 %v3132
    %v4175 = vunpack.c.l.b16 %v3133
    %v4176 = vunpack.c.h.b16 %v3133
    %v4177 = vunpack.c.l.b16 %v3134
    %v4178 = vunpack.c.h.b16 %v3134
    %v4179 = vunpack.c.l.b16 %v3135
    %v4180 = vunpack.c.h.b16 %v3135
    %v4181 = vunpack.c.l.b16 %v3136
    %v4182 = vunpack.c.h.b16 %v3136
    %v4183 = vunpack.c.l.b16 %v3137
    %v4184 = vunpack.c.h.b16 %v3137
    %v4185 = vunpack.c.l.b16 %v3138
    %v4186 = vunpack.c.h.b16 %v3138
    %v4187 = vunpack.c.l.b16 %v3139
    %v4188 = vunpack.c.h.b16 %v3139
    %v4189 = vunpack.c.l.b16 %v3140
    %v4190 = vunpack.c.h.b16 %v3140
    %v4191 = vunpack.c.l.b16 %v3141
    %v4192 = vunpack.c.h.b16 %v3141
    %v4193 = vunpack.c.l.b16 %v3142
    %v4194 = vunpack.c.h.b16 %v3142
    %v4195 = vunpack.c.l.b16 %v3143
    %v4196 = vunpack.c.h.b16 %v3143
    %v4197 = vunpack.c.l.b16 %v3144
    %v4198 = vunpack.c.h.b16 %v3144
    %v4199 = vunpack.c.l.b16 %v3145
    %v4200 = vunpack.c.h.b16 %v3145
    %v4201 = vunpack.c.l.b16 %v3146
    %v4202 = vunpack.c.h.b16 %v3146
    %v4203 = vunpack.c.l.b16 %v3147
    %v4204 = vunpack.c.h.b16 %v3147
    %v4205 = vunpack.c.l.b16 %v3148
    %v4206 = vunpack.c.h.b16 %v3148
    %v4207 = vunpack.c.l.b16 %v3149
    %v4208 = vunpack.c.h.b16 %v3149
    %v4209 = vunpack.c.l.b16 %v3150
    %v4210 = vunpack.c.h.b16 %v3150
    %v4211 = vunpack.c.l.b16 %v3151
    %v4212 = vunpack.c.h.b16 %v3151
    %v4213 = vunpack.c.l.b16 %v3152
    %v4214 = vunpack.c.h.b16 %v3152
    %v4215 = vunpack.c.l.b16 %v3153
    %v4216 = vunpack.c.h.b16 %v3153
    %v4217 = vunpack.c.l.b16 %v3154
    %v4218 = vunpack.c.h.b16 %v3154
    %v4219 = vunpack.c.l.b16 %v3155
    %v4220 = vunpack.c.h.b16 %v3155
    %v4221 = vunpack.c.l.b16 %v3156
    %v4222 = vunpack.c.h.b16 %v3156
    %v4223 = vunpack.c.l.b16 %v3157
    %v4224 = vunpack.c.h.b16 %v3157
    %v4225 = vunpack.c.l.b16 %v3158
    %v4226 = vunpack.c.h.b16 %v3158
    %v4227 = vunpack.c.l.b16 %v3159
    %v4228 = vunpack.c.h.b16 %v3159
    %v4229 = vunpack.c.l.b16 %v3160
    %v4230 = vunpack.c.h.b16 %v3160
    %v4231 = vunpack.c.l.b16 %v3161
    %v4232 = vunpack.c.h.b16 %v3161
    %v4233 = vunpack.c.l.b16 %v3162
    %v4234 = vunpack.c.h.b16 %v3162
    %v4235 = vunpack.c.l.b16 %v3163
    %v4236 = vunpack.c.h.b16 %v3163
    %v4237 = vunpack.c.l.b16 %v3164
    %v4238 = vunpack.c.h.b16 %v3164
    %v4239 = vunpack.c.l.b16 %v3165
    %v4240 = vunpack.c.h.b16 %v3165
    %v4241 = vunpack.c.l.b16 %v3166
    %v4242 = vunpack.c.h.b16 %v3166
    %v4243 = vunpack.c.l.b16 %v3167
    %v4244 = vunpack.c.h.b16 %v3167
    %v4245 = vunpack.c.l.b16 %v3168
    %v4246 = vunpack.c.h.b16 %v3168
    %v4247 = vunpack.c.l.b16 %v3169
    %v4248 = vunpack.c.h.b16 %v3169
    %v4249 = vunpack.c.l.b16 %v3170
    %v4250 = vunpack.c.h.b16 %v3170
    %v4251 = vunpack.c.l.b16 %v3171
    %v4252 = vunpack.c.h.b16 %v3171
    %v4253 = vunpack.c.l.b16 %v3172
    %v4254 = vunpack.c.h.b16 %v3172
    %v4255 = vunpack.c.l.b16 %v3173
    %v4256 = vunpack.c.h.b16 %v3173
    %v4257 = vunpack.c.l.b16 %v3174
    %v4258 = vunpack.c.h.b16 %v3174
    %v4259 = vunpack.c.l.b16 %v3175
    %v4260 = vunpack.c.h.b16 %v3175
    %v4261 = vunpack.c.l.b16 %v3176
    %v4262 = vunpack.c.h.b16 %v3176
    %v4263 = vunpack.c.l.b16 %v3177
    %v4264 = vunpack.c.h.b16 %v3177
    %v4265 = vunpack.c.l.b16 %v3178
    %v4266 = vunpack.c.h.b16 %v3178
    %v4267 = vunpack.c.l.b16 %v3179
    %v4268 = vunpack.c.h.b16 %v3179
    %v4269 = vunpack.c.l.b16 %v3180
    %v4270 = vunpack.c.h.b16 %v3180
    %v4271 = vunpack.c.l.b16 %v3181
    %v4272 = vunpack.c.h.b16 %v3181
    %v4273 = vunpack.c.l.b16 %v3182
    %v4274 = vunpack.c.h.b16 %v3182
    %v4275 = vunpack.c.l.b16 %v3183
    %v4276 = vunpack.c.h.b16 %v3183
    %v4277 = vunpack.c.l.b16 %v3184
    %v4278 = vunpack.c.h.b16 %v3184
    %v4279 = vunpack.c.l.b16 %v3185
    %v4280 = vunpack.c.h.b16 %v3185
    %v4281 = vunpack.c.l.b16 %v3186
    %v4282 = vunpack.c.h.b16 %v3186
    %v4283 = vunpack.c.l.b16 %v3187
    %v4284 = vunpack.c.h.b16 %v3187
    %v4285 = vunpack.c.l.b16 %v3188
    %v4286 = vunpack.c.h.b16 %v3188
    %v4287 = vunpack.c.l.b16 %v3189
    %v4288 = vunpack.c.h.b16 %v3189
    %v4289 = vunpack.c.l.b16 %v3190
    %v4290 = vunpack.c.h.b16 %v3190
    %v4291 = vunpack.c.l.b16 %v3191
    %v4292 = vunpack.c.h.b16 %v3191
    %v4293 = vunpack.c.l.b16 %v3192
    %v4294 = vunpack.c.h.b16 %v3192
    %v4295 = vunpack.c.l.b16 %v3193
    %v4296 = vunpack.c.h.b16 %v3193
    %v4297 = vunpack.c.l.b16 %v3194
    %v4298 = vunpack.c.h.b16 %v3194
    %v4299 = vunpack.c.l.b16 %v3195
    %v4300 = vunpack.c.h.b16 %v3195
    %v4301 = vunpack.c.l.b16 %v3196
    %v4302 = vunpack.c.h.b16 %v3196
    %v4303 = vunpack.c.l.b16 %v3197
    %v4304 = vunpack.c.h.b16 %v3197
    %v4305 = vunpack.c.l.b16 %v3198
    %v4306 = vunpack.c.h.b16 %v3198
    %v4307 = vunpack.c.l.b16 %v3199
    %v4308 = vunpack.c.h.b16 %v3199
    %v4309 = vunpack.c.l.b16 %v3200
    %v4310 = vunpack.c.h.b16 %v3200
    %v4311 = vunpack.c.l.b16 %v3201
    %v4312 = vunpack.c.h.b16 %v3201
    %v4313 = vunpack.c.l.b16 %v3202
    %v4314 = vunpack.c.h.b16 %v3202
    %v4315 = vunpack.c.l.b16 %v3203
    %v4316 = vunpack.c.h.b16 %v3203
    %v4317 = vunpack.c.l.b16 %v3204
    %v4318 = vunpack.c.h.b16 %v3204
    %v4319 = vunpack.c.l.b16 %v3205
    %v4320 = vunpack.c.h.b16 %v3205
    %v4321 = vunpack.c.l.b16 %v3206
    %v4322 = vunpack.c.h.b16 %v3206
    %v4323 = vunpack.c.l.b16 %v3207
    %v4324 = vunpack.c.h.b16 %v3207
    %v4325 = vunpack.c.l.b16 %v3208
    %v4326 = vunpack.c.h.b16 %v3208
    %v4327 = vunpack.c.l.b16 %v3209
    %v4328 = vunpack.c.h.b16 %v3209
    %v4329 = vunpack.c.l.b16 %v3210
    %v4330 = vunpack.c.h.b16 %v3210
    %v4331 = vunpack.c.l.b16 %v3211
    %v4332 = vunpack.c.h.b16 %v3211
    %v4333 = vunpack.c.l.b16 %v3212
    %v4334 = vunpack.c.h.b16 %v3212
    %v4335 = vunpack.c.l.b16 %v3213
    %v4336 = vunpack.c.h.b16 %v3213
    %v4337 = vunpack.c.l.b16 %v3214
    %v4338 = vunpack.c.h.b16 %v3214
    %v4339 = vunpack.c.l.b16 %v3215
    %v4340 = vunpack.c.h.b16 %v3215
    %v4341 = vunpack.c.l.b16 %v3216
    %v4342 = vunpack.c.h.b16 %v3216
    %v4343 = vunpack.c.l.b16 %v3217
    %v4344 = vunpack.c.h.b16 %v3217
    %v4345 = vunpack.c.l.b16 %v3218
    %v4346 = vunpack.c.h.b16 %v3218
    %v4347 = vunpack.c.l.b16 %v3219
    %v4348 = vunpack.c.h.b16 %v3219
    %v4349 = vunpack.c.l.b16 %v3220
    %v4350 = vunpack.c.h.b16 %v3220
    %v4351 = vunpack.c.l.b16 %v3221
    %v4352 = vunpack.c.h.b16 %v3221
    %v4353 = vunpack.c.l.b16 %v3222
    %v4354 = vunpack.c.h.b16 %v3222
    %v4355 = vunpack.c.l.b16 %v3223
    %v4356 = vunpack.c.h.b16 %v3223
    %v4357 = vunpack.c.l.b16 %v3224
    %v4358 = vunpack.c.h.b16 %v3224
    %v4359 = vunpack.c.l.b16 %v3225
    %v4360 = vunpack.c.h.b16 %v3225
    %v4361 = vunpack.c.l.b16 %v3226
    %v4362 = vunpack.c.h.b16 %v3226
    %v4363 = vunpack.c.l.b16 %v3227
    %v4364 = vunpack.c.h.b16 %v3227
    %v4365 = vunpack.c.l.b16 %v3228
    %v4366 = vunpack.c.h.b16 %v3228
    %v4367 = vunpack.c.l.b16 %v3229
    %v4368 = vunpack.c.h.b16 %v3229
    %v4369 = vunpack.c.l.b16 %v3230
    %v4370 = vunpack.c.h.b16 %v3230
    %v4371 = vunpack.c.l.b16 %v3231
    %v4372 = vunpack.c.h.b16 %v3231
    %v4373 = vunpack.c.l.b16 %v3232
    %v4374 = vunpack.c.h.b16 %v3232
    %v4375 = vunpack.c.l.b16 %v3233
    %v4376 = vunpack.c.h.b16 %v3233
    %v4377 = vunpack.c.l.b16 %v3234
    %v4378 = vunpack.c.h.b16 %v3234
    %v4379 = vunpack.c.l.b16 %v3235
    %v4380 = vunpack.c.h.b16 %v3235
    %v4381 = vunpack.c.l.b16 %v3236
    %v4382 = vunpack.c.h.b16 %v3236
    %v4383 = vunpack.c.l.b16 %v3237
    %v4384 = vunpack.c.h.b16 %v3237
    %v4385 = vunpack.c.l.b16 %v3238
    %v4386 = vunpack.c.h.b16 %v3238
    %v4387 = vunpack.c.l.b16 %v3239
    %v4388 = vunpack.c.h.b16 %v3239
    %v4389 = vunpack.c.l.b16 %v3240
    %v4390 = vunpack.c.h.b16 %v3240
    %v4391 = vunpack.c.l.b16 %v3241
    %v4392 = vunpack.c.h.b16 %v3241
    %v4393 = vunpack.c.l.b16 %v3242
    %v4394 = vunpack.c.h.b16 %v3242
    %v4395 = vunpack.c.l.b16 %v3243
    %v4396 = vunpack.c.h.b16 %v3243
    %v4397 = vunpack.c.l.b16 %v3244
    %v4398 = vunpack.c.h.b16 %v3244
    %v4399 = vunpack.c.l.b16 %v3245
    %v4400 = vunpack.c.h.b16 %v3245
    %v4401 = vunpack.c.l.b16 %v3246
    %v4402 = vunpack.c.h.b16 %v3246
    %v4403 = vunpack.c.l.b16 %v3247
    %v4404 = vunpack.c.h.b16 %v3247
    %v4405 = vunpack.c.l.b16 %v3248
    %v4406 = vunpack.c.h.b16 %v3248
    %v4407 = vunpack.c.l.b16 %v3249
    %v4408 = vunpack.c.h.b16 %v3249
    %v4409 = vunpack.c.l.b16 %v3250
    %v4410 = vunpack.c.h.b16 %v3250
    %v4411 = vunpack.c.l.b16 %v3251
    %v4412 = vunpack.c.h.b16 %v3251
    %v4413 = vunpack.c.l.b16 %v3252
    %v4414 = vunpack.c.h.b16 %v3252
    %v4415 = vunpack.c.l.b16 %v3253
    %v4416 = vunpack.c.h.b16 %v3253
    %v4417 = vunpack.c.l.b16 %v3254
    %v4418 = vunpack.c.h.b16 %v3254
    %v4419 = vunpack.c.l.b16 %v3255
    %v4420 = vunpack.c.h.b16 %v3255
    %v4421 = vunpack.c.l.b16 %v3256
    %v4422 = vunpack.c.h.b16 %v3256
    %v4423 = vunpack.c.l.b16 %v3257
    %v4424 = vunpack.c.h.b16 %v3257
    %v4425 = vunpack.c.l.b16 %v3258
    %v4426 = vunpack.c.h.b16 %v3258
    %v4427 = vunpack.c.l.b16 %v3259
    %v4428 = vunpack.c.h.b16 %v3259
    %v4429 = vunpack.c.l.b16 %v3260
    %v4430 = vunpack.c.h.b16 %v3260
    %v4431 = vunpack.c.l.b16 %v3261
    %v4432 = vunpack.c.h.b16 %v3261
    %v4433 = vunpack.c.l.b16 %v3262
    %v4434 = vunpack.c.h.b16 %v3262
    %v4435 = vunpack.c.l.b16 %v3263
    %v4436 = vunpack.c.h.b16 %v3263
    %v4437 = vunpack.c.l.b16 %v3264
    %v4438 = vunpack.c.h.b16 %v3264
    %v4439 = vunpack.c.l.b16 %v3265
    %v4440 = vunpack.c.h.b16 %v3265
    %v4441 = vunpack.c.l.b16 %v3266
    %v4442 = vunpack.c.h.b16 %v3266
    %v4443 = vunpack.c.l.b16 %v3267
    %v4444 = vunpack.c.h.b16 %v3267
    %v4445 = vunpack.c.l.b16 %v3268
    %v4446 = vunpack.c.h.b16 %v3268
    %v4447 = vunpack.c.l.b16 %v3269
    %v4448 = vunpack.c.h.b16 %v3269
    %v4449 = vunpack.c.l.b16 %v3270
    %v4450 = vunpack.c.h.b16 %v3270
    %v4451 = vunpack.c.l.b16 %v3271
    %v4452 = vunpack.c.h.b16 %v3271
    %v4453 = vunpack.c.l.b16 %v3272
    %v4454 = vunpack.c.h.b16 %v3272
    %v4455 = vunpack.c.l.b16 %v3273
    %v4456 = vunpack.c.h.b16 %v3273
    %v4457 = vunpack.c.l.b16 %v3274
    %v4458 = vunpack.c.h.b16 %v3274
    %v4459 = vunpack.c.l.b16 %v3275
    %v4460 = vunpack.c.h.b16 %v3275
    %v4461 = vunpack.c.l.b16 %v3276
    %v4462 = vunpack.c.h.b16 %v3276
    %v4463 = vunpack.c.l.b16 %v3277
    %v4464 = vunpack.c.h.b16 %v3277
    %v4465 = vunpack.c.l.b16 %v3278
    %v4466 = vunpack.c.h.b16 %v3278
    %v4467 = vunpack.c.l.b16 %v3279
    %v4468 = vunpack.c.h.b16 %v3279
    %v4469 = vunpack.c.l.b16 %v3280
    %v4470 = vunpack.c.h.b16 %v3280
    %v4471 = vunpack.c.l.b16 %v3281
    %v4472 = vunpack.c.h.b16 %v3281
    %v4473 = vunpack.c.l.b16 %v3282
    %v4474 = vunpack.c.h.b16 %v3282
    %v4475 = vunpack.c.l.b16 %v3283
    %v4476 = vunpack.c.h.b16 %v3283
    %v4477 = vunpack.c.l.b16 %v3284
    %v4478 = vunpack.c.h.b16 %v3284
    %v4479 = vunpack.c.l.b16 %v3285
    %v4480 = vunpack.c.h.b16 %v3285
    %v4481 = vunpack.c.l.b16 %v3286
    %v4482 = vunpack.c.h.b16 %v3286
    %v4483 = vunpack.c.l.b16 %v3287
    %v4484 = vunpack.c.h.b16 %v3287
    %v4485 = vunpack.c.l.b16 %v3288
    %v4486 = vunpack.c.h.b16 %v3288
    %v4487 = vunpack.c.l.b16 %v3289
    %v4488 = vunpack.c.h.b16 %v3289
    %v4489 = vunpack.c.l.b16 %v3290
    %v4490 = vunpack.c.h.b16 %v3290
    %v4491 = vunpack.c.l.b16 %v3291
    %v4492 = vunpack.c.h.b16 %v3291
    %v4493 = vunpack.c.l.b16 %v3292
    %v4494 = vunpack.c.h.b16 %v3292
    %v4495 = vunpack.c.l.b16 %v3293
    %v4496 = vunpack.c.h.b16 %v3293
    %v4497 = vunpack.c.l.b16 %v3294
    %v4498 = vunpack.c.h.b16 %v3294
    %v4499 = vunpack.c.l.b16 %v3295
    %v4500 = vunpack.c.h.b16 %v3295
    %v4501 = vunpack.c.l.b16 %v3296
    %v4502 = vunpack.c.h.b16 %v3296
    %v4503 = vunpack.c.l.b16 %v3297
    %v4504 = vunpack.c.h.b16 %v3297
    %v4505 = vunpack.c.l.b16 %v3298
    %v4506 = vunpack.c.h.b16 %v3298
    %v4507 = vunpack.c.l.b16 %v3299
    %v4508 = vunpack.c.h.b16 %v3299
    %v4509 = vunpack.c.l.b16 %v3300
    %v4510 = vunpack.c.h.b16 %v3300
    %v4511 = vunpack.c.l.b16 %v3301
    %v4512 = vunpack.c.h.b16 %v3301
    %v4513 = vunpack.c.l.b16 %v3302
    %v4514 = vunpack.c.h.b16 %v3302
    %v4515 = vunpack.c.l.b16 %v3303
    %v4516 = vunpack.c.h.b16 %v3303
    %v4517 = vunpack.c.l.b16 %v3304
    %v4518 = vunpack.c.h.b16 %v3304
    %v4519 = vunpack.c.l.b16 %v3305
    %v4520 = vunpack.c.h.b16 %v3305
    %v4521 = vunpack.c.l.b16 %v3306
    %v4522 = vunpack.c.h.b16 %v3306
    %v4523 = vunpack.c.l.b16 %v3307
    %v4524 = vunpack.c.h.b16 %v3307
    %v4525 = vunpack.c.l.b16 %v3308
    %v4526 = vunpack.c.h.b16 %v3308
    %v4527 = vunpack.c.l.b16 %v3309
    %v4528 = vunpack.c.h.b16 %v3309
    %v4529 = vunpack.c.l.b16 %v3310
    %v4530 = vunpack.c.h.b16 %v3310
    %v4531 = vunpack.c.l.b16 %v3311
    %v4532 = vunpack.c.h.b16 %v3311
    %v4533 = vunpack.c.l.b16 %v3312
    %v4534 = vunpack.c.h.b16 %v3312
    %v4535 = vunpack.c.l.b16 %v3313
    %v4536 = vunpack.c.h.b16 %v3313
    %v4537 = vunpack.c.l.b16 %v3314
    %v4538 = vunpack.c.h.b16 %v3314
    %v4539 = vunpack.c.l.b16 %v3315
    %v4540 = vunpack.c.h.b16 %v3315
    %v4541 = vunpack.c.l.b16 %v3316
    %v4542 = vunpack.c.h.b16 %v3316
    %v4543 = vunpack.c.l.b16 %v3317
    %v4544 = vunpack.c.h.b16 %v3317
    %v4545 = vunpack.c.l.b16 %v3318
    %v4546 = vunpack.c.h.b16 %v3318
    %v4547 = vunpack.c.l.b16 %v3319
    %v4548 = vunpack.c.h.b16 %v3319
    %v4549 = vunpack.c.l.b16 %v3320
    %v4550 = vunpack.c.h.b16 %v3320
    %v4551 = vunpack.c.l.b16 %v3321
    %v4552 = vunpack.c.h.b16 %v3321
    %v4553 = vunpack.c.l.b16 %v3322
    %v4554 = vunpack.c.h.b16 %v3322
    %v4555 = vunpack.c.l.b16 %v3323
    %v4556 = vunpack.c.h.b16 %v3323
    %v4557 = vunpack.c.l.b16 %v3324
    %v4558 = vunpack.c.h.b16 %v3324
    %v4559 = vunpack.c.l.b16 %v3325
    %v4560 = vunpack.c.h.b16 %v3325
    %v4561 = vunpack.c.l.b16 %v3326
    %v4562 = vunpack.c.h.b16 %v3326
    %v4563 = vunpack.c.l.b16 %v3327
    %v4564 = vunpack.c.h.b16 %v3327
    %v4565 = vunpack.c.l.b16 %v3328
    %v4566 = vunpack.c.h.b16 %v3328
    %v4567 = vunpack.c.l.b16 %v3329
    %v4568 = vunpack.c.h.b16 %v3329
    %v4569 = vunpack.c.l.b16 %v3330
    %v4570 = vunpack.c.h.b16 %v3330
    %v4571 = vunpack.c.l.b16 %v3331
    %v4572 = vunpack.c.h.b16 %v3331
    %v4573 = vunpack.c.l.b16 %v3332
    %v4574 = vunpack.c.h.b16 %v3332
    %v4575 = vunpack.c.l.b16 %v3333
    %v4576 = vunpack.c.h.b16 %v3333
    %v4577 = vunpack.c.l.b16 %v3334
    %v4578 = vunpack.c.h.b16 %v3334
    %v4579 = vunpack.c.l.b16 %v3335
    %v4580 = vunpack.c.h.b16 %v3335
    %v4581 = vunpack.c.l.b16 %v3336
    %v4582 = vunpack.c.h.b16 %v3336
    %v4583 = vunpack.c.l.b16 %v3337
    %v4584 = vunpack.c.h.b16 %v3337
    %v4585 = vunpack.c.l.b16 %v3338
    %v4586 = vunpack.c.h.b16 %v3338
    %v4587 = vunpack.c.l.b16 %v3339
    %v4588 = vunpack.c.h.b16 %v3339
    %v4589 = vunpack.c.l.b16 %v3340
    %v4590 = vunpack.c.h.b16 %v3340
    %v4591 = vunpack.c.l.b16 %v3341
    %v4592 = vunpack.c.h.b16 %v3341
    %v4593 = vunpack.c.l.b16 %v3342
    %v4594 = vunpack.c.h.b16 %v3342
    %v4595 = vunpack.c.l.b16 %v3343
    %v4596 = vunpack.c.h.b16 %v3343
    %v4597 = vunpack.c.l.b16 %v3344
    %v4598 = vunpack.c.h.b16 %v3344
    %v4599 = vunpack.c.l.b16 %v3345
    %v4600 = vunpack.c.h.b16 %v3345
    %v4601 = vunpack.c.l.b16 %v3346
    %v4602 = vunpack.c.h.b16 %v3346
    %v4603 = vunpack.c.l.b16 %v3347
    %v4604 = vunpack.c.h.b16 %v3347
    %v4605 = vunpack.c.l.b16 %v3348
    %v4606 = vunpack.c.h.b16 %v3348
    %v4607 = vunpack.c.l.b16 %v3349
    %v4608 = vunpack.c.h.b16 %v3349
    %v4609 = vunpack.c.l.b16 %v3350
    %v4610 = vunpack.c.h.b16 %v3350
    %v4611 = vunpack.c.l.b16 %v3351
    %v4612 = vunpack.c.h.b16 %v3351
    %v4613 = vunpack.c.l.b16 %v3352
    %v4614 = vunpack.c.h.b16 %v3352
    %v4615 = vunpack.c.l.b16 %v3353
    %v4616 = vunpack.c.h.b16 %v3353
    %v4617 = vunpack.c.l.b16 %v3354
    %v4618 = vunpack.c.h.b16 %v3354
    %v4619 = vunpack.c.l.b16 %v3355
    %v4620 = vunpack.c.h.b16 %v3355
    %v4621 = vunpack.c.l.b16 %v3356
    %v4622 = vunpack.c.h.b16 %v3356
    %v4623 = vunpack.c.l.b16 %v3357
    %v4624 = vunpack.c.h.b16 %v3357
    %v4625 = vunpack.c.l.b16 %v3358
    %v4626 = vunpack.c.h.b16 %v3358
    %v4627 = vunpack.c.l.b16 %v3359
    %v4628 = vunpack.c.h.b16 %v3359
    %v4629 = vunpack.c.l.b16 %v3360
    %v4630 = vunpack.c.h.b16 %v3360
    %v4631 = vunpack.c.l.b16 %v3361
    %v4632 = vunpack.c.h.b16 %v3361
    %v4633 = vunpack.c.l.b16 %v3362
    %v4634 = vunpack.c.h.b16 %v3362
    %v4635 = vunpack.c.l.b16 %v3363
    %v4636 = vunpack.c.h.b16 %v3363
    %v4637 = vunpack.c.l.b16 %v3364
    %v4638 = vunpack.c.h.b16 %v3364
    %v4639 = vunpack.c.l.b16 %v3365
    %v4640 = vunpack.c.h.b16 %v3365
    %v4641 = vunpack.c.l.b16 %v3366
    %v4642 = vunpack.c.h.b16 %v3366
    %v4643 = vunpack.c.l.b16 %v3367
    %v4644 = vunpack.c.h.b16 %v3367
    %v4645 = vunpack.c.l.b16 %v3368
    %v4646 = vunpack.c.h.b16 %v3368
    %v4647 = vunpack.c.l.b16 %v3369
    %v4648 = vunpack.c.h.b16 %v3369
    %v4649 = vunpack.c.l.b16 %v3370
    %v4650 = vunpack.c.h.b16 %v3370
    %v4651 = vunpack.c.l.b16 %v3371
    %v4652 = vunpack.c.h.b16 %v3371
    %v4653 = vunpack.c.l.b16 %v3372
    %v4654 = vunpack.c.h.b16 %v3372
    %v4655 = vunpack.c.l.b16 %v3373
    %v4656 = vunpack.c.h.b16 %v3373
    %v4657 = vunpack.c.l.b16 %v3374
    %v4658 = vunpack.c.h.b16 %v3374
    %v4659 = vunpack.c.l.b16 %v3375
    %v4660 = vunpack.c.h.b16 %v3375
    %v4661 = vunpack.c.l.b16 %v3376
    %v4662 = vunpack.c.h.b16 %v3376
    %v4663 = vunpack.c.l.b16 %v3377
    %v4664 = vunpack.c.h.b16 %v3377
    %v4665 = vunpack.c.l.b16 %v3378
    %v4666 = vunpack.c.h.b16 %v3378
    %v4667 = vunpack.c.l.b16 %v3379
    %v4668 = vunpack.c.h.b16 %v3379
    %v4669 = vunpack.c.l.b16 %v3380
    %v4670 = vunpack.c.h.b16 %v3380
    %v4671 = vunpack.c.l.b16 %v3381
    %v4672 = vunpack.c.h.b16 %v3381
    %v4673 = vunpack.c.l.b16 %v3382
    %v4674 = vunpack.c.h.b16 %v3382
    %v4675 = vunpack.c.l.b16 %v3383
    %v4676 = vunpack.c.h.b16 %v3383
    %v4677 = vunpack.c.l.b16 %v3384
    %v4678 = vunpack.c.h.b16 %v3384
    %v4679 = vunpack.c.l.b16 %v3385
    %v4680 = vunpack.c.h.b16 %v3385
    %v4681 = vunpack.c.l.b16 %v3386
    %v4682 = vunpack.c.h.b16 %v3386
    %v4683 = vunpack.c.l.b16 %v3387
    %v4684 = vunpack.c.h.b16 %v3387
    %v4685 = vunpack.c.l.b16 %v3388
    %v4686 = vunpack.c.h.b16 %v3388
    %v4687 = vunpack.c.l.b16 %v3389
    %v4688 = vunpack.c.h.b16 %v3389
    %v4689 = vunpack.c.l.b16 %v3390
    %v4690 = vunpack.c.h.b16 %v3390
    %v4691 = vunpack.c.l.b16 %v3391
    %v4692 = vunpack.c.h.b16 %v3391
    %v4693 = vunpack.c.l.b16 %v3392
    %v4694 = vunpack.c.h.b16 %v3392
    %v4695 = vunpack.c.l.b16 %v3393
    %v4696 = vunpack.c.h.b16 %v3393
    %v4697 = vunpack.c.l.b16 %v3394
    %v4698 = vunpack.c.h.b16 %v3394
    %v4699 = vunpack.c.l.b16 %v3395
    %v4700 = vunpack.c.h.b16 %v3395
    %v4701 = vunpack.c.l.b16 %v3396
    %v4702 = vunpack.c.h.b16 %v3396
    %v4703 = vunpack.c.l.b16 %v3397
    %v4704 = vunpack.c.h.b16 %v3397
    %v4705 = vunpack.c.l.b16 %v3398
    %v4706 = vunpack.c.h.b16 %v3398
    %v4707 = vunpack.c.l.b16 %v3399
    %v4708 = vunpack.c.h.b16 %v3399
    %v4709 = vunpack.c.l.b16 %v3400
    %v4710 = vunpack.c.h.b16 %v3400
    %v4711 = vunpack.c.l.b16 %v3401
    %v4712 = vunpack.c.h.b16 %v3401
    %v4713 = vunpack.c.l.b16 %v3402
    %v4714 = vunpack.c.h.b16 %v3402
    %v4715 = vunpack.c.l.b16 %v3403
    %v4716 = vunpack.c.h.b16 %v3403
    %v4717 = vunpack.c.l.b16 %v3404
    %v4718 = vunpack.c.h.b16 %v3404
    %v4719 = vunpack.c.l.b16 %v3405
    %v4720 = vunpack.c.h.b16 %v3405
    %v4721 = vunpack.c.l.b16 %v3406
    %v4722 = vunpack.c.h.b16 %v3406
    %v4723 = vunpack.c.l.b16 %v3407
    %v4724 = vunpack.c.h.b16 %v3407
    %v4725 = vunpack.c.l.b16 %v3408
    %v4726 = vunpack.c.h.b16 %v3408
    %v4727 = vunpack.c.l.b16 %v3409
    %v4728 = vunpack.c.h.b16 %v3409
    %v4729 = vunpack.c.l.b16 %v3410
    %v4730 = vunpack.c.h.b16 %v3410
    %v4731 = vunpack.c.l.b16 %v3411
    %v4732 = vunpack.c.h.b16 %v3411
    %v4733 = vunpack.c.l.b16 %v3412
    %v4734 = vunpack.c.h.b16 %v3412
    %v4735 = vunpack.c.l.b16 %v3413
    %v4736 = vunpack.c.h.b16 %v3413
    %v4737 = vunpack.c.l.b16 %v3414
    %v4738 = vunpack.c.h.b16 %v3414
    %v4739 = vunpack.c.l.b16 %v3415
    %v4740 = vunpack.c.h.b16 %v3415
    %v4741 = vunpack.c.l.b16 %v3416
    %v4742 = vunpack.c.h.b16 %v3416
    %v4743 = vunpack.c.l.b16 %v3417
    %v4744 = vunpack.c.h.b16 %v3417
    %v4745 = vunpack.c.l.b16 %v3418
    %v4746 = vunpack.c.h.b16 %v3418
    %v4747 = vunpack.c.l.b16 %v3419
    %v4748 = vunpack.c.h.b16 %v3419
    %v4749 = vunpack.c.l.b16 %v3420
    %v4750 = vunpack.c.h.b16 %v3420
    %v4751 = vunpack.c.l.b16 %v3421
    %v4752 = vunpack.c.h.b16 %v3421
    %v4753 = vunpack.c.l.b16 %v3422
    %v4754 = vunpack.c.h.b16 %v3422
    %v4755 = vunpack.c.l.b16 %v3423
    %v4756 = vunpack.c.h.b16 %v3423
    %v4757 = vunpack.c.l.b16 %v3424
    %v4758 = vunpack.c.h.b16 %v3424
    %v4759 = vunpack.c.l.b16 %v3425
    %v4760 = vunpack.c.h.b16 %v3425
    %v4761 = vunpack.c.l.b16 %v3426
    %v4762 = vunpack.c.h.b16 %v3426
    %v4763 = vunpack.c.l.b16 %v3427
    %v4764 = vunpack.c.h.b16 %v3427
    %v4765 = vunpack.c.l.b16 %v3428
    %v4766 = vunpack.c.h.b16 %v3428
    %v4767 = vunpack.c.l.b16 %v3429
    %v4768 = vunpack.c.h.b16 %v3429
    %v4769 = vunpack.c.l.b16 %v3430
    %v4770 = vunpack.c.h.b16 %v3430
    %v4771 = vunpack.c.l.b16 %v3431
    %v4772 = vunpack.c.h.b16 %v3431
    %v4773 = vunpack.c.l.b16 %v3432
    %v4774 = vunpack.c.h.b16 %v3432
    %v4775 = vunpack.c.l.b16 %v3433
    %v4776 = vunpack.c.h.b16 %v3433
    %v4777 = vunpack.c.l.b16 %v3434
    %v4778 = vunpack.c.h.b16 %v3434
    %v4779 = vunpack.c.l.b16 %v3435
    %v4780 = vunpack.c.h.b16 %v3435
    %v4781 = vunpack.c.l.b16 %v3436
    %v4782 = vunpack.c.h.b16 %v3436
    %v4783 = vunpack.c.l.b16 %v3437
    %v4784 = vunpack.c.h.b16 %v3437
    %v4785 = vunpack.c.l.b16 %v3438
    %v4786 = vunpack.c.h.b16 %v3438
    %v4787 = vunpack.c.l.b16 %v3439
    %v4788 = vunpack.c.h.b16 %v3439
    %v4789 = vunpack.c.l.b16 %v3440
    %v4790 = vunpack.c.h.b16 %v3440
    %v4791 = vunpack.c.l.b16 %v3441
    %v4792 = vunpack.c.h.b16 %v3441
    %v4793 = vunpack.c.l.b16 %v3442
    %v4794 = vunpack.c.h.b16 %v3442
    %v4795 = vunpack.c.l.b16 %v3443
    %v4796 = vunpack.c.h.b16 %v3443
    %v4797 = vunpack.c.l.b16 %v3444
    %v4798 = vunpack.c.h.b16 %v3444
    %v4799 = vunpack.c.l.b16 %v3445
    %v4800 = vunpack.c.h.b16 %v3445
    %v4801 = vunpack.c.l.b16 %v3446
    %v4802 = vunpack.c.h.b16 %v3446
    %v4803 = vunpack.c.l.b16 %v3447
    %v4804 = vunpack.c.h.b16 %v3447
    %v4805 = vunpack.c.l.b16 %v3448
    %v4806 = vunpack.c.h.b16 %v3448
    %v4807 = vunpack.c.l.b16 %v3449
    %v4808 = vunpack.c.h.b16 %v3449
    %v4809 = vunpack.c.l.b16 %v3450
    %v4810 = vunpack.c.h.b16 %v3450
    %v4811 = vunpack.c.l.b16 %v3451
    %v4812 = vunpack.c.h.b16 %v3451
    %v4813 = vunpack.c.l.b16 %v3452
    %v4814 = vunpack.c.h.b16 %v3452
    %v4815 = vunpack.c.l.b16 %v3453
    %v4816 = vunpack.c.h.b16 %v3453
    %v4817 = vunpack.c.l.b16 %v3454
    %v4818 = vunpack.c.h.b16 %v3454
    %v4819 = vunpack.c.l.b16 %v3455
    %v4820 = vunpack.c.h.b16 %v3455
    %v4821 = vunpack.c.l.b16 %v3456
    %v4822 = vunpack.c.h.b16 %v3456
    %v4823 = vunpack.c.l.b16 %v3457
    %v4824 = vunpack.c.h.b16 %v3457
    %v4825 = vunpack.c.l.b16 %v3458
    %v4826 = vunpack.c.h.b16 %v3458
    %v4827 = vunpack.c.l.b16 %v3459
    %v4828 = vunpack.c.h.b16 %v3459
    %v4829 = vunpack.c.l.b16 %v3460
    %v4830 = vunpack.c.h.b16 %v3460
    %v4831 = vunpack.c.l.b16 %v3461
    %v4832 = vunpack.c.h.b16 %v3461
    %v4833 = vunpack.c.l.b16 %v3462
    %v4834 = vunpack.c.h.b16 %v3462
    %v4835 = vunpack.c.l.b16 %v3463
    %v4836 = vunpack.c.h.b16 %v3463
    %v4837 = vunpack.c.l.b16 %v3464
    %v4838 = vunpack.c.h.b16 %v3464
    %v4839 = vunpack.c.l.b16 %v3465
    %v4840 = vunpack.c.h.b16 %v3465
    %v4841 = vunpack.c.l.b16 %v3466
    %v4842 = vunpack.c.h.b16 %v3466
    %v4843 = vunpack.c.l.b16 %v3467
    %v4844 = vunpack.c.h.b16 %v3467
    %v4845 = vunpack.c.l.b16 %v3468
    %v4846 = vunpack.c.h.b16 %v3468
    %v4847 = vunpack.c.l.b16 %v3469
    %v4848 = vunpack.c.h.b16 %v3469
    %v4849 = vunpack.c.l.b16 %v3470
    %v4850 = vunpack.c.h.b16 %v3470
    %v4851 = vunpack.c.l.b16 %v3471
    %v4852 = vunpack.c.h.b16 %v3471
    %v4853 = vunpack.c.l.b16 %v3472
    %v4854 = vunpack.c.h.b16 %v3472
    %v4855 = vunpack.c.l.b16 %v3473
    %v4856 = vunpack.c.h.b16 %v3473
    %v4857 = vunpack.c.l.b16 %v3474
    %v4858 = vunpack.c.h.b16 %v3474
    %v4859 = vunpack.c.l.b16 %v3475
    %v4860 = vunpack.c.h.b16 %v3475
    %v4861 = vunpack.c.l.b16 %v3476
    %v4862 = vunpack.c.h.b16 %v3476
    %v4863 = vunpack.c.l.b16 %v3477
    %v4864 = vunpack.c.h.b16 %v3477
    %v4865 = vunpack.c.l.b16 %v3478
    %v4866 = vunpack.c.h.b16 %v3478
    %v4867 = vunpack.c.l.b16 %v3479
    %v4868 = vunpack.c.h.b16 %v3479
    %v4869 = vunpack.c.l.b16 %v3480
    %v4870 = vunpack.c.h.b16 %v3480
    %v4871 = vunpack.c.l.b16 %v3481
    %v4872 = vunpack.c.h.b16 %v3481
    %v4873 = vunpack.c.l.b16 %v3482
    %v4874 = vunpack.c.h.b16 %v3482
    %v4875 = vunpack.c.l.b16 %v3483
    %v4876 = vunpack.c.h.b16 %v3483
    %v4877 = vunpack.c.l.b16 %v3484
    %v4878 = vunpack.c.h.b16 %v3484
    %v4879 = vunpack.c.l.b16 %v3485
    %v4880 = vunpack.c.h.b16 %v3485
    %v4881 = vunpack.c.l.b16 %v3486
    %v4882 = vunpack.c.h.b16 %v3486
    %v4883 = vunpack.c.l.b16 %v3487
    %v4884 = vunpack.c.h.b16 %v3487
    %v4885 = vunpack.c.l.b16 %v3488
    %v4886 = vunpack.c.h.b16 %v3488
    %v4887 = vunpack.c.l.b16 %v3489
    %v4888 = vunpack.c.h.b16 %v3489
    %v4889 = vunpack.c.l.b16 %v3490
    %v4890 = vunpack.c.h.b16 %v3490
    %v4891 = vunpack.c.l.b16 %v3491
    %v4892 = vunpack.c.h.b16 %v3491
    %v4893 = vunpack.c.l.b16 %v3492
    %v4894 = vunpack.c.h.b16 %v3492
    %v4895 = vunpack.c.l.b16 %v3493
    %v4896 = vunpack.c.h.b16 %v3493
    %v4897 = vunpack.c.l.b16 %v3494
    %v4898 = vunpack.c.h.b16 %v3494
    %v4899 = vunpack.c.l.b16 %v3495
    %v4900 = vunpack.c.h.b16 %v3495
    %v4901 = vunpack.c.l.b16 %v3496
    %v4902 = vunpack.c.h.b16 %v3496
    %v4903 = vunpack.c.l.b16 %v3497
    %v4904 = vunpack.c.h.b16 %v3497
    %v4905 = vunpack.c.l.b16 %v3498
    %v4906 = vunpack.c.h.b16 %v3498
    %v4907 = vunpack.c.l.b16 %v3499
    %v4908 = vunpack.c.h.b16 %v3499
    %v4909 = vunpack.c.l.b16 %v3500
    %v4910 = vunpack.c.h.b16 %v3500
    %v4911 = vunpack.c.l.b16 %v3501
    %v4912 = vunpack.c.h.b16 %v3501
    %v4913 = vunpack.c.l.b16 %v3502
    %v4914 = vunpack.c.h.b16 %v3502
    %v4915 = vunpack.c.l.b16 %v3503
    %v4916 = vunpack.c.h.b16 %v3503
    %v4917 = vunpack.c.l.b16 %v3504
    %v4918 = vunpack.c.h.b16 %v3504
    %v4919 = vunpack.c.l.b16 %v3505
    %v4920 = vunpack.c.h.b16 %v3505
    %v4921 = vunpack.c.l.b16 %v3506
    %v4922 = vunpack.c.h.b16 %v3506
    %v4923 = vunpack.c.l.b16 %v3507
    %v4924 = vunpack.c.h.b16 %v3507
    %v4925 = vunpack.c.l.b16 %v3508
    %v4926 = vunpack.c.h.b16 %v3508
    %v4927 = vunpack.c.l.b16 %v3509
    %v4928 = vunpack.c.h.b16 %v3509
    %v4929 = vunpack.c.l.b16 %v3510
    %v4930 = vunpack.c.h.b16 %v3510
    %v4931 = vunpack.c.l.b16 %v3511
    %v4932 = vunpack.c.h.b16 %v3511
    %v4933 = vunpack.c.l.b16 %v3512
    %v4934 = vunpack.c.h.b16 %v3512
    %v4935 = vunpack.c.l.b16 %v3513
    %v4936 = vunpack.c.h.b16 %v3513
    %v4937 = vunpack.c.l.b16 %v3514
    %v4938 = vunpack.c.h.b16 %v3514
    %v4939 = vunpack.c.l.b16 %v3515
    %v4940 = vunpack.c.h.b16 %v3515
    %v4941 = vunpack.c.l.b16 %v3516
    %v4942 = vunpack.c.h.b16 %v3516
    %v4943 = vunpack.c.l.b16 %v3517
    %v4944 = vunpack.c.h.b16 %v3517
    %v4945 = vunpack.c.l.b16 %v3518
    %v4946 = vunpack.c.h.b16 %v3518
    %v4947 = vunpack.c.l.b16 %v3519
    %v4948 = vunpack.c.h.b16 %v3519
    %v4949 = vunpack.c.l.b16 %v3520
    %v4950 = vunpack.c.h.b16 %v3520
    %v4951 = vunpack.c.l.b16 %v3521
    %v4952 = vunpack.c.h.b16 %v3521
    %v4953 = vunpack.c.l.b16 %v3522
    %v4954 = vunpack.c.h.b16 %v3522
    %v4955 = vunpack.c.l.b16 %v3523
    %v4956 = vunpack.c.h.b16 %v3523
    %v4957 = vunpack.c.l.b16 %v3524
    %v4958 = vunpack.c.h.b16 %v3524
    %v4959 = vunpack.c.l.b16 %v3525
    %v4960 = vunpack.c.h.b16 %v3525
    %v4961 = vunpack.c.l.b16 %v3526
    %v4962 = vunpack.c.h.b16 %v3526
    %v4963 = vunpack.c.l.b16 %v3527
    %v4964 = vunpack.c.h.b16 %v3527
    %v4965 = vunpack.c.l.b16 %v3528
    %v4966 = vunpack.c.h.b16 %v3528
    %v4967 = vunpack.c.l.b16 %v3529
    %v4968 = vunpack.c.h.b16 %v3529
    %v4969 = vunpack.c.l.b16 %v3530
    %v4970 = vunpack.c.h.b16 %v3530
    %v4971 = vunpack.c.l.b16 %v3531
    %v4972 = vunpack.c.h.b16 %v3531
    %v4973 = vunpack.c.l.b16 %v3532
    %v4974 = vunpack.c.h.b16 %v3532
    %v4975 = vunpack.c.l.b16 %v3533
    %v4976 = vunpack.c.h.b16 %v3533
    %v4977 = vunpack.c.l.b16 %v3534
    %v4978 = vunpack.c.h.b16 %v3534
    %v4979 = vunpack.c.l.b16 %v3535
    %v4980 = vunpack.c.h.b16 %v3535
    %v4981 = vunpack.c.l.b16 %v3536
    %v4982 = vunpack.c.h.b16 %v3536
    %v4983 = vunpack.c.l.b16 %v3537
    %v4984 = vunpack.c.h.b16 %v3537
    %v4985 = vunpack.c.l.b16 %v3538
    %v4986 = vunpack.c.h.b16 %v3538
    %v4987 = vunpack.c.l.b16 %v3539
    %v4988 = vunpack.c.h.b16 %v3539
    %v4989 = vunpack.c.l.b16 %v3540
    %v4990 = vunpack.c.h.b16 %v3540
    %v4991 = vunpack.c.l.b16 %v3541
    %v4992 = vunpack.c.h.b16 %v3541
    %v4993 = vunpack.c.l.b16 %v3542
    %v4994 = vunpack.c.h.b16 %v3542
    %v4995 = vunpack.c.l.b16 %v3543
    %v4996 = vunpack.c.h.b16 %v3543
    %v4997 = vunpack.c.l.b16 %v3544
    %v4998 = vunpack.c.h.b16 %v3544
    %v4999 = vunpack.c.l.b16 %v3545
    %v5000 = vunpack.c.h.b16 %v3545
    %v5001 = vunpack.c.l.b16 %v3546
    %v5002 = vunpack.c.h.b16 %v3546
    %v5003 = vunpack.c.l.b16 %v3547
    %v5004 = vunpack.c.h.b16 %v3547
    %v5005 = vunpack.c.l.b16 %v3548
    %v5006 = vunpack.c.h.b16 %v3548
    %v5007 = vunpack.c.l.b16 %v3549
    %v5008 = vunpack.c.h.b16 %v3549
    %v5009 = vunpack.c.l.b16 %v3550
    %v5010 = vunpack.c.h.b16 %v3550
    %v5011 = vunpack.c.l.b16 %v3551
    %v5012 = vunpack.c.h.b16 %v3551
    %v5013 = vunpack.c.l.b16 %v3552
    %v5014 = vunpack.c.h.b16 %v3552
    %v5015 = vunpack.c.l.b16 %v3553
    %v5016 = vunpack.c.h.b16 %v3553
    %v5017 = vunpack.c.l.b16 %v3554
    %v5018 = vunpack.c.h.b16 %v3554
    %v5019 = vunpack.c.l.b16 %v3555
    %v5020 = vunpack.c.h.b16 %v3555
    %v5021 = vunpack.c.l.b16 %v3556
    %v5022 = vunpack.c.h.b16 %v3556
    %v5023 = vunpack.c.l.b16 %v3557
    %v5024 = vunpack.c.h.b16 %v3557
    %v5025 = vunpack.c.l.b16 %v3558
    %v5026 = vunpack.c.h.b16 %v3558
    %v5027 = vunpack.c.l.b16 %v3559
    %v5028 = vunpack.c.h.b16 %v3559
    %v5029 = vunpack.c.l.b16 %v3560
    %v5030 = vunpack.c.h.b16 %v3560
    %v5031 = vunpack.c.l.b16 %v3561
    %v5032 = vunpack.c.h.b16 %v3561
    %v5033 = vunpack.c.l.b16 %v3562
    %v5034 = vunpack.c.h.b16 %v3562
    %v5035 = vunpack.c.l.b16 %v3563
    %v5036 = vunpack.c.h.b16 %v3563
    %v5037 = vunpack.c.l.b16 %v3564
    %v5038 = vunpack.c.h.b16 %v3564
    %v5039 = vunpack.c.l.b16 %v3565
    %v5040 = vunpack.c.h.b16 %v3565
    %v5041 = vunpack.c.l.b16 %v3566
    %v5042 = vunpack.c.h.b16 %v3566
    %v5043 = vunpack.c.l.b16 %v3567
    %v5044 = vunpack.c.h.b16 %v3567
    %v5045 = vunpack.c.l.b16 %v3568
    %v5046 = vunpack.c.h.b16 %v3568
    %v5047 = vunpack.c.l.b16 %v3569
    %v5048 = vunpack.c.h.b16 %v3569
    %v5049 = vunpack.c.l.b16 %v3570
    %v5050 = vunpack.c.h.b16 %v3570
    %v5051 = vunpack.c.l.b16 %v3571
    %v5052 = vunpack.c.h.b16 %v3571
    %v5053 = vunpack.c.l.b16 %v3572
    %v5054 = vunpack.c.h.b16 %v3572
    %v5055 = vunpack.c.l.b16 %v3573
    %v5056 = vunpack.c.h.b16 %v3573
    %v5057 = vunpack.c.l.b16 %v3574
    %v5058 = vunpack.c.h.b16 %v3574
    %v5059 = vunpack.c.l.b16 %v3575
    %v5060 = vunpack.c.h.b16 %v3575
    %v5061 = vunpack.c.l.b16 %v3576
    %v5062 = vunpack.c.h.b16 %v3576
    %v5063 = vunpack.c.l.b16 %v3577
    %v5064 = vunpack.c.h.b16 %v3577
    %v5065 = vunpack.c.l.b16 %v3578
    %v5066 = vunpack.c.h.b16 %v3578
    %v5067 = vunpack.c.l.b16 %v3579
    %v5068 = vunpack.c.h.b16 %v3579
    %v5069 = vunpack.c.l.b16 %v3580
    %v5070 = vunpack.c.h.b16 %v3580
    %v5071 = vunpack.c.l.b16 %v3581
    %v5072 = vunpack.c.h.b16 %v3581
    %v5073 = vunpack.c.l.b16 %v3582
    %v5074 = vunpack.c.h.b16 %v3582
    %v5075 = vunpack.c.l.b16 %v3583
    %v5076 = vunpack.c.h.b16 %v3583
    %v5077 = vunpack.c.l.b16 %v3584
    %v5078 = vunpack.c.h.b16 %v3584
    %v5079 = vunpack.c.l.b16 %v3585
    %v5080 = vunpack.c.h.b16 %v3585
    %v5081 = vunpack.c.l.b16 %v3586
    %v5082 = vunpack.c.h.b16 %v3586
    %v5083 = vunpack.c.l.b16 %v3587
    %v5084 = vunpack.c.h.b16 %v3587
    %v5085 = vunpack.c.l.b16 %v3588
    %v5086 = vunpack.c.h.b16 %v3588
    %v5087 = vunpack.c.l.b16 %v3589
    %v5088 = vunpack.c.h.b16 %v3589
    %v5089 = vunpack.c.l.b16 %v3590
    %v5090 = vunpack.c.h.b16 %v3590
    %v5091 = vunpack.c.l.b16 %v3591
    %v5092 = vunpack.c.h.b16 %v3591
    %v5093 = vunpack.c.l.b16 %v3592
    %v5094 = vunpack.c.h.b16 %v3592
    %v5095 = vunpack.c.l.b16 %v3593
    %v5096 = vunpack.c.h.b16 %v3593
    %v5097 = vunpack.c.l.b16 %v3594
    %v5098 = vunpack.c.h.b16 %v3594
    %v5099 = vunpack.c.l.b16 %v3595
    %v5100 = vunpack.c.h.b16 %v3595
    %v5101 = vunpack.c.l.b16 %v3596
    %v5102 = vunpack.c.h.b16 %v3596
    %v5103 = vunpack.c.l.b16 %v3597
    %v5104 = vunpack.c.h.b16 %v3597
    %v5105 = vunpack.c.l.b16 %v3598
    %v5106 = vunpack.c.h.b16 %v3598
    %v5107 = vunpack.c.l.b16 %v3599
    %v5108 = vunpack.c.h.b16 %v3599
    %v5109 = vunpack.c.l.b16 %v3600
    %v5110 = vunpack.c.h.b16 %v3600
    %v5111 = vunpack.c.l.b16 %v3601
    %v5112 = vunpack.c.h.b16 %v3601
    %v5113 = vunpack.c.l.b16 %v3602
    %v5114 = vunpack.c.h.b16 %v3602
    %v5115 = vunpack.c.l.b16 %v3603
    %v5116 = vunpack.c.h.b16 %v3603
    %v5117 = vunpack.c.l.b16 %v3604
    %v5118 = vunpack.c.h.b16 %v3604
    %v5119 = vunpack.c.l.b16 %v3605
    %v5120 = vunpack.c.h.b16 %v3605
    %v5121 = vunpack.c.l.b16 %v3606
    %v5122 = vunpack.c.h.b16 %v3606
    %v5123 = vunpack.c.l.b16 %v3607
    %v5124 = vunpack.c.h.b16 %v3607
    %v5125 = vunpack.c.l.b16 %v3608
    %v5126 = vunpack.c.h.b16 %v3608
    %v5127 = vunpack.c.l.b16 %v3609
    %v5128 = vunpack.c.h.b16 %v3609
    %v5129 = vunpack.c.l.b16 %v3610
    %v5130 = vunpack.c.h.b16 %v3610
    %v5131 = vunpack.c.l.b16 %v3611
    %v5132 = vunpack.c.h.b16 %v3611
    %v5133 = vunpack.c.l.b16 %v3612
    %v5134 = vunpack.c.h.b16 %v3612
    %v5135 = vunpack.c.l.b16 %v3613
    %v5136 = vunpack.c.h.b16 %v3613
    %v5137 = vunpack.c.l.b16 %v3614
    %v5138 = vunpack.c.h.b16 %v3614
    %v5139 = vunpack.c.l.b16 %v3615
    %v5140 = vunpack.c.h.b16 %v3615
    %v5141 = vunpack.c.l.b16 %v3616
    %v5142 = vunpack.c.h.b16 %v3616
    %v5143 = vunpack.c.l.b16 %v3617
    %v5144 = vunpack.c.h.b16 %v3617
    %v5145 = vunpack.c.l.b16 %v3618
    %v5146 = vunpack.c.h.b16 %v3618
    %v5147 = vunpack.c.l.b16 %v3619
    %v5148 = vunpack.c.h.b16 %v3619
    %v5149 = vunpack.c.l.b16 %v3620
    %v5150 = vunpack.c.h.b16 %v3620
    %v5151 = vunpack.c.l.b16 %v3621
    %v5152 = vunpack.c.h.b16 %v3621
    %v5153 = vunpack.c.l.b16 %v3622
    %v5154 = vunpack.c.h.b16 %v3622
    %v5155 = vunpack.c.l.b16 %v3623
    %v5156 = vunpack.c.h.b16 %v3623
    %v5157 = vunpack.c.l.b16 %v3624
    %v5158 = vunpack.c.h.b16 %v3624
    %v5159 = vunpack.c.l.b16 %v3625
    %v5160 = vunpack.c.h.b16 %v3625
    %v5161 = vunpack.c.l.b16 %v3626
    %v5162 = vunpack.c.h.b16 %v3626
    %v5163 = vpack.c.b16 %v4147, %v4139
    %v5164 = vpack.c.b16 %v4148, %v4140
    %v5165 = vpack.c.b16 %v4149, %v4141
    %v5166 = vpack.c.b16 %v4150, %v4142
    %v5167 = vpack.c.b16 %v4151, %v4143
    %v5168 = vpack.c.b16 %v4152, %v4144
    %v5169 = vpack.c.b16 %v4153, %v4145
    %v5170 = vpack.c.b16 %v4154, %v4146
    %v5171 = vpack.c.b16 %v4163, %v4155
    %v5172 = vpack.c.b16 %v4164, %v4156
    %v5173 = vpack.c.b16 %v4165, %v4157
    %v5174 = vpack.c.b16 %v4166, %v4158
    %v5175 = vpack.c.b16 %v4167, %v4159
    %v5176 = vpack.c.b16 %v4168, %v4160
    %v5177 = vpack.c.b16 %v4169, %v4161
    %v5178 = vpack.c.b16 %v4170, %v4162
    %v5179 = vpack.c.b16 %v4179, %v4171
    %v5180 = vpack.c.b16 %v4180, %v4172
    %v5181 = vpack.c.b16 %v4181, %v4173
    %v5182 = vpack.c.b16 %v4182, %v4174
    %v5183 = vpack.c.b16 %v4183, %v4175
    %v5184 = vpack.c.b16 %v4184, %v4176
    %v5185 = vpack.c.b16 %v4185, %v4177
    %v5186 = vpack.c.b16 %v4186, %v4178
    %v5187 = vpack.c.b16 %v4195, %v4187
    %v5188 = vpack.c.b16 %v4196, %v4188
    %v5189 = vpack.c.b16 %v4197, %v4189
    %v5190 = vpack.c.b16 %v4198, %v4190
    %v5191 = vpack.c.b16 %v4199, %v4191
    %v5192 = vpack.c.b16 %v4200, %v4192
    %v5193 = vpack.c.b16 %v4201, %v4193
    %v5194 = vpack.c.b16 %v4202, %v4194
    %v5195 = vpack.c.b16 %v4211, %v4203
    %v5196 = vpack.c.b16 %v4212, %v4204
    %v5197 = vpack.c.b16 %v4213, %v4205
    %v5198 = vpack.c.b16 %v4214, %v4206
    %v5199 = vpack.c.b16 %v4215, %v4207
    %v5200 = vpack.c.b16 %v4216, %v4208
    %v5201 = vpack.c.b16 %v4217, %v4209
    %v5202 = vpack.c.b16 %v4218, %v4210
    %v5203 = vpack.c.b16 %v4227, %v4219
    %v5204 = vpack.c.b16 %v4228, %v4220
    %v5205 = vpack.c.b16 %v4229, %v4221
    %v5206 = vpack.c.b16 %v4230, %v4222
    %v5207 = vpack.c.b16 %v4231, %v4223
    %v5208 = vpack.c.b16 %v4232, %v4224
    %v5209 = vpack.c.b16 %v4233, %v4225
    %v5210 = vpack.c.b16 %v4234, %v4226
    %v5211 = vpack.c.b16 %v4243, %v4235
    %v5212 = vpack.c.b16 %v4244, %v4236
    %v5213 = vpack.c.b16 %v4245, %v4237
    %v5214 = vpack.c.b16 %v4246, %v4238
    %v5215 = vpack.c.b16 %v4247, %v4239
    %v5216 = vpack.c.b16 %v4248, %v4240
    %v5217 = vpack.c.b16 %v4249, %v4241
    %v5218 = vpack.c.b16 %v4250, %v4242
    %v5219 = vpack.c.b16 %v4259, %v4251
    %v5220 = vpack.c.b16 %v4260, %v4252
    %v5221 = vpack.c.b16 %v4261, %v4253
    %v5222 = vpack.c.b16 %v4262, %v4254
    %v5223 = vpack.c.b16 %v4263, %v4255
    %v5224 = vpack.c.b16 %v4264, %v4256
    %v5225 = vpack.c.b16 %v4265, %v4257
    %v5226 = vpack.c.b16 %v4266, %v4258
    %v5227 = vpack.c.b16 %v4275, %v4267
    %v5228 = vpack.c.b16 %v4276, %v4268
    %v5229 = vpack.c.b16 %v4277, %v4269
    %v5230 = vpack.c.b16 %v4278, %v4270
    %v5231 = vpack.c.b16 %v4279, %v4271
    %v5232 = vpack.c.b16 %v4280, %v4272
    %v5233 = vpack.c.b16 %v4281, %v4273
    %v5234 = vpack.c.b16 %v4282, %v4274
    %v5235 = vpack.c.b16 %v4291, %v4283
    %v5236 = vpack.c.b16 %v4292, %v4284
    %v5237 = vpack.c.b16 %v4293, %v4285
    %v5238 = vpack.c.b16 %v4294, %v4286
    %v5239 = vpack.c.b16 %v4295, %v4287
    %v5240 = vpack.c.b16 %v4296, %v4288
    %v5241 = vpack.c.b16 %v4297, %v4289
    %v5242 = vpack.c.b16 %v4298, %v4290
    %v5243 = vpack.c.b16 %v4307, %v4299
    %v5244 = vpack.c.b16 %v4308, %v4300
    %v5245 = vpack.c.b16 %v4309, %v4301
    %v5246 = vpack.c.b16 %v4310, %v4302
    %v5247 = vpack.c.b16 %v4311, %v4303
    %v5248 = vpack.c.b16 %v4312, %v4304
    %v5249 = vpack.c.b16 %v4313, %v4305
    %v5250 = vpack.c.b16 %v4314, %v4306
    %v5251 = vpack.c.b16 %v4323, %v4315
    %v5252 = vpack.c.b16 %v4324, %v4316
    %v5253 = vpack.c.b16 %v4325, %v4317
    %v5254 = vpack.c.b16 %v4326, %v4318
    %v5255 = vpack.c.b16 %v4327, %v4319
    %v5256 = vpack.c.b16 %v4328, %v4320
    %v5257 = vpack.c.b16 %v4329, %v4321
    %v5258 = vpack.c.b16 %v4330, %v4322
    %v5259 = vpack.c.b16 %v4339, %v4331
    %v5260 = vpack.c.b16 %v4340, %v4332
    %v5261 = vpack.c.b16 %v4341, %v4333
    %v5262 = vpack.c.b16 %v4342, %v4334
    %v5263 = vpack.c.b16 %v4343, %v4335
    %v5264 = vpack.c.b16 %v4344, %v4336
    %v5265 = vpack.c.b16 %v4345, %v4337
    %v5266 = vpack.c.b16 %v4346, %v4338
    %v5267 = vpack.c.b16 %v4355, %v4347
    %v5268 = vpack.c.b16 %v4356, %v4348
    %v5269 = vpack.c.b16 %v4357, %v4349
    %v5270 = vpack.c.b16 %v4358, %v4350
    %v5271 = vpack.c.b16 %v4359, %v4351
    %v5272 = vpack.c.b16 %v4360, %v4352
    %v5273 = vpack.c.b16 %v4361, %v4353
    %v5274 = vpack.c.b16 %v4362, %v4354
    %v5275 = vpack.c.b16 %v4371, %v4363
    %v5276 = vpack.c.b16 %v4372, %v4364
    %v5277 = vpack.c.b16 %v4373, %v4365
    %v5278 = vpack.c.b16 %v4374, %v4366
    %v5279 = vpack.c.b16 %v4375, %v4367
    %v5280 = vpack.c.b16 %v4376, %v4368
    %v5281 = vpack.c.b16 %v4377, %v4369
    %v5282 = vpack.c.b16 %v4378, %v4370
    %v5283 = vpack.c.b16 %v4387, %v4379
    %v5284 = vpack.c.b16 %v4388, %v4380
    %v5285 = vpack.c.b16 %v4389, %v4381
    %v5286 = vpack.c.b16 %v4390, %v4382
    %v5287 = vpack.c.b16 %v4391, %v4383
    %v5288 = vpack.c.b16 %v4392, %v4384
    %v5289 = vpack.c.b16 %v4393, %v4385
    %v5290 = vpack.c.b16 %v4394, %v4386
    %v5291 = vpack.c.b16 %v4403, %v4395
    %v5292 = vpack.c.b16 %v4404, %v4396
    %v5293 = vpack.c.b16 %v4405, %v4397
    %v5294 = vpack.c.b16 %v4406, %v4398
    %v5295 = vpack.c.b16 %v4407, %v4399
    %v5296 = vpack.c.b16 %v4408, %v4400
    %v5297 = vpack.c.b16 %v4409, %v4401
    %v5298 = vpack.c.b16 %v4410, %v4402
    %v5299 = vpack.c.b16 %v4419, %v4411
    %v5300 = vpack.c.b16 %v4420, %v4412
    %v5301 = vpack.c.b16 %v4421, %v4413
    %v5302 = vpack.c.b16 %v4422, %v4414
    %v5303 = vpack.c.b16 %v4423, %v4415
    %v5304 = vpack.c.b16 %v4424, %v4416
    %v5305 = vpack.c.b16 %v4425, %v4417
    %v5306 = vpack.c.b16 %v4426, %v4418
    %v5307 = vpack.c.b16 %v4435, %v4427
    %v5308 = vpack.c.b16 %v4436, %v4428
    %v5309 = vpack.c.b16 %v4437, %v4429
    %v5310 = vpack.c.b16 %v4438, %v4430
    %v5311 = vpack.c.b16 %v4439, %v4431
    %v5312 = vpack.c.b16 %v4440, %v4432
    %v5313 = vpack.c.b16 %v4441, %v4433
    %v5314 = vpack.c.b16 %v4442, %v4434
    %v5315 = vpack.c.b16 %v4451, %v4443
    %v5316 = vpack.c.b16 %v4452, %v4444
    %v5317 = vpack.c.b16 %v4453, %v4445
    %v5318 = vpack.c.b16 %v4454, %v4446
    %v5319 = vpack.c.b16 %v4455, %v4447
    %v5320 = vpack.c.b16 %v4456, %v4448
    %v5321 = vpack.c.b16 %v4457, %v4449
    %v5322 = vpack.c.b16 %v4458, %v4450
    %v5323 = vpack.c.b16 %v4467, %v4459
    %v5324 = vpack.c.b16 %v4468, %v4460
    %v5325 = vpack.c.b16 %v4469, %v4461
    %v5326 = vpack.c.b16 %v4470, %v4462
    %v5327 = vpack.c.b16 %v4471, %v4463
    %v5328 = vpack.c.b16 %v4472, %v4464
    %v5329 = vpack.c.b16 %v4473, %v4465
    %v5330 = vpack.c.b16 %v4474, %v4466
    %v5331 = vpack.c.b16 %v4483, %v4475
    %v5332 = vpack.c.b16 %v4484, %v4476
    %v5333 = vpack.c.b16 %v4485, %v4477
    %v5334 = vpack.c.b16 %v4486, %v4478
    %v5335 = vpack.c.b16 %v4487, %v4479
    %v5336 = vpack.c.b16 %v4488, %v4480
    %v5337 = vpack.c.b16 %v4489, %v4481
    %v5338 = vpack.c.b16 %v4490, %v4482
    %v5339 = vpack.c.b16 %v4499, %v4491
    %v5340 = vpack.c.b16 %v4500, %v4492
    %v5341 = vpack.c.b16 %v4501, %v4493
    %v5342 = vpack.c.b16 %v4502, %v4494
    %v5343 = vpack.c.b16 %v4503, %v4495
    %v5344 = vpack.c.b16 %v4504, %v4496
    %v5345 = vpack.c.b16 %v4505, %v4497
    %v5346 = vpack.c.b16 %v4506, %v4498
    %v5347 = vpack.c.b16 %v4515, %v4507
    %v5348 = vpack.c.b16 %v4516, %v4508
    %v5349 = vpack.c.b16 %v4517, %v4509
    %v5350 = vpack.c.b16 %v4518, %v4510
    %v5351 = vpack.c.b16 %v4519, %v4511
    %v5352 = vpack.c.b16 %v4520, %v4512
    %v5353 = vpack.c.b16 %v4521, %v4513
    %v5354 = vpack.c.b16 %v4522, %v4514
    %v5355 = vpack.c.b16 %v4531, %v4523
    %v5356 = vpack.c.b16 %v4532, %v4524
    %v5357 = vpack.c.b16 %v4533, %v4525
    %v5358 = vpack.c.b16 %v4534, %v4526
    %v5359 = vpack.c.b16 %v4535, %v4527
    %v5360 = vpack.c.b16 %v4536, %v4528
    %v5361 = vpack.c.b16 %v4537, %v4529
    %v5362 = vpack.c.b16 %v4538, %v4530
    %v5363 = vpack.c.b16 %v4547, %v4539
    %v5364 = vpack.c.b16 %v4548, %v4540
    %v5365 = vpack.c.b16 %v4549, %v4541
    %v5366 = vpack.c.b16 %v4550, %v4542
    %v5367 = vpack.c.b16 %v4551, %v4543
    %v5368 = vpack.c.b16 %v4552, %v4544
    %v5369 = vpack.c.b16 %v4553, %v4545
    %v5370 = vpack.c.b16 %v4554, %v4546
    %v5371 = vpack.c.b16 %v4563, %v4555
    %v5372 = vpack.c.b16 %v4564, %v4556
    %v5373 = vpack.c.b16 %v4565, %v4557
    %v5374 = vpack.c.b16 %v4566, %v4558
    %v5375 = vpack.c.b16 %v4567, %v4559
    %v5376 = vpack.c.b16 %v4568, %v4560
    %v5377 = vpack.c.b16 %v4569, %v4561
    %v5378 = vpack.c.b16 %v4570, %v4562
    %v5379 = vpack.c.b16 %v4579, %v4571
    %v5380 = vpack.c.b16 %v4580, %v4572
    %v5381 = vpack.c.b16 %v4581, %v4573
    %v5382 = vpack.c.b16 %v4582, %v4574
    %v5383 = vpack.c.b16 %v4583, %v4575
    %v5384 = vpack.c.b16 %v4584, %v4576
    %v5385 = vpack.c.b16 %v4585, %v4577
    %v5386 = vpack.c.b16 %v4586, %v4578
    %v5387 = vpack.c.b16 %v4595, %v4587
    %v5388 = vpack.c.b16 %v4596, %v4588
    %v5389 = vpack.c.b16 %v4597, %v4589
    %v5390 = vpack.c.b16 %v4598, %v4590
    %v5391 = vpack.c.b16 %v4599, %v4591
    %v5392 = vpack.c.b16 %v4600, %v4592
    %v5393 = vpack.c.b16 %v4601, %v4593
    %v5394 = vpack.c.b16 %v4602, %v4594
    %v5395 = vpack.c.b16 %v4611, %v4603
    %v5396 = vpack.c.b16 %v4612, %v4604
    %v5397 = vpack.c.b16 %v4613, %v4605
    %v5398 = vpack.c.b16 %v4614, %v4606
    %v5399 = vpack.c.b16 %v4615, %v4607
    %v5400 = vpack.c.b16 %v4616, %v4608
    %v5401 = vpack.c.b16 %v4617, %v4609
    %v5402 = vpack.c.b16 %v4618, %v4610
    %v5403 = vpack.c.b16 %v4627, %v4619
    %v5404 = vpack.c.b16 %v4628, %v4620
    %v5405 = vpack.c.b16 %v4629, %v4621
    %v5406 = vpack.c.b16 %v4630, %v4622
    %v5407 = vpack.c.b16 %v4631, %v4623
    %v5408 = vpack.c.b16 %v4632, %v4624
    %v5409 = vpack.c.b16 %v4633, %v4625
    %v5410 = vpack.c.b16 %v4634, %v4626
    %v5411 = vpack.c.b16 %v4643, %v4635
    %v5412 = vpack.c.b16 %v4644, %v4636
    %v5413 = vpack.c.b16 %v4645, %v4637
    %v5414 = vpack.c.b16 %v4646, %v4638
    %v5415 = vpack.c.b16 %v4647, %v4639
    %v5416 = vpack.c.b16 %v4648, %v4640
    %v5417 = vpack.c.b16 %v4649, %v4641
    %v5418 = vpack.c.b16 %v4650, %v4642
    %v5419 = vpack.c.b16 %v4659, %v4651
    %v5420 = vpack.c.b16 %v4660, %v4652
    %v5421 = vpack.c.b16 %v4661, %v4653
    %v5422 = vpack.c.b16 %v4662, %v4654
    %v5423 = vpack.c.b16 %v4663, %v4655
    %v5424 = vpack.c.b16 %v4664, %v4656
    %v5425 = vpack.c.b16 %v4665, %v4657
    %v5426 = vpack.c.b16 %v4666, %v4658
    %v5427 = vpack.c.b16 %v4675, %v4667
    %v5428 = vpack.c.b16 %v4676, %v4668
    %v5429 = vpack.c.b16 %v4677, %v4669
    %v5430 = vpack.c.b16 %v4678, %v4670
    %v5431 = vpack.c.b16 %v4679, %v4671
    %v5432 = vpack.c.b16 %v4680, %v4672
    %v5433 = vpack.c.b16 %v4681, %v4673
    %v5434 = vpack.c.b16 %v4682, %v4674
    %v5435 = vpack.c.b16 %v4691, %v4683
    %v5436 = vpack.c.b16 %v4692, %v4684
    %v5437 = vpack.c.b16 %v4693, %v4685
    %v5438 = vpack.c.b16 %v4694, %v4686
    %v5439 = vpack.c.b16 %v4695, %v4687
    %v5440 = vpack.c.b16 %v4696, %v4688
    %v5441 = vpack.c.b16 %v4697, %v4689
    %v5442 = vpack.c.b16 %v4698, %v4690
    %v5443 = vpack.c.b16 %v4707, %v4699
    %v5444 = vpack.c.b16 %v4708, %v4700
    %v5445 = vpack.c.b16 %v4709, %v4701
    %v5446 = vpack.c.b16 %v4710, %v4702
    %v5447 = vpack.c.b16 %v4711, %v4703
    %v5448 = vpack.c.b16 %v4712, %v4704
    %v5449 = vpack.c.b16 %v4713, %v4705
    %v5450 = vpack.c.b16 %v4714, %v4706
    %v5451 = vpack.c.b16 %v4723, %v4715
    %v5452 = vpack.c.b16 %v4724, %v4716
    %v5453 = vpack.c.b16 %v4725, %v4717
    %v5454 = vpack.c.b16 %v4726, %v4718
    %v5455 = vpack.c.b16 %v4727, %v4719
    %v5456 = vpack.c.b16 %v4728, %v4720
    %v5457 = vpack.c.b16 %v4729, %v4721
    %v5458 = vpack.c.b16 %v4730, %v4722
    %v5459 = vpack.c.b16 %v4739, %v4731
    %v5460 = vpack.c.b16 %v4740, %v4732
    %v5461 = vpack.c.b16 %v4741, %v4733
    %v5462 = vpack.c.b16 %v4742, %v4734
    %v5463 = vpack.c.b16 %v4743, %v4735
    %v5464 = vpack.c.b16 %v4744, %v4736
    %v5465 = vpack.c.b16 %v4745, %v4737
    %v5466 = vpack.c.b16 %v4746, %v4738
    %v5467 = vpack.c.b16 %v4755, %v4747
    %v5468 = vpack.c.b16 %v4756, %v4748
    %v5469 = vpack.c.b16 %v4757, %v4749
    %v5470 = vpack.c.b16 %v4758, %v4750
    %v5471 = vpack.c.b16 %v4759, %v4751
    %v5472 = vpack.c.b16 %v4760, %v4752
    %v5473 = vpack.c.b16 %v4761, %v4753
    %v5474 = vpack.c.b16 %v4762, %v4754
    %v5475 = vpack.c.b16 %v4771, %v4763
    %v5476 = vpack.c.b16 %v4772, %v4764
    %v5477 = vpack.c.b16 %v4773, %v4765
    %v5478 = vpack.c.b16 %v4774, %v4766
    %v5479 = vpack.c.b16 %v4775, %v4767
    %v5480 = vpack.c.b16 %v4776, %v4768
    %v5481 = vpack.c.b16 %v4777, %v4769
    %v5482 = vpack.c.b16 %v4778, %v4770
    %v5483 = vpack.c.b16 %v4787, %v4779
    %v5484 = vpack.c.b16 %v4788, %v4780
    %v5485 = vpack.c.b16 %v4789, %v4781
    %v5486 = vpack.c.b16 %v4790, %v4782
    %v5487 = vpack.c.b16 %v4791, %v4783
    %v5488 = vpack.c.b16 %v4792, %v4784
    %v5489 = vpack.c.b16 %v4793, %v4785
    %v5490 = vpack.c.b16 %v4794, %v4786
    %v5491 = vpack.c.b16 %v4803, %v4795
    %v5492 = vpack.c.b16 %v4804, %v4796
    %v5493 = vpack.c.b16 %v4805, %v4797
    %v5494 = vpack.c.b16 %v4806, %v4798
    %v5495 = vpack.c.b16 %v4807, %v4799
    %v5496 = vpack.c.b16 %v4808, %v4800
    %v5497 = vpack.c.b16 %v4809, %v4801
    %v5498 = vpack.c.b16 %v4810, %v4802
    %v5499 = vpack.c.b16 %v4819, %v4811
    %v5500 = vpack.c.b16 %v4820, %v4812
    %v5501 = vpack.c.b16 %v4821, %v4813
    %v5502 = vpack.c.b16 %v4822, %v4814
    %v5503 = vpack.c.b16 %v4823, %v4815
    %v5504 = vpack.c.b16 %v4824, %v4816
    %v5505 = vpack.c.b16 %v4825, %v4817
    %v5506 = vpack.c.b16 %v4826, %v4818
    %v5507 = vpack.c.b16 %v4835, %v4827
    %v5508 = vpack.c.b16 %v4836, %v4828
    %v5509 = vpack.c.b16 %v4837, %v4829
    %v5510 = vpack.c.b16 %v4838, %v4830
    %v5511 = vpack.c.b16 %v4839, %v4831
    %v5512 = vpack.c.b16 %v4840, %v4832
    %v5513 = vpack.c.b16 %v4841, %v4833
    %v5514 = vpack.c.b16 %v4842, %v4834
    %v5515 = vpack.c.b16 %v4851, %v4843
    %v5516 = vpack.c.b16 %v4852, %v4844
    %v5517 = vpack.c.b16 %v4853, %v4845
    %v5518 = vpack.c.b16 %v4854, %v4846
    %v5519 = vpack.c.b16 %v4855, %v4847
    %v5520 = vpack.c.b16 %v4856, %v4848
    %v5521 = vpack.c.b16 %v4857, %v4849
    %v5522 = vpack.c.b16 %v4858, %v4850
    %v5523 = vpack.c.b16 %v4867, %v4859
    %v5524 = vpack.c.b16 %v4868, %v4860
    %v5525 = vpack.c.b16 %v4869, %v4861
    %v5526 = vpack.c.b16 %v4870, %v4862
    %v5527 = vpack.c.b16 %v4871, %v4863
    %v5528 = vpack.c.b16 %v4872, %v4864
    %v5529 = vpack.c.b16 %v4873, %v4865
    %v5530 = vpack.c.b16 %v4874, %v4866
    %v5531 = vpack.c.b16 %v4883, %v4875
    %v5532 = vpack.c.b16 %v4884, %v4876
    %v5533 = vpack.c.b16 %v4885, %v4877
    %v5534 = vpack.c.b16 %v4886, %v4878
    %v5535 = vpack.c.b16 %v4887, %v4879
    %v5536 = vpack.c.b16 %v4888, %v4880
    %v5537 = vpack.c.b16 %v4889, %v4881
    %v5538 = vpack.c.b16 %v4890, %v4882
    %v5539 = vpack.c.b16 %v4899, %v4891
    %v5540 = vpack.c.b16 %v4900, %v4892
    %v5541 = vpack.c.b16 %v4901, %v4893
    %v5542 = vpack.c.b16 %v4902, %v4894
    %v5543 = vpack.c.b16 %v4903, %v4895
    %v5544 = vpack.c.b16 %v4904, %v4896
    %v5545 = vpack.c.b16 %v4905, %v4897
    %v5546 = vpack.c.b16 %v4906, %v4898
    %v5547 = vpack.c.b16 %v4915, %v4907
    %v5548 = vpack.c.b16 %v4916, %v4908
    %v5549 = vpack.c.b16 %v4917, %v4909
    %v5550 = vpack.c.b16 %v4918, %v4910
    %v5551 = vpack.c.b16 %v4919, %v4911
    %v5552 = vpack.c.b16 %v4920, %v4912
    %v5553 = vpack.c.b16 %v4921, %v4913
    %v5554 = vpack.c.b16 %v4922, %v4914
    %v5555 = vpack.c.b16 %v4931, %v4923
    %v5556 = vpack.c.b16 %v4932, %v4924
    %v5557 = vpack.c.b16 %v4933, %v4925
    %v5558 = vpack.c.b16 %v4934, %v4926
    %v5559 = vpack.c.b16 %v4935, %v4927
    %v5560 = vpack.c.b16 %v4936, %v4928
    %v5561 = vpack.c.b16 %v4937, %v4929
    %v5562 = vpack.c.b16 %v4938, %v4930
    %v5563 = vpack.c.b16 %v4947, %v4939
    %v5564 = vpack.c.b16 %v4948, %v4940
    %v5565 = vpack.c.b16 %v4949, %v4941
    %v5566 = vpack.c.b16 %v4950, %v4942
    %v5567 = vpack.c.b16 %v4951, %v4943
    %v5568 = vpack.c.b16 %v4952, %v4944
    %v5569 = vpack.c.b16 %v4953, %v4945
    %v5570 = vpack.c.b16 %v4954, %v4946
    %v5571 = vpack.c.b16 %v4963, %v4955
    %v5572 = vpack.c.b16 %v4964, %v4956
    %v5573 = vpack.c.b16 %v4965, %v4957
    %v5574 = vpack.c.b16 %v4966, %v4958
    %v5575 = vpack.c.b16 %v4967, %v4959
    %v5576 = vpack.c.b16 %v4968, %v4960
    %v5577 = vpack.c.b16 %v4969, %v4961
    %v5578 = vpack.c.b16 %v4970, %v4962
    %v5579 = vpack.c.b16 %v4979, %v4971
    %v5580 = vpack.c.b16 %v4980, %v4972
    %v5581 = vpack.c.b16 %v4981, %v4973
    %v5582 = vpack.c.b16 %v4982, %v4974
    %v5583 = vpack.c.b16 %v4983, %v4975
    %v5584 = vpack.c.b16 %v4984, %v4976
    %v5585 = vpack.c.b16 %v4985, %v4977
    %v5586 = vpack.c.b16 %v4986, %v4978
    %v5587 = vpack.c.b16 %v4995, %v4987
    %v5588 = vpack.c.b16 %v4996, %v4988
    %v5589 = vpack.c.b16 %v4997, %v4989
    %v5590 = vpack.c.b16 %v4998, %v4990
    %v5591 = vpack.c.b16 %v4999, %v4991
    %v5592 = vpack.c.b16 %v5000, %v4992
    %v5593 = vpack.c.b16 %v5001, %v4993
    %v5594 = vpack.c.b16 %v5002, %v4994
    %v5595 = vpack.c.b16 %v5011, %v5003
    %v5596 = vpack.c.b16 %v5012, %v5004
    %v5597 = vpack.c.b16 %v5013, %v5005
    %v5598 = vpack.c.b16 %v5014, %v5006
    %v5599 = vpack.c.b16 %v5015, %v5007
    %v5600 = vpack.c.b16 %v5016, %v5008
    %v5601 = vpack.c.b16 %v5017, %v5009
    %v5602 = vpack.c.b16 %v5018, %v5010
    %v5603 = vpack.c.b16 %v5027, %v5019
    %v5604 = vpack.c.b16 %v5028, %v5020
    %v5605 = vpack.c.b16 %v5029, %v5021
    %v5606 = vpack.c.b16 %v5030, %v5022
    %v5607 = vpack.c.b16 %v5031, %v5023
    %v5608 = vpack.c.b16 %v5032, %v5024
    %v5609 = vpack.c.b16 %v5033, %v5025
    %v5610 = vpack.c.b16 %v5034, %v5026
    %v5611 = vpack.c.b16 %v5043, %v5035
    %v5612 = vpack.c.b16 %v5044, %v5036
    %v5613 = vpack.c.b16 %v5045, %v5037
    %v5614 = vpack.c.b16 %v5046, %v5038
    %v5615 = vpack.c.b16 %v5047, %v5039
    %v5616 = vpack.c.b16 %v5048, %v5040
    %v5617 = vpack.c.b16 %v5049, %v5041
    %v5618 = vpack.c.b16 %v5050, %v5042
    %v5619 = vpack.c.b16 %v5059, %v5051
    %v5620 = vpack.c.b16 %v5060, %v5052
    %v5621 = vpack.c.b16 %v5061, %v5053
    %v5622 = vpack.c.b16 %v5062, %v5054
    %v5623 = vpack.c.b16 %v5063, %v5055
    %v5624 = vpack.c.b16 %v5064, %v5056
    %v5625 = vpack.c.b16 %v5065, %v5057
    %v5626 = vpack.c.b16 %v5066, %v5058
    %v5627 = vpack.c.b16 %v5075, %v5067
    %v5628 = vpack.c.b16 %v5076, %v5068
    %v5629 = vpack.c.b16 %v5077, %v5069
    %v5630 = vpack.c.b16 %v5078, %v5070
    %v5631 = vpack.c.b16 %v5079, %v5071
    %v5632 = vpack.c.b16 %v5080, %v5072
    %v5633 = vpack.c.b16 %v5081, %v5073
    %v5634 = vpack.c.b16 %v5082, %v5074
    %v5635 = vpack.c.b16 %v5091, %v5083
    %v5636 = vpack.c.b16 %v5092, %v5084
    %v5637 = vpack.c.b16 %v5093, %v5085
    %v5638 = vpack.c.b16 %v5094, %v5086
    %v5639 = vpack.c.b16 %v5095, %v5087
    %v5640 = vpack.c.b16 %v5096, %v5088
    %v5641 = vpack.c.b16 %v5097, %v5089
    %v5642 = vpack.c.b16 %v5098, %v5090
    %v5643 = vpack.c.b16 %v5107, %v5099
    %v5644 = vpack.c.b16 %v5108, %v5100
    %v5645 = vpack.c.b16 %v5109, %v5101
    %v5646 = vpack.c.b16 %v5110, %v5102
    %v5647 = vpack.c.b16 %v5111, %v5103
    %v5648 = vpack.c.b16 %v5112, %v5104
    %v5649 = vpack.c.b16 %v5113, %v5105
    %v5650 = vpack.c.b16 %v5114, %v5106
    %v5651 = vpack.c.b16 %v5123, %v5115
    %v5652 = vpack.c.b16 %v5124, %v5116
    %v5653 = vpack.c.b16 %v5125, %v5117
    %v5654 = vpack.c.b16 %v5126, %v5118
    %v5655 = vpack.c.b16 %v5127, %v5119
    %v5656 = vpack.c.b16 %v5128, %v5120
    %v5657 = vpack.c.b16 %v5129, %v5121
    %v5658 = vpack.c.b16 %v5130, %v5122
    %v5659 = vpack.c.b16 %v5139, %v5131
    %v5660 = vpack.c.b16 %v5140, %v5132
    %v5661 = vpack.c.b16 %v5141, %v5133
    %v5662 = vpack.c.b16 %v5142, %v5134
    %v5663 = vpack.c.b16 %v5143, %v5135
    %v5664 = vpack.c.b16 %v5144, %v5136
    %v5665 = vpack.c.b16 %v5145, %v5137
    %v5666 = vpack.c.b16 %v5146, %v5138
    %v5667 = vpack.c.b16 %v5155, %v5147
    %v5668 = vpack.c.b16 %v5156, %v5148
    %v5669 = vpack.c.b16 %v5157, %v5149
    %v5670 = vpack.c.b16 %v5158, %v5150
    %v5671 = vpack.c.b16 %v5159, %v5151
    %v5672 = vpack.c.b16 %v5160, %v5152
    %v5673 = vpack.c.b16 %v5161, %v5153
    %v5674 = vpack.c.b16 %v5162, %v5154
    %6187 = vmatprep.subr.bf16.mxu0 %v5220
    %6188 = vmatpush1.bf16.msra.mxu0 %v5219
    %6189 = vmatprep.subr.bf16.mxu0 %v5212
    %6190 = vmatpush1.bf16.msra.mxu0 %v5211
    %6191 = vmatprep.subr.bf16.mxu0 %v5204
    %6192 = vmatpush1.bf16.msra.mxu0 %v5203
    %6193 = vmatprep.subr.bf16.mxu0 %v5196
    %6194 = vmatpush1.bf16.msra.mxu0 %v5195
    %6195 = vmatprep.subr.bf16.mxu0 %v5188
    %6196 = vmatpush1.bf16.msra.mxu0 %v5187
    %6197 = vmatprep.subr.bf16.mxu0 %v5180
    %6198 = vmatpush1.bf16.msra.mxu0 %v5179
    %6199 = vmatprep.subr.bf16.mxu0 %v5172
    %6200 = vmatpush1.bf16.msra.mxu0 %v5171
    %6201 = vmatprep.subr.bf16.mxu0 %v5164
    %6202 = vmatpush1.bf16.msra.mxu0 %v5163
    %6203 = vmatprep.subr.bf16.mxu0 %v5284
    %6204 = vmatpush2.bf16.msra.mxu0 %v5283
    %6205 = vmatprep.subr.bf16.mxu0 %v5276
    %6206 = vmatpush2.bf16.msra.mxu0 %v5275
    %6207 = vmatprep.subr.bf16.mxu0 %v5268
    %6208 = vmatpush2.bf16.msra.mxu0 %v5267
    %6209 = vmatprep.subr.bf16.mxu0 %v5260
    %6210 = vmatpush2.bf16.msra.mxu0 %v5259
    %6211 = vmatprep.subr.bf16.mxu0 %v5252
    %6212 = vmatpush2.bf16.msra.mxu0 %v5251
    %6213 = vmatprep.subr.bf16.mxu0 %v5244
    %6214 = vmatpush2.bf16.msra.mxu0 %v5243
    %6215 = vmatprep.subr.bf16.mxu0 %v5236
    %6216 = vmatpush2.bf16.msra.mxu0 %v5235
    %6217 = vmatprep.subr.bf16.mxu0 %v5228
    %6218 = vmatpush2.bf16.msra.mxu0 %v5227
    %6219 = vmatprep.mubr.bf16.mxu0 %v3108
    %6220 = vmatmul.mubr.bf16.gmra.mxu0 %v3107
    %v6221 = vpop.f32.mrf.mxu0
    %v6222 = vadd.f32 0.0, %v6221
    %v6223 = vpop.f32.mrf.mxu0
    %v6224 = vadd.f32 0.0, %v6223
    %v6225 = vpop.f32.mrf.mxu0
    %v6226 = vpop.f32.mrf.mxu0
    %6227 = vdwg.mxu0
    %6228 = vmatprep.subr.bf16.mxu0 %v5348
    %6229 = vmatpush1.bf16.msra.mxu0 %v5347
    %6230 = vmatprep.subr.bf16.mxu0 %v5340
    %6231 = vmatpush1.bf16.msra.mxu0 %v5339
    %6232 = vmatprep.subr.bf16.mxu0 %v5332
    %6233 = vmatpush1.bf16.msra.mxu0 %v5331
    %6234 = vmatprep.subr.bf16.mxu0 %v5324
    %6235 = vmatpush1.bf16.msra.mxu0 %v5323
    %6236 = vmatprep.subr.bf16.mxu0 %v5316
    %6237 = vmatpush1.bf16.msra.mxu0 %v5315
    %6238 = vmatprep.subr.bf16.mxu0 %v5308
    %6239 = vmatpush1.bf16.msra.mxu0 %v5307
    %6240 = vmatprep.subr.bf16.mxu0 %v5300
    %6241 = vmatpush1.bf16.msra.mxu0 %v5299
    %6242 = vmatprep.subr.bf16.mxu0 %v5292
    %6243 = vmatpush1.bf16.msra.mxu0 %v5291
    %6244 = vmatprep.subr.bf16.mxu0 %v5412
    %6245 = vmatpush2.bf16.msra.mxu0 %v5411
    %6246 = vmatprep.subr.bf16.mxu0 %v5404
    %6247 = vmatpush2.bf16.msra.mxu0 %v5403
    %6248 = vmatprep.subr.bf16.mxu0 %v5396
    %6249 = vmatpush2.bf16.msra.mxu0 %v5395
    %6250 = vmatprep.subr.bf16.mxu0 %v5388
    %6251 = vmatpush2.bf16.msra.mxu0 %v5387
    %6252 = vmatprep.subr.bf16.mxu0 %v5380
    %6253 = vmatpush2.bf16.msra.mxu0 %v5379
    %6254 = vmatprep.subr.bf16.mxu0 %v5372
    %6255 = vmatpush2.bf16.msra.mxu0 %v5371
    %6256 = vmatprep.subr.bf16.mxu0 %v5364
    %6257 = vmatpush2.bf16.msra.mxu0 %v5363
    %6258 = vmatprep.subr.bf16.mxu0 %v5356
    %6259 = vmatpush2.bf16.msra.mxu0 %v5355
    %6260 = vmatprep.mubr.bf16.mxu0 %v3110
    %6261 = vmatmul.mubr.bf16.gmra.mxu0 %v3109
    %v6262 = vpop.f32.mrf.mxu0
    %v6263 = vadd.f32 %v6222, %v6262
    %v6264 = vpop.f32.mrf.mxu0
    %v6265 = vadd.f32 %v6224, %v6264
    %v6266 = vpop.f32.mrf.mxu0
    %v6267 = vpop.f32.mrf.mxu0
    %6268 = vdwg.mxu0
    %6269 = vmatprep.subr.bf16.mxu0 %v5476
    %6270 = vmatpush1.bf16.msra.mxu0 %v5475
    %6271 = vmatprep.subr.bf16.mxu0 %v5468
    %6272 = vmatpush1.bf16.msra.mxu0 %v5467
    %6273 = vmatprep.subr.bf16.mxu0 %v5460
    %6274 = vmatpush1.bf16.msra.mxu0 %v5459
    %6275 = vmatprep.subr.bf16.mxu0 %v5452
    %6276 = vmatpush1.bf16.msra.mxu0 %v5451
    %6277 = vmatprep.subr.bf16.mxu0 %v5444
    %6278 = vmatpush1.bf16.msra.mxu0 %v5443
    %6279 = vmatprep.subr.bf16.mxu0 %v5436
    %6280 = vmatpush1.bf16.msra.mxu0 %v5435
    %6281 = vmatprep.subr.bf16.mxu0 %v5428
    %6282 = vmatpush1.bf16.msra.mxu0 %v5427
    %6283 = vmatprep.subr.bf16.mxu0 %v5420
    %6284 = vmatpush1.bf16.msra.mxu0 %v5419
    %6285 = vmatprep.subr.bf16.mxu0 %v5540
    %6286 = vmatpush2.bf16.msra.mxu0 %v5539
    %6287 = vmatprep.subr.bf16.mxu0 %v5532
    %6288 = vmatpush2.bf16.msra.mxu0 %v5531
    %6289 = vmatprep.subr.bf16.mxu0 %v5524
    %6290 = vmatpush2.bf16.msra.mxu0 %v5523
    %6291 = vmatprep.subr.bf16.mxu0 %v5516
    %6292 = vmatpush2.bf16.msra.mxu0 %v5515
    %6293 = vmatprep.subr.bf16.mxu0 %v5508
    %6294 = vmatpush2.bf16.msra.mxu0 %v5507
    %6295 = vmatprep.subr.bf16.mxu0 %v5500
    %6296 = vmatpush2.bf16.msra.mxu0 %v5499
    %6297 = vmatprep.subr.bf16.mxu0 %v5492
    %6298 = vmatpush2.bf16.msra.mxu0 %v5491
    %6299 = vmatprep.subr.bf16.mxu0 %v5484
    %6300 = vmatpush2.bf16.msra.mxu0 %v5483
    %6301 = vmatprep.mubr.bf16.mxu0 %v3112
    %6302 = vmatmul.mubr.bf16.gmra.mxu0 %v3111
    %v6303 = vpop.f32.mrf.mxu0
    %v6304 = vadd.f32 %v6263, %v6303
    %v6305 = vpop.f32.mrf.mxu0
    %v6306 = vadd.f32 %v6265, %v6305
    %v6307 = vpop.f32.mrf.mxu0
    %v6308 = vpop.f32.mrf.mxu0
    %6309 = vdwg.mxu0
    %6310 = vmatprep.subr.bf16.mxu0 %v5604
    %6311 = vmatpush1.bf16.msra.mxu0 %v5603
    %6312 = vmatprep.subr.bf16.mxu0 %v5596
    %6313 = vmatpush1.bf16.msra.mxu0 %v5595
    %6314 = vmatprep.subr.bf16.mxu0 %v5588
    %6315 = vmatpush1.bf16.msra.mxu0 %v5587
    %6316 = vmatprep.subr.bf16.mxu0 %v5580
    %6317 = vmatpush1.bf16.msra.mxu0 %v5579
    %6318 = vmatprep.subr.bf16.mxu0 %v5572
    %6319 = vmatpush1.bf16.msra.mxu0 %v5571
    %6320 = vmatprep.subr.bf16.mxu0 %v5564
    %6321 = vmatpush1.bf16.msra.mxu0 %v5563
    %6322 = vmatprep.subr.bf16.mxu0 %v5556
    %6323 = vmatpush1.bf16.msra.mxu0 %v5555
    %6324 = vmatprep.subr.bf16.mxu0 %v5548
    %6325 = vmatpush1.bf16.msra.mxu0 %v5547
    %6326 = vmatprep.subr.bf16.mxu0 %v5668
    %6327 = vmatpush2.bf16.msra.mxu0 %v5667
    %6328 = vmatprep.subr.bf16.mxu0 %v5660
    %6329 = vmatpush2.bf16.msra.mxu0 %v5659
    %6330 = vmatprep.subr.bf16.mxu0 %v5652
    %6331 = vmatpush2.bf16.msra.mxu0 %v5651
    %6332 = vmatprep.subr.bf16.mxu0 %v5644
    %6333 = vmatpush2.bf16.msra.mxu0 %v5643
    %6334 = vmatprep.subr.bf16.mxu0 %v5636
    %6335 = vmatpush2.bf16.msra.mxu0 %v5635
    %6336 = vmatprep.subr.bf16.mxu0 %v5628
    %6337 = vmatpush2.bf16.msra.mxu0 %v5627
    %6338 = vmatprep.subr.bf16.mxu0 %v5620
    %6339 = vmatpush2.bf16.msra.mxu0 %v5619
    %6340 = vmatprep.subr.bf16.mxu0 %v5612
    %6341 = vmatpush2.bf16.msra.mxu0 %v5611
    %6342 = vmatprep.mubr.bf16.mxu0 %v3114
    %6343 = vmatmul.mubr.bf16.gmra.mxu0 %v3113
    %v6344 = vpop.f32.mrf.mxu0
    %v6345 = vadd.f32 %v6304, %v6344
    %v6346 = vpop.f32.mrf.mxu0
    %v6347 = vadd.f32 %v6306, %v6346
    %v6348 = vpop.f32.mrf.mxu0
    %v6349 = vpop.f32.mrf.mxu0
    %6350 = vdwg.mxu0
    %6351 = vmatprep.subr.bf16.mxu0 %v5222
    %6352 = vmatpush1.bf16.msra.mxu0 %v5221
    %6353 = vmatprep.subr.bf16.mxu0 %v5214
    %6354 = vmatpush1.bf16.msra.mxu0 %v5213
    %6355 = vmatprep.subr.bf16.mxu0 %v5206
    %6356 = vmatpush1.bf16.msra.mxu0 %v5205
    %6357 = vmatprep.subr.bf16.mxu0 %v5198
    %6358 = vmatpush1.bf16.msra.mxu0 %v5197
    %6359 = vmatprep.subr.bf16.mxu0 %v5190
    %6360 = vmatpush1.bf16.msra.mxu0 %v5189
    %6361 = vmatprep.subr.bf16.mxu0 %v5182
    %6362 = vmatpush1.bf16.msra.mxu0 %v5181
    %6363 = vmatprep.subr.bf16.mxu0 %v5174
    %6364 = vmatpush1.bf16.msra.mxu0 %v5173
    %6365 = vmatprep.subr.bf16.mxu0 %v5166
    %6366 = vmatpush1.bf16.msra.mxu0 %v5165
    %6367 = vmatprep.subr.bf16.mxu0 %v5286
    %6368 = vmatpush2.bf16.msra.mxu0 %v5285
    %6369 = vmatprep.subr.bf16.mxu0 %v5278
    %6370 = vmatpush2.bf16.msra.mxu0 %v5277
    %6371 = vmatprep.subr.bf16.mxu0 %v5270
    %6372 = vmatpush2.bf16.msra.mxu0 %v5269
    %6373 = vmatprep.subr.bf16.mxu0 %v5262
    %6374 = vmatpush2.bf16.msra.mxu0 %v5261
    %6375 = vmatprep.subr.bf16.mxu0 %v5254
    %6376 = vmatpush2.bf16.msra.mxu0 %v5253
    %6377 = vmatprep.subr.bf16.mxu0 %v5246
    %6378 = vmatpush2.bf16.msra.mxu0 %v5245
    %6379 = vmatprep.subr.bf16.mxu0 %v5238
    %6380 = vmatpush2.bf16.msra.mxu0 %v5237
    %6381 = vmatprep.subr.bf16.mxu0 %v5230
    %6382 = vmatpush2.bf16.msra.mxu0 %v5229
    %6383 = vmatprep.mubr.bf16.mxu0 %v3108
    %6384 = vmatmul.mubr.bf16.gmra.mxu0 %v3107
    %v6385 = vpop.f32.mrf.mxu0
    %v6386 = vadd.f32 0.0, %v6385
    %v6387 = vpop.f32.mrf.mxu0
    %v6388 = vadd.f32 0.0, %v6387
    %v6389 = vpop.f32.mrf.mxu0
    %v6390 = vpop.f32.mrf.mxu0
    %6391 = vdwg.mxu0
    %6392 = vmatprep.subr.bf16.mxu0 %v5350
    %6393 = vmatpush1.bf16.msra.mxu0 %v5349
    %6394 = vmatprep.subr.bf16.mxu0 %v5342
    %6395 = vmatpush1.bf16.msra.mxu0 %v5341
    %6396 = vmatprep.subr.bf16.mxu0 %v5334
    %6397 = vmatpush1.bf16.msra.mxu0 %v5333
    %6398 = vmatprep.subr.bf16.mxu0 %v5326
    %6399 = vmatpush1.bf16.msra.mxu0 %v5325
    %6400 = vmatprep.subr.bf16.mxu0 %v5318
    %6401 = vmatpush1.bf16.msra.mxu0 %v5317
    %6402 = vmatprep.subr.bf16.mxu0 %v5310
    %6403 = vmatpush1.bf16.msra.mxu0 %v5309
    %6404 = vmatprep.subr.bf16.mxu0 %v5302
    %6405 = vmatpush1.bf16.msra.mxu0 %v5301
    %6406 = vmatprep.subr.bf16.mxu0 %v5294
    %6407 = vmatpush1.bf16.msra.mxu0 %v5293
    %6408 = vmatprep.subr.bf16.mxu0 %v5414
    %6409 = vmatpush2.bf16.msra.mxu0 %v5413
    %6410 = vmatprep.subr.bf16.mxu0 %v5406
    %6411 = vmatpush2.bf16.msra.mxu0 %v5405
    %6412 = vmatprep.subr.bf16.mxu0 %v5398
    %6413 = vmatpush2.bf16.msra.mxu0 %v5397
    %6414 = vmatprep.subr.bf16.mxu0 %v5390
    %6415 = vmatpush2.bf16.msra.mxu0 %v5389
    %6416 = vmatprep.subr.bf16.mxu0 %v5382
    %6417 = vmatpush2.bf16.msra.mxu0 %v5381
    %6418 = vmatprep.subr.bf16.mxu0 %v5374
    %6419 = vmatpush2.bf16.msra.mxu0 %v5373
    %6420 = vmatprep.subr.bf16.mxu0 %v5366
    %6421 = vmatpush2.bf16.msra.mxu0 %v5365
    %6422 = vmatprep.subr.bf16.mxu0 %v5358
    %6423 = vmatpush2.bf16.msra.mxu0 %v5357
    %6424 = vmatprep.mubr.bf16.mxu0 %v3110
    %6425 = vmatmul.mubr.bf16.gmra.mxu0 %v3109
    %v6426 = vpop.f32.mrf.mxu0
    %v6427 = vadd.f32 %v6386, %v6426
    %v6428 = vpop.f32.mrf.mxu0
    %v6429 = vadd.f32 %v6388, %v6428
    %v6430 = vpop.f32.mrf.mxu0
    %v6431 = vpop.f32.mrf.mxu0
    %6432 = vdwg.mxu0
    %6433 = vmatprep.subr.bf16.mxu0 %v5478
    %6434 = vmatpush1.bf16.msra.mxu0 %v5477
    %6435 = vmatprep.subr.bf16.mxu0 %v5470
    %6436 = vmatpush1.bf16.msra.mxu0 %v5469
    %6437 = vmatprep.subr.bf16.mxu0 %v5462
    %6438 = vmatpush1.bf16.msra.mxu0 %v5461
    %6439 = vmatprep.subr.bf16.mxu0 %v5454
    %6440 = vmatpush1.bf16.msra.mxu0 %v5453
    %6441 = vmatprep.subr.bf16.mxu0 %v5446
    %6442 = vmatpush1.bf16.msra.mxu0 %v5445
    %6443 = vmatprep.subr.bf16.mxu0 %v5438
    %6444 = vmatpush1.bf16.msra.mxu0 %v5437
    %6445 = vmatprep.subr.bf16.mxu0 %v5430
    %6446 = vmatpush1.bf16.msra.mxu0 %v5429
    %6447 = vmatprep.subr.bf16.mxu0 %v5422
    %6448 = vmatpush1.bf16.msra.mxu0 %v5421
    %6449 = vmatprep.subr.bf16.mxu0 %v5542
    %6450 = vmatpush2.bf16.msra.mxu0 %v5541
    %6451 = vmatprep.subr.bf16.mxu0 %v5534
    %6452 = vmatpush2.bf16.msra.mxu0 %v5533
    %6453 = vmatprep.subr.bf16.mxu0 %v5526
    %6454 = vmatpush2.bf16.msra.mxu0 %v5525
    %6455 = vmatprep.subr.bf16.mxu0 %v5518
    %6456 = vmatpush2.bf16.msra.mxu0 %v5517
    %6457 = vmatprep.subr.bf16.mxu0 %v5510
    %6458 = vmatpush2.bf16.msra.mxu0 %v5509
    %6459 = vmatprep.subr.bf16.mxu0 %v5502
    %6460 = vmatpush2.bf16.msra.mxu0 %v5501
    %6461 = vmatprep.subr.bf16.mxu0 %v5494
    %6462 = vmatpush2.bf16.msra.mxu0 %v5493
    %6463 = vmatprep.subr.bf16.mxu0 %v5486
    %6464 = vmatpush2.bf16.msra.mxu0 %v5485
    %6465 = vmatprep.mubr.bf16.mxu0 %v3112
    %6466 = vmatmul.mubr.bf16.gmra.mxu0 %v3111
    %v6467 = vpop.f32.mrf.mxu0
    %v6468 = vadd.f32 %v6427, %v6467
    %v6469 = vpop.f32.mrf.mxu0
    %v6470 = vadd.f32 %v6429, %v6469
    %v6471 = vpop.f32.mrf.mxu0
    %v6472 = vpop.f32.mrf.mxu0
    %6473 = vdwg.mxu0
    %6474 = vmatprep.subr.bf16.mxu0 %v5606
    %6475 = vmatpush1.bf16.msra.mxu0 %v5605
    %6476 = vmatprep.subr.bf16.mxu0 %v5598
    %6477 = vmatpush1.bf16.msra.mxu0 %v5597
    %6478 = vmatprep.subr.bf16.mxu0 %v5590
    %6479 = vmatpush1.bf16.msra.mxu0 %v5589
    %6480 = vmatprep.subr.bf16.mxu0 %v5582
    %6481 = vmatpush1.bf16.msra.mxu0 %v5581
    %6482 = vmatprep.subr.bf16.mxu0 %v5574
    %6483 = vmatpush1.bf16.msra.mxu0 %v5573
    %6484 = vmatprep.subr.bf16.mxu0 %v5566
    %6485 = vmatpush1.bf16.msra.mxu0 %v5565
    %6486 = vmatprep.subr.bf16.mxu0 %v5558
    %6487 = vmatpush1.bf16.msra.mxu0 %v5557
    %6488 = vmatprep.subr.bf16.mxu0 %v5550
    %6489 = vmatpush1.bf16.msra.mxu0 %v5549
    %6490 = vmatprep.subr.bf16.mxu0 %v5670
    %6491 = vmatpush2.bf16.msra.mxu0 %v5669
    %6492 = vmatprep.subr.bf16.mxu0 %v5662
    %6493 = vmatpush2.bf16.msra.mxu0 %v5661
    %6494 = vmatprep.subr.bf16.mxu0 %v5654
    %6495 = vmatpush2.bf16.msra.mxu0 %v5653
    %6496 = vmatprep.subr.bf16.mxu0 %v5646
    %6497 = vmatpush2.bf16.msra.mxu0 %v5645
    %6498 = vmatprep.subr.bf16.mxu0 %v5638
    %6499 = vmatpush2.bf16.msra.mxu0 %v5637
    %6500 = vmatprep.subr.bf16.mxu0 %v5630
    %6501 = vmatpush2.bf16.msra.mxu0 %v5629
    %6502 = vmatprep.subr.bf16.mxu0 %v5622
    %6503 = vmatpush2.bf16.msra.mxu0 %v5621
    %6504 = vmatprep.subr.bf16.mxu0 %v5614
    %6505 = vmatpush2.bf16.msra.mxu0 %v5613
    %6506 = vmatprep.mubr.bf16.mxu0 %v3114
    %6507 = vmatmul.mubr.bf16.gmra.mxu0 %v3113
    %v6508 = vpop.f32.mrf.mxu0
    %v6509 = vadd.f32 %v6468, %v6508
    %v6510 = vpop.f32.mrf.mxu0
    %v6511 = vadd.f32 %v6470, %v6510
    %v6512 = vpop.f32.mrf.mxu0
    %v6513 = vpop.f32.mrf.mxu0
    %6514 = vdwg.mxu0
    %6515 = vmatprep.subr.bf16.mxu0 %v5224
    %6516 = vmatpush1.bf16.msra.mxu0 %v5223
    %6517 = vmatprep.subr.bf16.mxu0 %v5216
    %6518 = vmatpush1.bf16.msra.mxu0 %v5215
    %6519 = vmatprep.subr.bf16.mxu0 %v5208
    %6520 = vmatpush1.bf16.msra.mxu0 %v5207
    %6521 = vmatprep.subr.bf16.mxu0 %v5200
    %6522 = vmatpush1.bf16.msra.mxu0 %v5199
    %6523 = vmatprep.subr.bf16.mxu0 %v5192
    %6524 = vmatpush1.bf16.msra.mxu0 %v5191
    %6525 = vmatprep.subr.bf16.mxu0 %v5184
    %6526 = vmatpush1.bf16.msra.mxu0 %v5183
    %6527 = vmatprep.subr.bf16.mxu0 %v5176
    %6528 = vmatpush1.bf16.msra.mxu0 %v5175
    %6529 = vmatprep.subr.bf16.mxu0 %v5168
    %6530 = vmatpush1.bf16.msra.mxu0 %v5167
    %6531 = vmatprep.subr.bf16.mxu0 %v5288
    %6532 = vmatpush2.bf16.msra.mxu0 %v5287
    %6533 = vmatprep.subr.bf16.mxu0 %v5280
    %6534 = vmatpush2.bf16.msra.mxu0 %v5279
    %6535 = vmatprep.subr.bf16.mxu0 %v5272
    %6536 = vmatpush2.bf16.msra.mxu0 %v5271
    %6537 = vmatprep.subr.bf16.mxu0 %v5264
    %6538 = vmatpush2.bf16.msra.mxu0 %v5263
    %6539 = vmatprep.subr.bf16.mxu0 %v5256
    %6540 = vmatpush2.bf16.msra.mxu0 %v5255
    %6541 = vmatprep.subr.bf16.mxu0 %v5248
    %6542 = vmatpush2.bf16.msra.mxu0 %v5247
    %6543 = vmatprep.subr.bf16.mxu0 %v5240
    %6544 = vmatpush2.bf16.msra.mxu0 %v5239
    %6545 = vmatprep.subr.bf16.mxu0 %v5232
    %6546 = vmatpush2.bf16.msra.mxu0 %v5231
    %6547 = vmatprep.mubr.bf16.mxu0 %v3108
    %6548 = vmatmul.mubr.bf16.gmra.mxu0 %v3107
    %v6549 = vpop.f32.mrf.mxu0
    %v6550 = vadd.f32 0.0, %v6549
    %v6551 = vpop.f32.mrf.mxu0
    %v6552 = vadd.f32 0.0, %v6551
    %v6553 = vpop.f32.mrf.mxu0
    %v6554 = vpop.f32.mrf.mxu0
    %6555 = vdwg.mxu0
    %6556 = vmatprep.subr.bf16.mxu0 %v5352
    %6557 = vmatpush1.bf16.msra.mxu0 %v5351
    %6558 = vmatprep.subr.bf16.mxu0 %v5344
    %6559 = vmatpush1.bf16.msra.mxu0 %v5343
    %6560 = vmatprep.subr.bf16.mxu0 %v5336
    %6561 = vmatpush1.bf16.msra.mxu0 %v5335
    %6562 = vmatprep.subr.bf16.mxu0 %v5328
    %6563 = vmatpush1.bf16.msra.mxu0 %v5327
    %6564 = vmatprep.subr.bf16.mxu0 %v5320
    %6565 = vmatpush1.bf16.msra.mxu0 %v5319
    %6566 = vmatprep.subr.bf16.mxu0 %v5312
    %6567 = vmatpush1.bf16.msra.mxu0 %v5311
    %6568 = vmatprep.subr.bf16.mxu0 %v5304
    %6569 = vmatpush1.bf16.msra.mxu0 %v5303
    %6570 = vmatprep.subr.bf16.mxu0 %v5296
    %6571 = vmatpush1.bf16.msra.mxu0 %v5295
    %6572 = vmatprep.subr.bf16.mxu0 %v5416
    %6573 = vmatpush2.bf16.msra.mxu0 %v5415
    %6574 = vmatprep.subr.bf16.mxu0 %v5408
    %6575 = vmatpush2.bf16.msra.mxu0 %v5407
    %6576 = vmatprep.subr.bf16.mxu0 %v5400
    %6577 = vmatpush2.bf16.msra.mxu0 %v5399
    %6578 = vmatprep.subr.bf16.mxu0 %v5392
    %6579 = vmatpush2.bf16.msra.mxu0 %v5391
    %6580 = vmatprep.subr.bf16.mxu0 %v5384
    %6581 = vmatpush2.bf16.msra.mxu0 %v5383
    %6582 = vmatprep.subr.bf16.mxu0 %v5376
    %6583 = vmatpush2.bf16.msra.mxu0 %v5375
    %6584 = vmatprep.subr.bf16.mxu0 %v5368
    %6585 = vmatpush2.bf16.msra.mxu0 %v5367
    %6586 = vmatprep.subr.bf16.mxu0 %v5360
    %6587 = vmatpush2.bf16.msra.mxu0 %v5359
    %6588 = vmatprep.mubr.bf16.mxu0 %v3110
    %6589 = vmatmul.mubr.bf16.gmra.mxu0 %v3109
    %v6590 = vpop.f32.mrf.mxu0
    %v6591 = vadd.f32 %v6550, %v6590
    %v6592 = vpop.f32.mrf.mxu0
    %v6593 = vadd.f32 %v6552, %v6592
    %v6594 = vpop.f32.mrf.mxu0
    %v6595 = vpop.f32.mrf.mxu0
    %6596 = vdwg.mxu0
    %6597 = vmatprep.subr.bf16.mxu0 %v5480
    %6598 = vmatpush1.bf16.msra.mxu0 %v5479
    %6599 = vmatprep.subr.bf16.mxu0 %v5472
    %6600 = vmatpush1.bf16.msra.mxu0 %v5471
    %6601 = vmatprep.subr.bf16.mxu0 %v5464
    %6602 = vmatpush1.bf16.msra.mxu0 %v5463
    %6603 = vmatprep.subr.bf16.mxu0 %v5456
    %6604 = vmatpush1.bf16.msra.mxu0 %v5455
    %6605 = vmatprep.subr.bf16.mxu0 %v5448
    %6606 = vmatpush1.bf16.msra.mxu0 %v5447
    %6607 = vmatprep.subr.bf16.mxu0 %v5440
    %6608 = vmatpush1.bf16.msra.mxu0 %v5439
    %6609 = vmatprep.subr.bf16.mxu0 %v5432
    %6610 = vmatpush1.bf16.msra.mxu0 %v5431
    %6611 = vmatprep.subr.bf16.mxu0 %v5424
    %6612 = vmatpush1.bf16.msra.mxu0 %v5423
    %6613 = vmatprep.subr.bf16.mxu0 %v5544
    %6614 = vmatpush2.bf16.msra.mxu0 %v5543
    %6615 = vmatprep.subr.bf16.mxu0 %v5536
    %6616 = vmatpush2.bf16.msra.mxu0 %v5535
    %6617 = vmatprep.subr.bf16.mxu0 %v5528
    %6618 = vmatpush2.bf16.msra.mxu0 %v5527
    %6619 = vmatprep.subr.bf16.mxu0 %v5520
    %6620 = vmatpush2.bf16.msra.mxu0 %v5519
    %6621 = vmatprep.subr.bf16.mxu0 %v5512
    %6622 = vmatpush2.bf16.msra.mxu0 %v5511
    %6623 = vmatprep.subr.bf16.mxu0 %v5504
    %6624 = vmatpush2.bf16.msra.mxu0 %v5503
    %6625 = vmatprep.subr.bf16.mxu0 %v5496
    %6626 = vmatpush2.bf16.msra.mxu0 %v5495
    %6627 = vmatprep.subr.bf16.mxu0 %v5488
    %6628 = vmatpush2.bf16.msra.mxu0 %v5487
    %6629 = vmatprep.mubr.bf16.mxu0 %v3112
    %6630 = vmatmul.mubr.bf16.gmra.mxu0 %v3111
    %v6631 = vpop.f32.mrf.mxu0
    %v6632 = vadd.f32 %v6591, %v6631
    %v6633 = vpop.f32.mrf.mxu0
    %v6634 = vadd.f32 %v6593, %v6633
    %v6635 = vpop.f32.mrf.mxu0
    %v6636 = vpop.f32.mrf.mxu0
    %6637 = vdwg.mxu0
    %6638 = vmatprep.subr.bf16.mxu0 %v5608
    %6639 = vmatpush1.bf16.msra.mxu0 %v5607
    %6640 = vmatprep.subr.bf16.mxu0 %v5600
    %6641 = vmatpush1.bf16.msra.mxu0 %v5599
    %6642 = vmatprep.subr.bf16.mxu0 %v5592
    %6643 = vmatpush1.bf16.msra.mxu0 %v5591
    %6644 = vmatprep.subr.bf16.mxu0 %v5584
    %6645 = vmatpush1.bf16.msra.mxu0 %v5583
    %6646 = vmatprep.subr.bf16.mxu0 %v5576
    %6647 = vmatpush1.bf16.msra.mxu0 %v5575
    %6648 = vmatprep.subr.bf16.mxu0 %v5568
    %6649 = vmatpush1.bf16.msra.mxu0 %v5567
    %6650 = vmatprep.subr.bf16.mxu0 %v5560
    %6651 = vmatpush1.bf16.msra.mxu0 %v5559
    %6652 = vmatprep.subr.bf16.mxu0 %v5552
    %6653 = vmatpush1.bf16.msra.mxu0 %v5551
    %6654 = vmatprep.subr.bf16.mxu0 %v5672
    %6655 = vmatpush2.bf16.msra.mxu0 %v5671
    %6656 = vmatprep.subr.bf16.mxu0 %v5664
    %6657 = vmatpush2.bf16.msra.mxu0 %v5663
    %6658 = vmatprep.subr.bf16.mxu0 %v5656
    %6659 = vmatpush2.bf16.msra.mxu0 %v5655
    %6660 = vmatprep.subr.bf16.mxu0 %v5648
    %6661 = vmatpush2.bf16.msra.mxu0 %v5647
    %6662 = vmatprep.subr.bf16.mxu0 %v5640
    %6663 = vmatpush2.bf16.msra.mxu0 %v5639
    %6664 = vmatprep.subr.bf16.mxu0 %v5632
    %6665 = vmatpush2.bf16.msra.mxu0 %v5631
    %6666 = vmatprep.subr.bf16.mxu0 %v5624
    %6667 = vmatpush2.bf16.msra.mxu0 %v5623
    %6668 = vmatprep.subr.bf16.mxu0 %v5616
    %6669 = vmatpush2.bf16.msra.mxu0 %v5615
    %6670 = vmatprep.mubr.bf16.mxu0 %v3114
    %6671 = vmatmul.mubr.bf16.gmra.mxu0 %v3113
    %v6672 = vpop.f32.mrf.mxu0
    %v6673 = vadd.f32 %v6632, %v6672
    %v6674 = vpop.f32.mrf.mxu0
    %v6675 = vadd.f32 %v6634, %v6674
    %v6676 = vpop.f32.mrf.mxu0
    %v6677 = vpop.f32.mrf.mxu0
    %6678 = vdwg.mxu0
    %6679 = vmatprep.subr.bf16.mxu0 %v5226
    %6680 = vmatpush1.bf16.msra.mxu0 %v5225
    %6681 = vmatprep.subr.bf16.mxu0 %v5218
    %6682 = vmatpush1.bf16.msra.mxu0 %v5217
    %6683 = vmatprep.subr.bf16.mxu0 %v5210
    %6684 = vmatpush1.bf16.msra.mxu0 %v5209
    %6685 = vmatprep.subr.bf16.mxu0 %v5202
    %6686 = vmatpush1.bf16.msra.mxu0 %v5201
    %6687 = vmatprep.subr.bf16.mxu0 %v5194
    %6688 = vmatpush1.bf16.msra.mxu0 %v5193
    %6689 = vmatprep.subr.bf16.mxu0 %v5186
    %6690 = vmatpush1.bf16.msra.mxu0 %v5185
    %6691 = vmatprep.subr.bf16.mxu0 %v5178
    %6692 = vmatpush1.bf16.msra.mxu0 %v5177
    %6693 = vmatprep.subr.bf16.mxu0 %v5170
    %6694 = vmatpush1.bf16.msra.mxu0 %v5169
    %6695 = vmatprep.subr.bf16.mxu0 %v5290
    %6696 = vmatpush2.bf16.msra.mxu0 %v5289
    %6697 = vmatprep.subr.bf16.mxu0 %v5282
    %6698 = vmatpush2.bf16.msra.mxu0 %v5281
    %6699 = vmatprep.subr.bf16.mxu0 %v5274
    %6700 = vmatpush2.bf16.msra.mxu0 %v5273
    %6701 = vmatprep.subr.bf16.mxu0 %v5266
    %6702 = vmatpush2.bf16.msra.mxu0 %v5265
    %6703 = vmatprep.subr.bf16.mxu0 %v5258
    %6704 = vmatpush2.bf16.msra.mxu0 %v5257
    %6705 = vmatprep.subr.bf16.mxu0 %v5250
    %6706 = vmatpush2.bf16.msra.mxu0 %v5249
    %6707 = vmatprep.subr.bf16.mxu0 %v5242
    %6708 = vmatpush2.bf16.msra.mxu0 %v5241
    %6709 = vmatprep.subr.bf16.mxu0 %v5234
    %6710 = vmatpush2.bf16.msra.mxu0 %v5233
    %6711 = vmatprep.mubr.bf16.mxu0 %v3108
    %6712 = vmatmul.mubr.bf16.gmra.mxu0 %v3107
    %v6713 = vpop.f32.mrf.mxu0
    %v6714 = vadd.f32 0.0, %v6713
    %v6715 = vpop.f32.mrf.mxu0
    %v6716 = vadd.f32 0.0, %v6715
    %v6717 = vpop.f32.mrf.mxu0
    %v6718 = vpop.f32.mrf.mxu0
    %6719 = vdwg.mxu0
    %6720 = vmatprep.subr.bf16.mxu0 %v5354
    %6721 = vmatpush1.bf16.msra.mxu0 %v5353
    %6722 = vmatprep.subr.bf16.mxu0 %v5346
    %6723 = vmatpush1.bf16.msra.mxu0 %v5345
    %6724 = vmatprep.subr.bf16.mxu0 %v5338
    %6725 = vmatpush1.bf16.msra.mxu0 %v5337
    %6726 = vmatprep.subr.bf16.mxu0 %v5330
    %6727 = vmatpush1.bf16.msra.mxu0 %v5329
    %6728 = vmatprep.subr.bf16.mxu0 %v5322
    %6729 = vmatpush1.bf16.msra.mxu0 %v5321
    %6730 = vmatprep.subr.bf16.mxu0 %v5314
    %6731 = vmatpush1.bf16.msra.mxu0 %v5313
    %6732 = vmatprep.subr.bf16.mxu0 %v5306
    %6733 = vmatpush1.bf16.msra.mxu0 %v5305
    %6734 = vmatprep.subr.bf16.mxu0 %v5298
    %6735 = vmatpush1.bf16.msra.mxu0 %v5297
    %6736 = vmatprep.subr.bf16.mxu0 %v5418
    %6737 = vmatpush2.bf16.msra.mxu0 %v5417
    %6738 = vmatprep.subr.bf16.mxu0 %v5410
    %6739 = vmatpush2.bf16.msra.mxu0 %v5409
    %6740 = vmatprep.subr.bf16.mxu0 %v5402
    %6741 = vmatpush2.bf16.msra.mxu0 %v5401
    %6742 = vmatprep.subr.bf16.mxu0 %v5394
    %6743 = vmatpush2.bf16.msra.mxu0 %v5393
    %6744 = vmatprep.subr.bf16.mxu0 %v5386
    %6745 = vmatpush2.bf16.msra.mxu0 %v5385
    %6746 = vmatprep.subr.bf16.mxu0 %v5378
    %6747 = vmatpush2.bf16.msra.mxu0 %v5377
    %6748 = vmatprep.subr.bf16.mxu0 %v5370
    %6749 = vmatpush2.bf16.msra.mxu0 %v5369
    %6750 = vmatprep.subr.bf16.mxu0 %v5362
    %6751 = vmatpush2.bf16.msra.mxu0 %v5361
    %6752 = vmatprep.mubr.bf16.mxu0 %v3110
    %6753 = vmatmul.mubr.bf16.gmra.mxu0 %v3109
    %v6754 = vpop.f32.mrf.mxu0
    %v6755 = vadd.f32 %v6714, %v6754
    %v6756 = vpop.f32.mrf.mxu0
    %v6757 = vadd.f32 %v6716, %v6756
    %v6758 = vpop.f32.mrf.mxu0
    %v6759 = vpop.f32.mrf.mxu0
    %6760 = vdwg.mxu0
    %6761 = vmatprep.subr.bf16.mxu0 %v5482
    %6762 = vmatpush1.bf16.msra.mxu0 %v5481
    %6763 = vmatprep.subr.bf16.mxu0 %v5474
    %6764 = vmatpush1.bf16.msra.mxu0 %v5473
    %6765 = vmatprep.subr.bf16.mxu0 %v5466
    %6766 = vmatpush1.bf16.msra.mxu0 %v5465
    %6767 = vmatprep.subr.bf16.mxu0 %v5458
    %6768 = vmatpush1.bf16.msra.mxu0 %v5457
    %6769 = vmatprep.subr.bf16.mxu0 %v5450
    %6770 = vmatpush1.bf16.msra.mxu0 %v5449
    %6771 = vmatprep.subr.bf16.mxu0 %v5442
    %6772 = vmatpush1.bf16.msra.mxu0 %v5441
    %6773 = vmatprep.subr.bf16.mxu0 %v5434
    %6774 = vmatpush1.bf16.msra.mxu0 %v5433
    %6775 = vmatprep.subr.bf16.mxu0 %v5426
    %6776 = vmatpush1.bf16.msra.mxu0 %v5425
    %6777 = vmatprep.subr.bf16.mxu0 %v5546
    %6778 = vmatpush2.bf16.msra.mxu0 %v5545
    %6779 = vmatprep.subr.bf16.mxu0 %v5538
    %6780 = vmatpush2.bf16.msra.mxu0 %v5537
    %6781 = vmatprep.subr.bf16.mxu0 %v5530
    %6782 = vmatpush2.bf16.msra.mxu0 %v5529
    %6783 = vmatprep.subr.bf16.mxu0 %v5522
    %6784 = vmatpush2.bf16.msra.mxu0 %v5521
    %6785 = vmatprep.subr.bf16.mxu0 %v5514
    %6786 = vmatpush2.bf16.msra.mxu0 %v5513
    %6787 = vmatprep.subr.bf16.mxu0 %v5506
    %6788 = vmatpush2.bf16.msra.mxu0 %v5505
    %6789 = vmatprep.subr.bf16.mxu0 %v5498
    %6790 = vmatpush2.bf16.msra.mxu0 %v5497
    %6791 = vmatprep.subr.bf16.mxu0 %v5490
    %6792 = vmatpush2.bf16.msra.mxu0 %v5489
    %6793 = vmatprep.mubr.bf16.mxu0 %v3112
    %6794 = vmatmul.mubr.bf16.gmra.mxu0 %v3111
    %v6795 = vpop.f32.mrf.mxu0
    %v6796 = vadd.f32 %v6755, %v6795
    %v6797 = vpop.f32.mrf.mxu0
    %v6798 = vadd.f32 %v6757, %v6797
    %v6799 = vpop.f32.mrf.mxu0
    %v6800 = vpop.f32.mrf.mxu0
    %6801 = vdwg.mxu0
    %6802 = vmatprep.subr.bf16.mxu0 %v5610
    %6803 = vmatpush1.bf16.msra.mxu0 %v5609
    %6804 = vmatprep.subr.bf16.mxu0 %v5602
    %6805 = vmatpush1.bf16.msra.mxu0 %v5601
    %6806 = vmatprep.subr.bf16.mxu0 %v5594
    %6807 = vmatpush1.bf16.msra.mxu0 %v5593
    %6808 = vmatprep.subr.bf16.mxu0 %v5586
    %6809 = vmatpush1.bf16.msra.mxu0 %v5585
    %6810 = vmatprep.subr.bf16.mxu0 %v5578
    %6811 = vmatpush1.bf16.msra.mxu0 %v5577
    %6812 = vmatprep.subr.bf16.mxu0 %v5570
    %6813 = vmatpush1.bf16.msra.mxu0 %v5569
    %6814 = vmatprep.subr.bf16.mxu0 %v5562
    %6815 = vmatpush1.bf16.msra.mxu0 %v5561
    %6816 = vmatprep.subr.bf16.mxu0 %v5554
    %6817 = vmatpush1.bf16.msra.mxu0 %v5553
    %6818 = vmatprep.subr.bf16.mxu0 %v5674
    %6819 = vmatpush2.bf16.msra.mxu0 %v5673
    %6820 = vmatprep.subr.bf16.mxu0 %v5666
    %6821 = vmatpush2.bf16.msra.mxu0 %v5665
    %6822 = vmatprep.subr.bf16.mxu0 %v5658
    %6823 = vmatpush2.bf16.msra.mxu0 %v5657
    %6824 = vmatprep.subr.bf16.mxu0 %v5650
    %6825 = vmatpush2.bf16.msra.mxu0 %v5649
    %6826 = vmatprep.subr.bf16.mxu0 %v5642
    %6827 = vmatpush2.bf16.msra.mxu0 %v5641
    %6828 = vmatprep.subr.bf16.mxu0 %v5634
    %6829 = vmatpush2.bf16.msra.mxu0 %v5633
    %6830 = vmatprep.subr.bf16.mxu0 %v5626
    %6831 = vmatpush2.bf16.msra.mxu0 %v5625
    %6832 = vmatprep.subr.bf16.mxu0 %v5618
    %6833 = vmatpush2.bf16.msra.mxu0 %v5617
    %6834 = vmatprep.mubr.bf16.mxu0 %v3114
    %6835 = vmatmul.mubr.bf16.gmra.mxu0 %v3113
    %v6836 = vpop.f32.mrf.mxu0
    %v6837 = vadd.f32 %v6796, %v6836
    %v6838 = vpop.f32.mrf.mxu0
    %v6839 = vadd.f32 %v6798, %v6838
    %v6840 = vpop.f32.mrf.mxu0
    %v6841 = vpop.f32.mrf.mxu0
    %6842 = vdwg.mxu0
    %v6843 = vmax.f32 %v6345, 0.0
    %v6844 = vmax.f32 %v6347, 0.0
    %v6845 = vmax.f32 %v6509, 0.0
    %v6846 = vmax.f32 %v6511, 0.0
    %v6847 = vmax.f32 %v6673, 0.0
    %v6848 = vmax.f32 %v6675, 0.0
    %v6849 = vmax.f32 %v6837, 0.0
    %v6850 = vmax.f32 %v6839, 0.0
    %v6851 = vpack.c.bf16 %v6843, %v6843
    %v6852 = vpack.c.bf16 %v6844, %v6844
    %v6853 = vpack.c.bf16 %v6845, %v6845
    %v6854 = vpack.c.bf16 %v6846, %v6846
    %v6855 = vpack.c.bf16 %v6847, %v6847
    %v6856 = vpack.c.bf16 %v6848, %v6848
    %v6857 = vpack.c.bf16 %v6849, %v6849
    %v6858 = vpack.c.bf16 %v6850, %v6850
    %v6859 = vld [vmem:[#allocation6] sm:$0xf]
    %v6860 = vld [vmem:[#allocation6 + $0x4] sm:$0xf]
    %v6861 = vld [vmem:[#allocation6 + $0x8] sm:$0xf]
    %v6862 = vld [vmem:[#allocation6 + $0xc] sm:$0xf]
    %v6863 = vld [vmem:[#allocation6 + $0x10] sm:$0xf]
    %v6864 = vld [vmem:[#allocation6 + $0x14] sm:$0xf]
    %v6865 = vld [vmem:[#allocation6 + $0x18] sm:$0xf]
    %v6866 = vld [vmem:[#allocation6 + $0x1c] sm:$0xf]
    %v6867 = vld [vmem:[#allocation6 + $0x20] sm:$0xf]
    %v6868 = vld [vmem:[#allocation6 + $0x24] sm:$0xf]
    %v6869 = vld [vmem:[#allocation6 + $0x28] sm:$0xf]
    %v6870 = vld [vmem:[#allocation6 + $0x2c] sm:$0xf]
    %v6871 = vld [vmem:[#allocation6 + $0x30] sm:$0xf]
    %v6872 = vld [vmem:[#allocation6 + $0x34] sm:$0xf]
    %v6873 = vld [vmem:[#allocation6 + $0x38] sm:$0xf]
    %v6874 = vld [vmem:[#allocation6 + $0x3c] sm:$0xf]
    %v6875 = vld [vmem:[#allocation6 + $0x40] sm:$0xf]
    %v6876 = vld [vmem:[#allocation6 + $0x44] sm:$0xf]
    %v6877 = vld [vmem:[#allocation6 + $0x48] sm:$0xf]
    %v6878 = vld [vmem:[#allocation6 + $0x4c] sm:$0xf]
    %v6879 = vld [vmem:[#allocation6 + $0x50] sm:$0xf]
    %v6880 = vld [vmem:[#allocation6 + $0x54] sm:$0xf]
    %v6881 = vld [vmem:[#allocation6 + $0x58] sm:$0xf]
    %v6882 = vld [vmem:[#allocation6 + $0x5c] sm:$0xf]
    %v6883 = vld [vmem:[#allocation6 + $0x60] sm:$0xf]
    %v6884 = vld [vmem:[#allocation6 + $0x64] sm:$0xf]
    %v6885 = vld [vmem:[#allocation6 + $0x68] sm:$0xf]
    %v6886 = vld [vmem:[#allocation6 + $0x6c] sm:$0xf]
    %v6887 = vld [vmem:[#allocation6 + $0x70] sm:$0xf]
    %v6888 = vld [vmem:[#allocation6 + $0x74] sm:$0xf]
    %v6889 = vld [vmem:[#allocation6 + $0x78] sm:$0xf]
    %v6890 = vld [vmem:[#allocation6 + $0x7c] sm:$0xf]
    %v6891 = vld [vmem:[#allocation6 + $0x80] sm:$0xf]
    %v6892 = vld [vmem:[#allocation6 + $0x84] sm:$0xf]
    %v6893 = vld [vmem:[#allocation6 + $0x88] sm:$0xf]
    %v6894 = vld [vmem:[#allocation6 + $0x8c] sm:$0xf]
    %v6895 = vld [vmem:[#allocation6 + $0x90] sm:$0xf]
    %v6896 = vld [vmem:[#allocation6 + $0x94] sm:$0xf]
    %v6897 = vld [vmem:[#allocation6 + $0x98] sm:$0xf]
    %v6898 = vld [vmem:[#allocation6 + $0x9c] sm:$0xf]
    %v6899 = vld [vmem:[#allocation6 + $0xa0] sm:$0xf]
    %v6900 = vld [vmem:[#allocation6 + $0xa4] sm:$0xf]
    %v6901 = vld [vmem:[#allocation6 + $0xa8] sm:$0xf]
    %v6902 = vld [vmem:[#allocation6 + $0xac] sm:$0xf]
    %v6903 = vld [vmem:[#allocation6 + $0xb0] sm:$0xf]
    %v6904 = vld [vmem:[#allocation6 + $0xb4] sm:$0xf]
    %v6905 = vld [vmem:[#allocation6 + $0xb8] sm:$0xf]
    %v6906 = vld [vmem:[#allocation6 + $0xbc] sm:$0xf]
    %v6907 = vld [vmem:[#allocation6 + $0xc0] sm:$0xf]
    %v6908 = vld [vmem:[#allocation6 + $0xc4] sm:$0xf]
    %v6909 = vld [vmem:[#allocation6 + $0xc8] sm:$0xf]
    %v6910 = vld [vmem:[#allocation6 + $0xcc] sm:$0xf]
    %v6911 = vld [vmem:[#allocation6 + $0xd0] sm:$0xf]
    %v6912 = vld [vmem:[#allocation6 + $0xd4] sm:$0xf]
    %v6913 = vld [vmem:[#allocation6 + $0xd8] sm:$0xf]
    %v6914 = vld [vmem:[#allocation6 + $0xdc] sm:$0xf]
    %v6915 = vld [vmem:[#allocation6 + $0xe0] sm:$0xf]
    %v6916 = vld [vmem:[#allocation6 + $0xe4] sm:$0xf]
    %v6917 = vld [vmem:[#allocation6 + $0xe8] sm:$0xf]
    %v6918 = vld [vmem:[#allocation6 + $0xec] sm:$0xf]
    %v6919 = vld [vmem:[#allocation6 + $0xf0] sm:$0xf]
    %v6920 = vld [vmem:[#allocation6 + $0xf4] sm:$0xf]
    %v6921 = vld [vmem:[#allocation6 + $0xf8] sm:$0xf]
    %v6922 = vld [vmem:[#allocation6 + $0xfc] sm:$0xf]
    %v6923 = vld [vmem:[#allocation6 + $0x100] sm:$0xf]
    %v6924 = vld [vmem:[#allocation6 + $0x104] sm:$0xf]
    %v6925 = vld [vmem:[#allocation6 + $0x108] sm:$0xf]
    %v6926 = vld [vmem:[#allocation6 + $0x10c] sm:$0xf]
    %v6927 = vld [vmem:[#allocation6 + $0x110] sm:$0xf]
    %v6928 = vld [vmem:[#allocation6 + $0x114] sm:$0xf]
    %v6929 = vld [vmem:[#allocation6 + $0x118] sm:$0xf]
    %v6930 = vld [vmem:[#allocation6 + $0x11c] sm:$0xf]
    %v6931 = vld [vmem:[#allocation6 + $0x120] sm:$0xf]
    %v6932 = vld [vmem:[#allocation6 + $0x124] sm:$0xf]
    %v6933 = vld [vmem:[#allocation6 + $0x128] sm:$0xf]
    %v6934 = vld [vmem:[#allocation6 + $0x12c] sm:$0xf]
    %v6935 = vld [vmem:[#allocation6 + $0x130] sm:$0xf]
    %v6936 = vld [vmem:[#allocation6 + $0x134] sm:$0xf]
    %v6937 = vld [vmem:[#allocation6 + $0x138] sm:$0xf]
    %v6938 = vld [vmem:[#allocation6 + $0x13c] sm:$0xf]
    %v6939 = vld [vmem:[#allocation6 + $0x140] sm:$0xf]
    %v6940 = vld [vmem:[#allocation6 + $0x144] sm:$0xf]
    %v6941 = vld [vmem:[#allocation6 + $0x148] sm:$0xf]
    %v6942 = vld [vmem:[#allocation6 + $0x14c] sm:$0xf]
    %v6943 = vld [vmem:[#allocation6 + $0x150] sm:$0xf]
    %v6944 = vld [vmem:[#allocation6 + $0x154] sm:$0xf]
    %v6945 = vld [vmem:[#allocation6 + $0x158] sm:$0xf]
    %v6946 = vld [vmem:[#allocation6 + $0x15c] sm:$0xf]
    %v6947 = vld [vmem:[#allocation6 + $0x160] sm:$0xf]
    %v6948 = vld [vmem:[#allocation6 + $0x164] sm:$0xf]
    %v6949 = vld [vmem:[#allocation6 + $0x168] sm:$0xf]
    %v6950 = vld [vmem:[#allocation6 + $0x16c] sm:$0xf]
    %v6951 = vld [vmem:[#allocation6 + $0x170] sm:$0xf]
    %v6952 = vld [vmem:[#allocation6 + $0x174] sm:$0xf]
    %v6953 = vld [vmem:[#allocation6 + $0x178] sm:$0xf]
    %v6954 = vld [vmem:[#allocation6 + $0x17c] sm:$0xf]
    %v6955 = vld [vmem:[#allocation6 + $0x180] sm:$0xf]
    %v6956 = vld [vmem:[#allocation6 + $0x184] sm:$0xf]
    %v6957 = vld [vmem:[#allocation6 + $0x188] sm:$0xf]
    %v6958 = vld [vmem:[#allocation6 + $0x18c] sm:$0xf]
    %v6959 = vld [vmem:[#allocation6 + $0x190] sm:$0xf]
    %v6960 = vld [vmem:[#allocation6 + $0x194] sm:$0xf]
    %v6961 = vld [vmem:[#allocation6 + $0x198] sm:$0xf]
    %v6962 = vld [vmem:[#allocation6 + $0x19c] sm:$0xf]
    %v6963 = vld [vmem:[#allocation6 + $0x1a0] sm:$0xf]
    %v6964 = vld [vmem:[#allocation6 + $0x1a4] sm:$0xf]
    %v6965 = vld [vmem:[#allocation6 + $0x1a8] sm:$0xf]
    %v6966 = vld [vmem:[#allocation6 + $0x1ac] sm:$0xf]
    %v6967 = vld [vmem:[#allocation6 + $0x1b0] sm:$0xf]
    %v6968 = vld [vmem:[#allocation6 + $0x1b4] sm:$0xf]
    %v6969 = vld [vmem:[#allocation6 + $0x1b8] sm:$0xf]
    %v6970 = vld [vmem:[#allocation6 + $0x1bc] sm:$0xf]
    %v6971 = vld [vmem:[#allocation6 + $0x1c0] sm:$0xf]
    %v6972 = vld [vmem:[#allocation6 + $0x1c4] sm:$0xf]
    %v6973 = vld [vmem:[#allocation6 + $0x1c8] sm:$0xf]
    %v6974 = vld [vmem:[#allocation6 + $0x1cc] sm:$0xf]
    %v6975 = vld [vmem:[#allocation6 + $0x1d0] sm:$0xf]
    %v6976 = vld [vmem:[#allocation6 + $0x1d4] sm:$0xf]
    %v6977 = vld [vmem:[#allocation6 + $0x1d8] sm:$0xf]
    %v6978 = vld [vmem:[#allocation6 + $0x1dc] sm:$0xf]
    %v6979 = vld [vmem:[#allocation6 + $0x1e0] sm:$0xf]
    %v6980 = vld [vmem:[#allocation6 + $0x1e4] sm:$0xf]
    %v6981 = vld [vmem:[#allocation6 + $0x1e8] sm:$0xf]
    %v6982 = vld [vmem:[#allocation6 + $0x1ec] sm:$0xf]
    %v6983 = vld [vmem:[#allocation6 + $0x1f0] sm:$0xf]
    %v6984 = vld [vmem:[#allocation6 + $0x1f4] sm:$0xf]
    %v6985 = vld [vmem:[#allocation6 + $0x1f8] sm:$0xf]
    %v6986 = vld [vmem:[#allocation6 + $0x1fc] sm:$0xf]
    %v7115 = vunpack.c.l.b16 %v6859
    %v7116 = vunpack.c.l.b16 %v6860
    %v7117 = vunpack.c.l.b16 %v6861
    %v7118 = vunpack.c.l.b16 %v6862
    %v7119 = vunpack.c.l.b16 %v6863
    %v7120 = vunpack.c.l.b16 %v6864
    %v7121 = vunpack.c.l.b16 %v6865
    %v7122 = vunpack.c.l.b16 %v6866
    %v7123 = vunpack.c.l.b16 %v6867
    %v7124 = vunpack.c.l.b16 %v6868
    %v7125 = vunpack.c.l.b16 %v6869
    %v7126 = vunpack.c.l.b16 %v6870
    %v7127 = vunpack.c.l.b16 %v6871
    %v7128 = vunpack.c.l.b16 %v6872
    %v7129 = vunpack.c.l.b16 %v6873
    %v7130 = vunpack.c.l.b16 %v6874
    %v7131 = vunpack.c.l.b16 %v6875
    %v7132 = vunpack.c.l.b16 %v6876
    %v7133 = vunpack.c.l.b16 %v6877
    %v7134 = vunpack.c.l.b16 %v6878
    %v7135 = vunpack.c.l.b16 %v6879
    %v7136 = vunpack.c.l.b16 %v6880
    %v7137 = vunpack.c.l.b16 %v6881
    %v7138 = vunpack.c.l.b16 %v6882
    %v7139 = vunpack.c.l.b16 %v6883
    %v7140 = vunpack.c.l.b16 %v6884
    %v7141 = vunpack.c.l.b16 %v6885
    %v7142 = vunpack.c.l.b16 %v6886
    %v7143 = vunpack.c.l.b16 %v6887
    %v7144 = vunpack.c.l.b16 %v6888
    %v7145 = vunpack.c.l.b16 %v6889
    %v7146 = vunpack.c.l.b16 %v6890
    %v7147 = vunpack.c.l.b16 %v6891
    %v7148 = vunpack.c.l.b16 %v6892
    %v7149 = vunpack.c.l.b16 %v6893
    %v7150 = vunpack.c.l.b16 %v6894
    %v7151 = vunpack.c.l.b16 %v6895
    %v7152 = vunpack.c.l.b16 %v6896
    %v7153 = vunpack.c.l.b16 %v6897
    %v7154 = vunpack.c.l.b16 %v6898
    %v7155 = vunpack.c.l.b16 %v6899
    %v7156 = vunpack.c.l.b16 %v6900
    %v7157 = vunpack.c.l.b16 %v6901
    %v7158 = vunpack.c.l.b16 %v6902
    %v7159 = vunpack.c.l.b16 %v6903
    %v7160 = vunpack.c.l.b16 %v6904
    %v7161 = vunpack.c.l.b16 %v6905
    %v7162 = vunpack.c.l.b16 %v6906
    %v7163 = vunpack.c.l.b16 %v6907
    %v7164 = vunpack.c.l.b16 %v6908
    %v7165 = vunpack.c.l.b16 %v6909
    %v7166 = vunpack.c.l.b16 %v6910
    %v7167 = vunpack.c.l.b16 %v6911
    %v7168 = vunpack.c.l.b16 %v6912
    %v7169 = vunpack.c.l.b16 %v6913
    %v7170 = vunpack.c.l.b16 %v6914
    %v7171 = vunpack.c.l.b16 %v6915
    %v7172 = vunpack.c.l.b16 %v6916
    %v7173 = vunpack.c.l.b16 %v6917
    %v7174 = vunpack.c.l.b16 %v6918
    %v7175 = vunpack.c.l.b16 %v6919
    %v7176 = vunpack.c.l.b16 %v6920
    %v7177 = vunpack.c.l.b16 %v6921
    %v7178 = vunpack.c.l.b16 %v6922
    %v7179 = vunpack.c.l.b16 %v6923
    %v7180 = vunpack.c.l.b16 %v6924
    %v7181 = vunpack.c.l.b16 %v6925
    %v7182 = vunpack.c.l.b16 %v6926
    %v7183 = vunpack.c.l.b16 %v6927
    %v7184 = vunpack.c.l.b16 %v6928
    %v7185 = vunpack.c.l.b16 %v6929
    %v7186 = vunpack.c.l.b16 %v6930
    %v7187 = vunpack.c.l.b16 %v6931
    %v7188 = vunpack.c.l.b16 %v6932
    %v7189 = vunpack.c.l.b16 %v6933
    %v7190 = vunpack.c.l.b16 %v6934
    %v7191 = vunpack.c.l.b16 %v6935
    %v7192 = vunpack.c.l.b16 %v6936
    %v7193 = vunpack.c.l.b16 %v6937
    %v7194 = vunpack.c.l.b16 %v6938
    %v7195 = vunpack.c.l.b16 %v6939
    %v7196 = vunpack.c.l.b16 %v6940
    %v7197 = vunpack.c.l.b16 %v6941
    %v7198 = vunpack.c.l.b16 %v6942
    %v7199 = vunpack.c.l.b16 %v6943
    %v7200 = vunpack.c.l.b16 %v6944
    %v7201 = vunpack.c.l.b16 %v6945
    %v7202 = vunpack.c.l.b16 %v6946
    %v7203 = vunpack.c.l.b16 %v6947
    %v7204 = vunpack.c.l.b16 %v6948
    %v7205 = vunpack.c.l.b16 %v6949
    %v7206 = vunpack.c.l.b16 %v6950
    %v7207 = vunpack.c.l.b16 %v6951
    %v7208 = vunpack.c.l.b16 %v6952
    %v7209 = vunpack.c.l.b16 %v6953
    %v7210 = vunpack.c.l.b16 %v6954
    %v7211 = vunpack.c.l.b16 %v6955
    %v7212 = vunpack.c.l.b16 %v6956
    %v7213 = vunpack.c.l.b16 %v6957
    %v7214 = vunpack.c.l.b16 %v6958
    %v7215 = vunpack.c.l.b16 %v6959
    %v7216 = vunpack.c.l.b16 %v6960
    %v7217 = vunpack.c.l.b16 %v6961
    %v7218 = vunpack.c.l.b16 %v6962
    %v7219 = vunpack.c.l.b16 %v6963
    %v7220 = vunpack.c.l.b16 %v6964
    %v7221 = vunpack.c.l.b16 %v6965
    %v7222 = vunpack.c.l.b16 %v6966
    %v7223 = vunpack.c.l.b16 %v6967
    %v7224 = vunpack.c.l.b16 %v6968
    %v7225 = vunpack.c.l.b16 %v6969
    %v7226 = vunpack.c.l.b16 %v6970
    %v7227 = vunpack.c.l.b16 %v6971
    %v7228 = vunpack.c.l.b16 %v6972
    %v7229 = vunpack.c.l.b16 %v6973
    %v7230 = vunpack.c.l.b16 %v6974
    %v7231 = vunpack.c.l.b16 %v6975
    %v7232 = vunpack.c.l.b16 %v6976
    %v7233 = vunpack.c.l.b16 %v6977
    %v7234 = vunpack.c.l.b16 %v6978
    %v7235 = vunpack.c.l.b16 %v6979
    %v7236 = vunpack.c.l.b16 %v6980
    %v7237 = vunpack.c.l.b16 %v6981
    %v7238 = vunpack.c.l.b16 %v6982
    %v7239 = vunpack.c.l.b16 %v6983
    %v7240 = vunpack.c.l.b16 %v6984
    %v7241 = vunpack.c.l.b16 %v6985
    %v7242 = vunpack.c.l.b16 %v6986
    %v7243 = vpack.c.b16 %v7116, %v7115
    %v7244 = vpack.c.b16 %v7118, %v7117
    %v7245 = vpack.c.b16 %v7120, %v7119
    %v7246 = vpack.c.b16 %v7122, %v7121
    %v7247 = vpack.c.b16 %v7124, %v7123
    %v7248 = vpack.c.b16 %v7126, %v7125
    %v7249 = vpack.c.b16 %v7128, %v7127
    %v7250 = vpack.c.b16 %v7130, %v7129
    %v7251 = vpack.c.b16 %v7132, %v7131
    %v7252 = vpack.c.b16 %v7134, %v7133
    %v7253 = vpack.c.b16 %v7136, %v7135
    %v7254 = vpack.c.b16 %v7138, %v7137
    %v7255 = vpack.c.b16 %v7140, %v7139
    %v7256 = vpack.c.b16 %v7142, %v7141
    %v7257 = vpack.c.b16 %v7144, %v7143
    %v7258 = vpack.c.b16 %v7146, %v7145
    %v7259 = vpack.c.b16 %v7148, %v7147
    %v7260 = vpack.c.b16 %v7150, %v7149
    %v7261 = vpack.c.b16 %v7152, %v7151
    %v7262 = vpack.c.b16 %v7154, %v7153
    %v7263 = vpack.c.b16 %v7156, %v7155
    %v7264 = vpack.c.b16 %v7158, %v7157
    %v7265 = vpack.c.b16 %v7160, %v7159
    %v7266 = vpack.c.b16 %v7162, %v7161
    %v7267 = vpack.c.b16 %v7164, %v7163
    %v7268 = vpack.c.b16 %v7166, %v7165
    %v7269 = vpack.c.b16 %v7168, %v7167
    %v7270 = vpack.c.b16 %v7170, %v7169
    %v7271 = vpack.c.b16 %v7172, %v7171
    %v7272 = vpack.c.b16 %v7174, %v7173
    %v7273 = vpack.c.b16 %v7176, %v7175
    %v7274 = vpack.c.b16 %v7178, %v7177
    %v7275 = vpack.c.b16 %v7180, %v7179
    %v7276 = vpack.c.b16 %v7182, %v7181
    %v7277 = vpack.c.b16 %v7184, %v7183
    %v7278 = vpack.c.b16 %v7186, %v7185
    %v7279 = vpack.c.b16 %v7188, %v7187
    %v7280 = vpack.c.b16 %v7190, %v7189
    %v7281 = vpack.c.b16 %v7192, %v7191
    %v7282 = vpack.c.b16 %v7194, %v7193
    %v7283 = vpack.c.b16 %v7196, %v7195
    %v7284 = vpack.c.b16 %v7198, %v7197
    %v7285 = vpack.c.b16 %v7200, %v7199
    %v7286 = vpack.c.b16 %v7202, %v7201
    %v7287 = vpack.c.b16 %v7204, %v7203
    %v7288 = vpack.c.b16 %v7206, %v7205
    %v7289 = vpack.c.b16 %v7208, %v7207
    %v7290 = vpack.c.b16 %v7210, %v7209
    %v7291 = vpack.c.b16 %v7212, %v7211
    %v7292 = vpack.c.b16 %v7214, %v7213
    %v7293 = vpack.c.b16 %v7216, %v7215
    %v7294 = vpack.c.b16 %v7218, %v7217
    %v7295 = vpack.c.b16 %v7220, %v7219
    %v7296 = vpack.c.b16 %v7222, %v7221
    %v7297 = vpack.c.b16 %v7224, %v7223
    %v7298 = vpack.c.b16 %v7226, %v7225
    %v7299 = vpack.c.b16 %v7228, %v7227
    %v7300 = vpack.c.b16 %v7230, %v7229
    %v7301 = vpack.c.b16 %v7232, %v7231
    %v7302 = vpack.c.b16 %v7234, %v7233
    %v7303 = vpack.c.b16 %v7236, %v7235
    %v7304 = vpack.c.b16 %v7238, %v7237
    %v7305 = vpack.c.b16 %v7240, %v7239
    %v7306 = vpack.c.b16 %v7242, %v7241
    %7371 = vmatprep.subr.bf16.mxu0 0
    %7372 = vmatpush1.bf16.msra.mxu0 %v7250
    %7373 = vmatprep.subr.bf16.mxu0 0
    %7374 = vmatpush1.bf16.msra.mxu0 %v7249
    %7375 = vmatprep.subr.bf16.mxu0 0
    %7376 = vmatpush1.bf16.msra.mxu0 %v7248
    %7377 = vmatprep.subr.bf16.mxu0 0
    %7378 = vmatpush1.bf16.msra.mxu0 %v7247
    %7379 = vmatprep.subr.bf16.mxu0 0
    %7380 = vmatpush1.bf16.msra.mxu0 %v7246
    %7381 = vmatprep.subr.bf16.mxu0 0
    %7382 = vmatpush1.bf16.msra.mxu0 %v7245
    %7383 = vmatprep.subr.bf16.mxu0 0
    %7384 = vmatpush1.bf16.msra.mxu0 %v7244
    %7385 = vmatprep.subr.bf16.mxu0 0
    %7386 = vmatpush1.bf16.msra.mxu0 %v7243
    %7387 = vmatprep.subr.bf16.mxu0 0
    %7388 = vmatpush2.bf16.msra.mxu0 %v7258
    %7389 = vmatprep.subr.bf16.mxu0 0
    %7390 = vmatpush2.bf16.msra.mxu0 %v7257
    %7391 = vmatprep.subr.bf16.mxu0 0
    %7392 = vmatpush2.bf16.msra.mxu0 %v7256
    %7393 = vmatprep.subr.bf16.mxu0 0
    %7394 = vmatpush2.bf16.msra.mxu0 %v7255
    %7395 = vmatprep.subr.bf16.mxu0 0
    %7396 = vmatpush2.bf16.msra.mxu0 %v7254
    %7397 = vmatprep.subr.bf16.mxu0 0
    %7398 = vmatpush2.bf16.msra.mxu0 %v7253
    %7399 = vmatprep.subr.bf16.mxu0 0
    %7400 = vmatpush2.bf16.msra.mxu0 %v7252
    %7401 = vmatprep.subr.bf16.mxu0 0
    %7402 = vmatpush2.bf16.msra.mxu0 %v7251
    %7403 = vmatprep.mubr.bf16.mxu0 %v6852
    %7404 = vmatmul.mubr.bf16.gmra.mxu0 %v6851
    %v7405 = vpop.f32.mrf.mxu0
    %v7406 = vadd.f32 0.0, %v7405
    %v7407 = vpop.f32.mrf.mxu0
    %v7408 = vpop.f32.mrf.mxu0
    %v7409 = vpop.f32.mrf.mxu0
    %7410 = vdwg.mxu0
    %7411 = vmatprep.subr.bf16.mxu0 0
    %7412 = vmatpush1.bf16.msra.mxu0 %v7266
    %7413 = vmatprep.subr.bf16.mxu0 0
    %7414 = vmatpush1.bf16.msra.mxu0 %v7265
    %7415 = vmatprep.subr.bf16.mxu0 0
    %7416 = vmatpush1.bf16.msra.mxu0 %v7264
    %7417 = vmatprep.subr.bf16.mxu0 0
    %7418 = vmatpush1.bf16.msra.mxu0 %v7263
    %7419 = vmatprep.subr.bf16.mxu0 0
    %7420 = vmatpush1.bf16.msra.mxu0 %v7262
    %7421 = vmatprep.subr.bf16.mxu0 0
    %7422 = vmatpush1.bf16.msra.mxu0 %v7261
    %7423 = vmatprep.subr.bf16.mxu0 0
    %7424 = vmatpush1.bf16.msra.mxu0 %v7260
    %7425 = vmatprep.subr.bf16.mxu0 0
    %7426 = vmatpush1.bf16.msra.mxu0 %v7259
    %7427 = vmatprep.subr.bf16.mxu0 0
    %7428 = vmatpush2.bf16.msra.mxu0 %v7274
    %7429 = vmatprep.subr.bf16.mxu0 0
    %7430 = vmatpush2.bf16.msra.mxu0 %v7273
    %7431 = vmatprep.subr.bf16.mxu0 0
    %7432 = vmatpush2.bf16.msra.mxu0 %v7272
    %7433 = vmatprep.subr.bf16.mxu0 0
    %7434 = vmatpush2.bf16.msra.mxu0 %v7271
    %7435 = vmatprep.subr.bf16.mxu0 0
    %7436 = vmatpush2.bf16.msra.mxu0 %v7270
    %7437 = vmatprep.subr.bf16.mxu0 0
    %7438 = vmatpush2.bf16.msra.mxu0 %v7269
    %7439 = vmatprep.subr.bf16.mxu0 0
    %7440 = vmatpush2.bf16.msra.mxu0 %v7268
    %7441 = vmatprep.subr.bf16.mxu0 0
    %7442 = vmatpush2.bf16.msra.mxu0 %v7267
    %7443 = vmatprep.mubr.bf16.mxu0 %v6854
    %7444 = vmatmul.mubr.bf16.gmra.mxu0 %v6853
    %v7445 = vpop.f32.mrf.mxu0
    %v7446 = vadd.f32 %v7406, %v7445
    %v7447 = vpop.f32.mrf.mxu0
    %v7448 = vpop.f32.mrf.mxu0
    %v7449 = vpop.f32.mrf.mxu0
    %7450 = vdwg.mxu0
    %7451 = vmatprep.subr.bf16.mxu0 0
    %7452 = vmatpush1.bf16.msra.mxu0 %v7282
    %7453 = vmatprep.subr.bf16.mxu0 0
    %7454 = vmatpush1.bf16.msra.mxu0 %v7281
    %7455 = vmatprep.subr.bf16.mxu0 0
    %7456 = vmatpush1.bf16.msra.mxu0 %v7280
    %7457 = vmatprep.subr.bf16.mxu0 0
    %7458 = vmatpush1.bf16.msra.mxu0 %v7279
    %7459 = vmatprep.subr.bf16.mxu0 0
    %7460 = vmatpush1.bf16.msra.mxu0 %v7278
    %7461 = vmatprep.subr.bf16.mxu0 0
    %7462 = vmatpush1.bf16.msra.mxu0 %v7277
    %7463 = vmatprep.subr.bf16.mxu0 0
    %7464 = vmatpush1.bf16.msra.mxu0 %v7276
    %7465 = vmatprep.subr.bf16.mxu0 0
    %7466 = vmatpush1.bf16.msra.mxu0 %v7275
    %7467 = vmatprep.subr.bf16.mxu0 0
    %7468 = vmatpush2.bf16.msra.mxu0 %v7290
    %7469 = vmatprep.subr.bf16.mxu0 0
    %7470 = vmatpush2.bf16.msra.mxu0 %v7289
    %7471 = vmatprep.subr.bf16.mxu0 0
    %7472 = vmatpush2.bf16.msra.mxu0 %v7288
    %7473 = vmatprep.subr.bf16.mxu0 0
    %7474 = vmatpush2.bf16.msra.mxu0 %v7287
    %7475 = vmatprep.subr.bf16.mxu0 0
    %7476 = vmatpush2.bf16.msra.mxu0 %v7286
    %7477 = vmatprep.subr.bf16.mxu0 0
    %7478 = vmatpush2.bf16.msra.mxu0 %v7285
    %7479 = vmatprep.subr.bf16.mxu0 0
    %7480 = vmatpush2.bf16.msra.mxu0 %v7284
    %7481 = vmatprep.subr.bf16.mxu0 0
    %7482 = vmatpush2.bf16.msra.mxu0 %v7283
    %7483 = vmatprep.mubr.bf16.mxu0 %v6856
    %7484 = vmatmul.mubr.bf16.gmra.mxu0 %v6855
    %v7485 = vpop.f32.mrf.mxu0
    %v7486 = vadd.f32 %v7446, %v7485
    %v7487 = vpop.f32.mrf.mxu0
    %v7488 = vpop.f32.mrf.mxu0
    %v7489 = vpop.f32.mrf.mxu0
    %7490 = vdwg.mxu0
    %7491 = vmatprep.subr.bf16.mxu0 0
    %7492 = vmatpush1.bf16.msra.mxu0 %v7298
    %7493 = vmatprep.subr.bf16.mxu0 0
    %7494 = vmatpush1.bf16.msra.mxu0 %v7297
    %7495 = vmatprep.subr.bf16.mxu0 0
    %7496 = vmatpush1.bf16.msra.mxu0 %v7296
    %7497 = vmatprep.subr.bf16.mxu0 0
    %7498 = vmatpush1.bf16.msra.mxu0 %v7295
    %7499 = vmatprep.subr.bf16.mxu0 0
    %7500 = vmatpush1.bf16.msra.mxu0 %v7294
    %7501 = vmatprep.subr.bf16.mxu0 0
    %7502 = vmatpush1.bf16.msra.mxu0 %v7293
    %7503 = vmatprep.subr.bf16.mxu0 0
    %7504 = vmatpush1.bf16.msra.mxu0 %v7292
    %7505 = vmatprep.subr.bf16.mxu0 0
    %7506 = vmatpush1.bf16.msra.mxu0 %v7291
    %7507 = vmatprep.subr.bf16.mxu0 0
    %7508 = vmatpush2.bf16.msra.mxu0 %v7306
    %7509 = vmatprep.subr.bf16.mxu0 0
    %7510 = vmatpush2.bf16.msra.mxu0 %v7305
    %7511 = vmatprep.subr.bf16.mxu0 0
    %7512 = vmatpush2.bf16.msra.mxu0 %v7304
    %7513 = vmatprep.subr.bf16.mxu0 0
    %7514 = vmatpush2.bf16.msra.mxu0 %v7303
    %7515 = vmatprep.subr.bf16.mxu0 0
    %7516 = vmatpush2.bf16.msra.mxu0 %v7302
    %7517 = vmatprep.subr.bf16.mxu0 0
    %7518 = vmatpush2.bf16.msra.mxu0 %v7301
    %7519 = vmatprep.subr.bf16.mxu0 0
    %7520 = vmatpush2.bf16.msra.mxu0 %v7300
    %7521 = vmatprep.subr.bf16.mxu0 0
    %7522 = vmatpush2.bf16.msra.mxu0 %v7299
    %7523 = vmatprep.mubr.bf16.mxu0 %v6858
    %7524 = vmatmul.mubr.bf16.gmra.mxu0 %v6857
    %v7525 = vpop.f32.mrf.mxu0
    %v7526 = vadd.f32 %v7486, %v7525
    %v7527 = vpop.f32.mrf.mxu0
    %v7528 = vpop.f32.mrf.mxu0
    %v7529 = vpop.f32.mrf.mxu0
    %7530 = vdwg.mxu0
    %7531 = vst [vmem:[%s4] sm:$0xff] %v7526
    // Predicated region
    $region30: #{fc1024_forward.1} parent=1 // pred_check
      _
    $region31: #{fc1024_forward.1} parent=1 // pred_check_branch
      %7533 = sbr.rel (0) target = $region33
    $region32: #{fc1024_forward.1} parent=1 // pred_region
      _
    $region33: #{fc1024_forward.1} parent=1 // pred_fallthru
      _
    // Predicated region
    $region34: #{fc1024_forward.1} parent=1 // pred_check
      _
    $region35: #{fc1024_forward.1} parent=1 // pred_check_branch
      %7535 = sbr.rel (0) target = $region37
    $region36: #{fc1024_forward.1} parent=1 // pred_region
      _
    $region37: #{fc1024_forward.1} parent=1 // pred_fallthru
      _
    %7536 = vsyncpa [#allocation3], 1
    %7537 = vsyncpa [#allocation5], 1

</llo_original>
